<compile_context>
chip_gen: v5e
topology: v5e:2x2
jax: 0.10.0
libtpu: 0.0.40
codegen_flags: <defaults>
</compile_context>

<pallas_src>
import functools

import numpy as np
import jax
import jax.numpy as jnp
from jax import lax
from jax.experimental import pallas as pl
from jax.experimental.pallas import tpu as pltpu

F = 128            # node feature width
HIDDEN = 128       # MLP hidden width
OUT = 6            # lattice_pred output (3 lengths + 3 angles)
OUT_PAD = 128      # lane-dense padded output width
KNN = 4
LAYERS = 2
MLP_HIDDEN_LAYERS = 4
BN_TARGET = 256    # target node rows per grid step
VMEM_LIMIT = 32 * 1024 * 1024


def _round_up(v, m):
    return ((v + m - 1) // m) * m


def _full_spec(shape):
    nd = len(shape)
    return pl.BlockSpec(shape, lambda *_: (0,) * nd)


# ----------------------------------------------------------------------------
# Fused kernel: 2 MPNN layers + scatter_mean pooling + lattice MLP, one grid
# step per group of G structures (bn = G * A_max node rows, all independent).
# ----------------------------------------------------------------------------
def fused_graph_kernel(idx_ref, dist_ref, wgt_ref, poolw_ref, h0_ref,
                       wm_ref, wd_ref, bm_ref, wu_ref, bu_ref,
                       wh_ref, bh_ref, w5_ref, b5_ref,
                       out_ref,
                       h_s, hwn_s, base_s):
    bn, f = h_s.shape
    k = idx_ref.shape[1]
    n_layers = wm_ref.shape[0]
    n_hidden = wh_ref.shape[0]
    cn = 128 if bn % 128 == 0 else 64          # chunk rows (vreg-pressure control)
    n_chunks = bn // cn

    h_s[...] = h0_ref[...]                     # node features resident across layers (bf16)

    for l in range(n_layers):
        # merged per-node message matmul: [m_self | hWn] = h @ [Wms | Wmn]   (one 256-wide matmul)
        hc = jnp.dot(h_s[...], wm_ref[l], preferred_element_type=jnp.float32)   # [bn, 2F] f32
        hwn_s[...] = hc[:, f:].astype(jnp.bfloat16)        # gather source for neighbor messages
        base_s[...] = hc[:, :f] + bm_ref[l]                # hoisted m_self + bias (f32)

        def chunk_body(ci, carry, _l=l):
            r0 = pl.multiple_of(ci * cn, cn)
            rows = pl.ds(r0, cn)
            base_c = base_s[rows, :]                       # [cn, F] f32
            idx_c = idx_ref[rows, :]                       # [cn, K] i32 (block-local rows)
            d_c = dist_ref[rows, :]                        # [cn, K] f32
            w_c = wgt_ref[rows, :]                         # [cn, K] f32 (masked-mean weights)
            wd = wd_ref[_l]                                # [1, F]  f32

            agg = jnp.zeros((cn, f), jnp.float32)
            for kk in range(k):                            # short unrolled neighbor loop
                cols = lax.broadcasted_iota(jnp.int32, (cn, bn), 1)
                oh = jnp.where(cols == idx_c[:, kk:kk + 1], 1.0, 0.0).astype(jnp.bfloat16)
                gath = jnp.dot(oh, hwn_s[...],
                               preferred_element_type=jnp.float32)      # hWn[nbr]  [cn, F]
                msg = jnp.maximum(base_c + gath + d_c[:, kk:kk + 1] * wd, 0.0)
                agg = agg + msg * w_c[:, kk:kk + 1]

            # node update: h' = h + ReLU(concat([h, agg]) @ [Wus; Wua] + bu)
            h_rows = h_s[rows, :]
            cat = jnp.concatenate([h_rows, agg.astype(jnp.bfloat16)], axis=-1)   # [cn, 2F]
            upd = jnp.maximum(
                jnp.dot(cat, wu_ref[_l], preferred_element_type=jnp.float32) + bu_ref[_l],
                0.0)
            h_s[rows, :] = (h_rows.astype(jnp.float32) + upd).astype(jnp.bfloat16)
            return carry

        lax.fori_loop(0, n_chunks, chunk_body, 0, unroll=False)

    # scatter_mean pooling: pool weights already contain validity and 1/struct_size (no counts).
    x = jnp.dot(poolw_ref[...], h_s[...], preferred_element_type=jnp.float32)    # [G, F] f32
    xb = x.astype(jnp.bfloat16)
    for j in range(n_hidden):                                                    # lattice MLP
        xb = jnp.maximum(
            jnp.dot(xb, wh_ref[j], preferred_element_type=jnp.float32) + bh_ref[j],
            0.0).astype(jnp.bfloat16)
    out_ref[...] = jnp.dot(xb, w5_ref[...], preferred_element_type=jnp.float32) + b5_ref[...]


def fused_forward_call(idx_flat, dist_flat, w_flat, pool_w, h0, prep, *, g, bn, knn):
    n_flat, f = h0.shape
    b_pad = pool_w.shape[0]
    steps = b_pad // g

    fl_layer = 2 * bn * f * (2 * f) + knn * 2 * bn * bn * f + 2 * bn * (2 * f) * f
    fl_step = (LAYERS * fl_layer + 2 * g * bn * f
               + 2 * g * (f * HIDDEN + (MLP_HIDDEN_LAYERS - 1) * HIDDEN * HIDDEN
                          + HIDDEN * OUT_PAD))
    flops = steps * fl_step
    bytes_accessed = (n_flat * knn * 4 * 3 + n_flat * f * 2 + b_pad * bn * 2
                      + b_pad * OUT_PAD * 4
                      + LAYERS * (f * 2 * f * 2 + 2 * f * f * 2 + 3 * f * 4)
                      + MLP_HIDDEN_LAYERS * (HIDDEN * HIDDEN * 2 + HIDDEN * 4)
                      + HIDDEN * OUT_PAD * 2 + OUT_PAD * 4)

    return pl.pallas_call(
        fused_graph_kernel,
        out_shape=jax.ShapeDtypeStruct((b_pad, OUT_PAD), jnp.float32),
        grid=(steps,),
        in_specs=[
            pl.BlockSpec((bn, knn), lambda i: (i, 0)),        # neighbor row indices (block-local)
            pl.BlockSpec((bn, knn), lambda i: (i, 0)),        # neighbor distances
            pl.BlockSpec((bn, knn), lambda i: (i, 0)),        # neighbor weights (masked mean)
            pl.BlockSpec((g, bn), lambda i: (i, 0)),          # block-diag pooling weights
            pl.BlockSpec((bn, f), lambda i: (i, 0)),          # embedded node features
            _full_spec((LAYERS, f, 2 * f)),                   # [Wms | Wmn]
            _full_spec((LAYERS, 1, f)),                       # wd
            _full_spec((LAYERS, 1, f)),                       # bm
            _full_spec((LAYERS, 2 * f, f)),                   # [Wus; Wua]
            _full_spec((LAYERS, 1, f)),                       # bu
            _full_spec((MLP_HIDDEN_LAYERS, HIDDEN, HIDDEN)),  # MLP hidden weights
            _full_spec((MLP_HIDDEN_LAYERS, 1, HIDDEN)),       # MLP hidden biases
            _full_spec((HIDDEN, OUT_PAD)),                    # MLP head (lane-dense padded)
            _full_spec((1, OUT_PAD)),                         # MLP head bias
        ],
        out_specs=pl.BlockSpec((g, OUT_PAD), lambda i: (i, 0)),
        scratch_shapes=[
            pltpu.VMEM((bn, f), jnp.bfloat16),    # h  (node features across layers)
            pltpu.VMEM((bn, f), jnp.bfloat16),    # hWn (gather source)
            pltpu.VMEM((bn, f), jnp.float32),     # base = m_self + bm
        ],
        compiler_params=pltpu.CompilerParams(
            dimension_semantics=("parallel",),
            vmem_limit_bytes=VMEM_LIMIT,
        ),
        cost_estimate=pl.CostEstimate(
            flops=flops, transcendentals=0, bytes_accessed=bytes_accessed),
    )(idx_flat, dist_flat, w_flat, pool_w, h0,
      prep["wm"], prep["wd"], prep["bm"], prep["wu"], prep["bu"],
      prep["wh"], prep["bh"], prep["w5"], prep["b5"])


# ----------------------------------------------------------------------------
# Parameter init + one-time weight preparation (casts / concats hoisted out of
# the per-call path).
# ----------------------------------------------------------------------------
def _dense(key, fan_in, shape):
    bound = 1.0 / (fan_in ** 0.5)
    return jax.random.uniform(key, shape, jnp.float32, -bound, bound)


def init_params(key):
    keys = jax.random.split(key, 64)
    ki = iter(range(64))
    params = {"embedding": jax.random.normal(keys[next(ki)], (100, F), jnp.float32)}
    mpnn = []
    for _ in range(LAYERS):
        mpnn.append({
            "wms": _dense(keys[next(ki)], F, (F, F)),
            "wmn": _dense(keys[next(ki)], F, (F, F)),
            "wd":  _dense(keys[next(ki)], 1, (1, F)),
            "bm":  _dense(keys[next(ki)], F, (1, F)),
            "wus": _dense(keys[next(ki)], F, (F, F)),
            "wua": _dense(keys[next(ki)], F, (F, F)),
            "bu":  _dense(keys[next(ki)], F, (1, F)),
        })
    params["mpnn"] = mpnn
    params["mlp"] = {
        "w1": _dense(keys[next(ki)], F, (F, HIDDEN)),            "b1": _dense(keys[next(ki)], F, (1, HIDDEN)),
        "w2": _dense(keys[next(ki)], HIDDEN, (HIDDEN, HIDDEN)),  "b2": _dense(keys[next(ki)], HIDDEN, (1, HIDDEN)),
        "w3": _dense(keys[next(ki)], HIDDEN, (HIDDEN, HIDDEN)),  "b3": _dense(keys[next(ki)], HIDDEN, (1, HIDDEN)),
        "w4": _dense(keys[next(ki)], HIDDEN, (HIDDEN, HIDDEN)),  "b4": _dense(keys[next(ki)], HIDDEN, (1, HIDDEN)),
        "w5": _dense(keys[next(ki)], HIDDEN, (HIDDEN, OUT)),     "b5": _dense(keys[next(ki)], HIDDEN, (1, OUT)),
    }
    return params


def prepare_weights(params):
    assert F == HIDDEN, "stacked MLP hidden weights assume features == hidden width"
    mp = params["mpnn"]
    wm = jnp.stack([jnp.concatenate([l["wms"], l["wmn"]], axis=1) for l in mp]).astype(jnp.bfloat16)
    wd = jnp.stack([l["wd"] for l in mp]).astype(jnp.float32)
    bm = jnp.stack([l["bm"] for l in mp]).astype(jnp.float32)
    wu = jnp.stack([jnp.concatenate([l["wus"], l["wua"]], axis=0) for l in mp]).astype(jnp.bfloat16)
    bu = jnp.stack([l["bu"] for l in mp]).astype(jnp.float32)
    m = params["mlp"]
    wh = jnp.stack([m["w1"], m["w2"], m["w3"], m["w4"]]).astype(jnp.bfloat16)
    bh = jnp.stack([m["b1"], m["b2"], m["b3"], m["b4"]]).astype(jnp.float32)
    w5 = jnp.zeros((HIDDEN, OUT_PAD), jnp.float32).at[:, :OUT].set(m["w5"]).astype(jnp.bfloat16)
    b5 = jnp.zeros((1, OUT_PAD), jnp.float32).at[:, :OUT].set(m["b5"])
    return dict(emb=params["embedding"].astype(jnp.float32),
                wm=wm, wd=wd, bm=bm, wu=wu, bu=bu, wh=wh, bh=bh, w5=w5, b5=b5)


# ----------------------------------------------------------------------------
# Glue: per-structure padded layout, periodic kNN graph, pooling weights.
# ----------------------------------------------------------------------------
@functools.partial(jax.jit, static_argnames=("a_max", "g", "b_pad", "knn"))
def _forward_impl(x, z, struct_size_pad, prep, *, a_max, g, b_pad, knn):
    n = x.shape[0]
    f = F
    bn = g * a_max
    n_flat = b_pad * a_max

    frac = jnp.mod(x.astype(jnp.float32), 1.0)         # actions_init: cell := I, so cart == frac

    sizes = struct_size_pad.astype(jnp.int32)
    starts = jnp.concatenate([jnp.zeros((1,), jnp.int32), jnp.cumsum(sizes)[:-1]])
    a_ids = jnp.arange(a_max, dtype=jnp.int32)
    src = starts[:, None] + a_ids[None, :]              # [b_pad, a_max]
    valid = a_ids[None, :] < sizes[:, None]             # [b_pad, a_max]
    src_c = jnp.clip(src, 0, n - 1)

    z_pad = jnp.where(valid, z[src_c], 0)
    frac_pad = jnp.where(valid[..., None], frac[src_c], 0.0)

    # Geometry: periodic kNN per structure (minimum-image under the identity lattice)
    delta = frac_pad[:, :, None, :] - frac_pad[:, None, :, :]
    delta = delta - jnp.round(delta)
    d2 = jnp.sum(delta * delta, axis=-1)                # [b_pad, a_max, a_max]
    eye = jnp.eye(a_max, dtype=bool)
    pair_ok = valid[:, :, None] & valid[:, None, :] & (~eye)[None, :, :]
    big = jnp.float32(1e30)
    neg, idx_local = lax.top_k(-jnp.where(pair_ok, d2, big), knn)
    nbr_ok = (-neg) < (big * 0.5)
    dist = jnp.where(nbr_ok, jnp.sqrt(jnp.maximum(-neg, 0.0)), 0.0)
    cnt = jnp.sum(nbr_ok, axis=-1, keepdims=True).astype(jnp.float32)
    wgt = nbr_ok.astype(jnp.float32) / jnp.maximum(cnt, 1.0)      # masked-mean weights
    wgt = wgt * valid[..., None].astype(jnp.float32)

    # block-local neighbor row indices (structure b occupies rows (b % g)*a_max.. of its grid step)
    slot = jnp.arange(b_pad, dtype=jnp.int32) % g
    idx_blk = idx_local.astype(jnp.int32) + slot[:, None, None] * a_max

    idx_flat = idx_blk.reshape(n_flat, knn)
    dist_flat = dist.reshape(n_flat, knn).astype(jnp.float32)
    w_flat = wgt.reshape(n_flat, knn).astype(jnp.float32)

    # embedded node features; pad rows zeroed so they can never contaminate results
    h0 = jnp.where(valid[..., None], prep["emb"][z_pad], 0.0)
    h0 = h0.reshape(n_flat, f).astype(jnp.bfloat16)

    # block-diagonal scatter_mean weights (validity and 1/struct_size folded in)
    w_ba = valid.astype(jnp.float32) / jnp.maximum(sizes[:, None].astype(jnp.float32), 1.0)
    onehot_g = (slot[:, None] == jnp.arange(g, dtype=jnp.int32)[None, :]).astype(jnp.float32)
    pool_w = (onehot_g[:, :, None] * w_ba[:, None, :]).reshape(b_pad, bn).astype(jnp.bfloat16)

    return fused_forward_call(idx_flat, dist_flat, w_flat, pool_w, h0, prep,
                              g=g, bn=bn, knn=knn)


def autoencoder_mlp_forward(cell, x, z, struct_size, params, knn=KNN, prepared=None):
    if prepared is None:
        prepared = prepare_weights(params)
    b = int(cell.shape[0])

    ss = np.asarray(jax.device_get(struct_size)).astype(np.int64)
    a_max = _round_up(max(int(ss.max()), 1), 8)

    g_cap = max(8, (BN_TARGET // a_max) // 8 * 8)       # structures per grid step (multiple of 8)
    g = min(g_cap, _round_up(b, 8))
    # v7x megacore: prefer >= 2 parallel grid steps when enough structures exist
    if b >= 16 and _round_up(b, g) // g < 2:
        g = min(g_cap, max(8, _round_up((b + 1) // 2, 8)))
    b_pad = _round_up(b, g)

    sizes_pad = jnp.zeros((b_pad,), jnp.int32).at[:b].set(jnp.asarray(struct_size, jnp.int32))
    out = _forward_impl(x, z, sizes_pad, prepared,
                        a_max=int(a_max), g=int(g), b_pad=int(b_pad), knn=int(knn))
    lattice = out[:b, :OUT]
    return lattice[:, :3], lattice[:, 3:]


if __name__ == "__main__":
    key = jax.random.PRNGKey(0)
    k_cell, k_x, k_z, k_par = jax.random.split(key, 4)

    B = 2
    ATOMS = 8
    N = B * ATOMS

    cell = jax.random.normal(k_cell, (B, 3, 3), jnp.float32)        # unused values (identity substituted)
    x = jax.random.normal(k_x, (N, 3), jnp.float32) * 2.0           # atomic positions
    z = jax.random.randint(k_z, (N,), 0, 100).astype(jnp.int32)     # atomic species
    struct_size = jnp.full((B,), ATOMS, dtype=jnp.int32)

    params = init_params(k_par)
    prepared = prepare_weights(params)                               # one-time weight prep (hoisted)

    lengths, angles = autoencoder_mlp_forward(cell, x, z, struct_size, params,
                                              knn=KNN, prepared=prepared)
    jax.block_until_ready((lengths, angles))
    assert lengths.shape == (B, 3) and angles.shape == (B, 3)
    assert bool(jnp.all(jnp.isfinite(lengths))) and bool(jnp.all(jnp.isfinite(angles)))
    print("KERNEL_OK")
</pallas_src>

<mosaic_0001>
module attributes {stable_mosaic.version = 11 : i64} {
  func.func @fused_graph_kernel(%arg0: i32, %arg1: memref<64x4xi32, #tpu.memory_space<vmem>>, %arg2: memref<64x4xf32, #tpu.memory_space<vmem>>, %arg3: memref<64x4xf32, #tpu.memory_space<vmem>>, %arg4: memref<8x64xbf16, #tpu.memory_space<vmem>>, %arg5: memref<64x128xbf16, #tpu.memory_space<vmem>>, %arg6: memref<2x128x256xbf16, #tpu.memory_space<vmem>>, %arg7: memref<2x1x128xf32, #tpu.memory_space<vmem>>, %arg8: memref<2x1x128xf32, #tpu.memory_space<vmem>>, %arg9: memref<2x256x128xbf16, #tpu.memory_space<vmem>>, %arg10: memref<2x1x128xf32, #tpu.memory_space<vmem>>, %arg11: memref<4x128x128xbf16, #tpu.memory_space<vmem>>, %arg12: memref<4x1x128xf32, #tpu.memory_space<vmem>>, %arg13: memref<128x128xbf16, #tpu.memory_space<vmem>>, %arg14: memref<1x128xf32, #tpu.memory_space<vmem>>, %arg15: memref<8x128xf32, #tpu.memory_space<vmem>>, %arg16: memref<64x128xbf16, #tpu.memory_space<vmem>>, %arg17: memref<64x128xbf16, #tpu.memory_space<vmem>>, %arg18: memref<64x128xf32, #tpu.memory_space<vmem>>) attributes {dimension_semantics = [#tpu.dimension_semantics<parallel>], iteration_bounds = array<i64: 1>, scalar_prefetch = 0 : i64, scratch_operands = 3 : i64, tpu.core_type = #tpu.core_type<tc>, window_params = [{transform_indices = @transform_0, window_bounds = array<i64: 64, 4>}, {transform_indices = @transform_1, window_bounds = array<i64: 64, 4>}, {transform_indices = @transform_2, window_bounds = array<i64: 64, 4>}, {transform_indices = @transform_3, window_bounds = array<i64: 8, 64>}, {transform_indices = @transform_4, window_bounds = array<i64: 64, 128>}, {pipeline_mode = #tpu.pipeline_mode<synchronous>, transform_indices = @transform_5, window_bounds = array<i64: 2, 128, 256>}, {pipeline_mode = #tpu.pipeline_mode<synchronous>, transform_indices = @transform_6, window_bounds = array<i64: 2, 1, 128>}, {pipeline_mode = #tpu.pipeline_mode<synchronous>, transform_indices = @transform_7, window_bounds = array<i64: 2, 1, 128>}, {pipeline_mode = #tpu.pipeline_mode<synchronous>, transform_indices = @transform_8, window_bounds = array<i64: 2, 256, 128>}, {pipeline_mode = #tpu.pipeline_mode<synchronous>, transform_indices = @transform_9, window_bounds = array<i64: 2, 1, 128>}, {pipeline_mode = #tpu.pipeline_mode<synchronous>, transform_indices = @transform_10, window_bounds = array<i64: 4, 128, 128>}, {pipeline_mode = #tpu.pipeline_mode<synchronous>, transform_indices = @transform_11, window_bounds = array<i64: 4, 1, 128>}, {pipeline_mode = #tpu.pipeline_mode<synchronous>, transform_indices = @transform_12, window_bounds = array<i64: 128, 128>}, {pipeline_mode = #tpu.pipeline_mode<synchronous>, transform_indices = @transform_13, window_bounds = array<i64: 1, 128>}, {transform_indices = @transform_14, window_bounds = array<i64: 8, 128>}]} {
    %c0 = arith.constant 0 : index
    %c0_0 = arith.constant 0 : index
    %0 = vector.load %arg5[%c0, %c0_0] : memref<64x128xbf16, #tpu.memory_space<vmem>>, vector<64x128xbf16>
    %c0_1 = arith.constant 0 : index
    %c0_2 = arith.constant 0 : index
    %1 = vector.load %arg16[%c0_1, %c0_2] : memref<64x128xbf16, #tpu.memory_space<vmem>>, vector<64x128xbf16>
    tpu.vector_store %arg16[%c0_1, %c0_2], %0 {strides = array<i32>} : memref<64x128xbf16, #tpu.memory_space<vmem>>, vector<64x128xbf16>,
    %c0_3 = arith.constant 0 : index
    %c0_4 = arith.constant 0 : index
    %2 = vector.load %arg16[%c0_3, %c0_4] : memref<64x128xbf16, #tpu.memory_space<vmem>>, vector<64x128xbf16>
    %c0_5 = arith.constant 0 : index
    %c0_6 = arith.constant 0 : index
    %c0_7 = arith.constant 0 : index
    %3 = vector.load %arg6[%c0_5, %c0_6, %c0_7] : memref<2x128x256xbf16, #tpu.memory_space<vmem>>, vector<1x128x256xbf16>
    %4 = vector.shape_cast %3 : vector<1x128x256xbf16> to vector<128x256xbf16>
    %cst = arith.constant dense<0.000000e+00> : vector<64x256xf32>
    %5 = tpu.matmul %2, %4, %cst {dimension_numbers = #tpu.dot_dimension_numbers<[1], [0], [0], [1], [0, 0, 1, 1], [], []>} : vector<64x128xbf16>, vector<128x256xbf16>, vector<64x256xf32> -> vector<64x256xf32>
    %6 = vector.extract_strided_slice %5 {offsets = [0, 128], sizes = [64, 128], strides = [1, 1]} : vector<64x256xf32> to vector<64x128xf32>
    %7 = arith.truncf %6 : vector<64x128xf32> to vector<64x128xbf16>
    %c0_8 = arith.constant 0 : index
    %c0_9 = arith.constant 0 : index
    %8 = vector.load %arg17[%c0_8, %c0_9] : memref<64x128xbf16, #tpu.memory_space<vmem>>, vector<64x128xbf16>
    tpu.vector_store %arg17[%c0_8, %c0_9], %7 {strides = array<i32>} : memref<64x128xbf16, #tpu.memory_space<vmem>>, vector<64x128xbf16>,
    %9 = vector.extract_strided_slice %5 {offsets = [0, 0], sizes = [64, 128], strides = [1, 1]} : vector<64x256xf32> to vector<64x128xf32>
    %c0_10 = arith.constant 0 : index
    %c0_11 = arith.constant 0 : index
    %c0_12 = arith.constant 0 : index
    %10 = vector.load %arg8[%c0_10, %c0_11, %c0_12] : memref<2x1x128xf32, #tpu.memory_space<vmem>>, vector<1x1x128xf32>
    %11 = vector.shape_cast %10 : vector<1x1x128xf32> to vector<1x128xf32>
    %12 = vector.broadcast %11 : vector<1x128xf32> to vector<64x128xf32>
    %13 = arith.addf %9, %12 : vector<64x128xf32>
    %c0_13 = arith.constant 0 : index
    %c0_14 = arith.constant 0 : index
    %14 = vector.load %arg18[%c0_13, %c0_14] : memref<64x128xf32, #tpu.memory_space<vmem>>, vector<64x128xf32>
    tpu.vector_store %arg18[%c0_13, %c0_14], %13 {strides = array<i32>} : memref<64x128xf32, #tpu.memory_space<vmem>>, vector<64x128xf32>,
    %c0_i32 = arith.constant 0 : i32
    %c64_i32 = arith.constant 64 : i32
    %15 = arith.muli %c0_i32, %c64_i32 : i32
    %16 = tpu.assume_multiple %15, 64 : i32
    %17 = arith.index_cast %16 : i32 to index
    %c0_15 = arith.constant 0 : index
    %18 = vector.load %arg18[%17, %c0_15] : memref<64x128xf32, #tpu.memory_space<vmem>>, vector<64x128xf32>
    %19 = arith.index_cast %16 : i32 to index
    %c0_16 = arith.constant 0 : index
    %20 = vector.load %arg1[%19, %c0_16] : memref<64x4xi32, #tpu.memory_space<vmem>>, vector<64x4xi32>
    %21 = arith.index_cast %16 : i32 to index
    %c0_17 = arith.constant 0 : index
    %22 = vector.load %arg2[%21, %c0_17] : memref<64x4xf32, #tpu.memory_space<vmem>>, vector<64x4xf32>
    %23 = arith.index_cast %16 : i32 to index
    %c0_18 = arith.constant 0 : index
    %24 = vector.load %arg3[%23, %c0_18] : memref<64x4xf32, #tpu.memory_space<vmem>>, vector<64x4xf32>
    %c0_19 = arith.constant 0 : index
    %c0_20 = arith.constant 0 : index
    %c0_21 = arith.constant 0 : index
    %25 = vector.load %arg7[%c0_19, %c0_20, %c0_21] : memref<2x1x128xf32, #tpu.memory_space<vmem>>, vector<1x1x128xf32>
    %26 = vector.shape_cast %25 : vector<1x1x128xf32> to vector<1x128xf32>
    %cst_22 = arith.constant 0.000000e+00 : f32
    %27 = vector.broadcast %cst_22 : f32 to vector<64x128xf32>
    %28 = tpu.iota {dimensions = array<i32: 1>} : vector<64x64xi32>
    %29 = vector.extract_strided_slice %20 {offsets = [0, 0], sizes = [64, 1], strides = [1, 1]} : vector<64x4xi32> to vector<64x1xi32>
    %30 = vector.broadcast %29 : vector<64x1xi32> to vector<64x64xi32>
    %31 = arith.cmpi eq, %28, %30 : vector<64x64xi32>
    %cst_23 = arith.constant 1.000000e+00 : f32
    %cst_24 = arith.constant 0.000000e+00 : f32
    %32 = vector.broadcast %cst_23 : f32 to vector<64x64xf32>
    %33 = vector.broadcast %cst_24 : f32 to vector<64x64xf32>
    %34 = arith.select %31, %32, %33 : vector<64x64xi1>, vector<64x64xf32>
    %35 = arith.truncf %34 : vector<64x64xf32> to vector<64x64xbf16>
    %c0_25 = arith.constant 0 : index
    %c0_26 = arith.constant 0 : index
    %36 = vector.load %arg17[%c0_25, %c0_26] : memref<64x128xbf16, #tpu.memory_space<vmem>>, vector<64x128xbf16>
    %cst_27 = arith.constant dense<0.000000e+00> : vector<64x128xf32>
    %37 = tpu.matmul %35, %36, %cst_27 {dimension_numbers = #tpu.dot_dimension_numbers<[1], [0], [0], [1], [0, 0, 1, 1], [], []>} : vector<64x64xbf16>, vector<64x128xbf16>, vector<64x128xf32> -> vector<64x128xf32>
    %38 = arith.addf %18, %37 : vector<64x128xf32>
    %39 = vector.extract_strided_slice %22 {offsets = [0, 0], sizes = [64, 1], strides = [1, 1]} : vector<64x4xf32> to vector<64x1xf32>
    %40 = vector.broadcast %39 : vector<64x1xf32> to vector<64x128xf32>
    %41 = vector.broadcast %26 : vector<1x128xf32> to vector<64x128xf32>
    %42 = arith.mulf %40, %41 : vector<64x128xf32>
    %43 = arith.addf %38, %42 : vector<64x128xf32>
    %cst_28 = arith.constant 0.000000e+00 : f32
    %44 = vector.broadcast %cst_28 : f32 to vector<64x128xf32>
    %45 = arith.maximumf %43, %44 : vector<64x128xf32>
    %46 = vector.extract_strided_slice %24 {offsets = [0, 0], sizes = [64, 1], strides = [1, 1]} : vector<64x4xf32> to vector<64x1xf32>
    %47 = vector.broadcast %46 : vector<64x1xf32> to vector<64x128xf32>
    %48 = arith.mulf %45, %47 : vector<64x128xf32>
    %49 = arith.addf %27, %48 : vector<64x128xf32>
    %50 = tpu.iota {dimensions = array<i32: 1>} : vector<64x64xi32>
    %51 = vector.extract_strided_slice %20 {offsets = [0, 1], sizes = [64, 1], strides = [1, 1]} : vector<64x4xi32> to vector<64x1xi32>
    %52 = vector.broadcast %51 : vector<64x1xi32> to vector<64x64xi32>
    %53 = arith.cmpi eq, %50, %52 : vector<64x64xi32>
    %cst_29 = arith.constant 1.000000e+00 : f32
    %cst_30 = arith.constant 0.000000e+00 : f32
    %54 = vector.broadcast %cst_29 : f32 to vector<64x64xf32>
    %55 = vector.broadcast %cst_30 : f32 to vector<64x64xf32>
    %56 = arith.select %53, %54, %55 : vector<64x64xi1>, vector<64x64xf32>
    %57 = arith.truncf %56 : vector<64x64xf32> to vector<64x64xbf16>
    %c0_31 = arith.constant 0 : index
    %c0_32 = arith.constant 0 : index
    %58 = vector.load %arg17[%c0_31, %c0_32] : memref<64x128xbf16, #tpu.memory_space<vmem>>, vector<64x128xbf16>
    %cst_33 = arith.constant dense<0.000000e+00> : vector<64x128xf32>
    %59 = tpu.matmul %57, %58, %cst_33 {dimension_numbers = #tpu.dot_dimension_numbers<[1], [0], [0], [1], [0, 0, 1, 1], [], []>} : vector<64x64xbf16>, vector<64x128xbf16>, vector<64x128xf32> -> vector<64x128xf32>
    %60 = arith.addf %18, %59 : vector<64x128xf32>
    %61 = vector.extract_strided_slice %22 {offsets = [0, 1], sizes = [64, 1], strides = [1, 1]} : vector<64x4xf32> to vector<64x1xf32>
    %62 = vector.broadcast %61 : vector<64x1xf32> to vector<64x128xf32>
    %63 = vector.broadcast %26 : vector<1x128xf32> to vector<64x128xf32>
    %64 = arith.mulf %62, %63 : vector<64x128xf32>
    %65 = arith.addf %60, %64 : vector<64x128xf32>
    %cst_34 = arith.constant 0.000000e+00 : f32
    %66 = vector.broadcast %cst_34 : f32 to vector<64x128xf32>
    %67 = arith.maximumf %65, %66 : vector<64x128xf32>
    %68 = vector.extract_strided_slice %24 {offsets = [0, 1], sizes = [64, 1], strides = [1, 1]} : vector<64x4xf32> to vector<64x1xf32>
    %69 = vector.broadcast %68 : vector<64x1xf32> to vector<64x128xf32>
    %70 = arith.mulf %67, %69 : vector<64x128xf32>
    %71 = arith.addf %49, %70 : vector<64x128xf32>
    %72 = tpu.iota {dimensions = array<i32: 1>} : vector<64x64xi32>
    %73 = vector.extract_strided_slice %20 {offsets = [0, 2], sizes = [64, 1], strides = [1, 1]} : vector<64x4xi32> to vector<64x1xi32>
    %74 = vector.broadcast %73 : vector<64x1xi32> to vector<64x64xi32>
    %75 = arith.cmpi eq, %72, %74 : vector<64x64xi32>
    %cst_35 = arith.constant 1.000000e+00 : f32
    %cst_36 = arith.constant 0.000000e+00 : f32
    %76 = vector.broadcast %cst_35 : f32 to vector<64x64xf32>
    %77 = vector.broadcast %cst_36 : f32 to vector<64x64xf32>
    %78 = arith.select %75, %76, %77 : vector<64x64xi1>, vector<64x64xf32>
    %79 = arith.truncf %78 : vector<64x64xf32> to vector<64x64xbf16>
    %c0_37 = arith.constant 0 : index
    %c0_38 = arith.constant 0 : index
    %80 = vector.load %arg17[%c0_37, %c0_38] : memref<64x128xbf16, #tpu.memory_space<vmem>>, vector<64x128xbf16>
    %cst_39 = arith.constant dense<0.000000e+00> : vector<64x128xf32>
    %81 = tpu.matmul %79, %80, %cst_39 {dimension_numbers = #tpu.dot_dimension_numbers<[1], [0], [0], [1], [0, 0, 1, 1], [], []>} : vector<64x64xbf16>, vector<64x128xbf16>, vector<64x128xf32> -> vector<64x128xf32>
    %82 = arith.addf %18, %81 : vector<64x128xf32>
    %83 = vector.extract_strided_slice %22 {offsets = [0, 2], sizes = [64, 1], strides = [1, 1]} : vector<64x4xf32> to vector<64x1xf32>
    %84 = vector.broadcast %83 : vector<64x1xf32> to vector<64x128xf32>
    %85 = vector.broadcast %26 : vector<1x128xf32> to vector<64x128xf32>
    %86 = arith.mulf %84, %85 : vector<64x128xf32>
    %87 = arith.addf %82, %86 : vector<64x128xf32>
    %cst_40 = arith.constant 0.000000e+00 : f32
    %88 = vector.broadcast %cst_40 : f32 to vector<64x128xf32>
    %89 = arith.maximumf %87, %88 : vector<64x128xf32>
    %90 = vector.extract_strided_slice %24 {offsets = [0, 2], sizes = [64, 1], strides = [1, 1]} : vector<64x4xf32> to vector<64x1xf32>
    %91 = vector.broadcast %90 : vector<64x1xf32> to vector<64x128xf32>
    %92 = arith.mulf %89, %91 : vector<64x128xf32>
    %93 = arith.addf %71, %92 : vector<64x128xf32>
    %94 = tpu.iota {dimensions = array<i32: 1>} : vector<64x64xi32>
    %95 = vector.extract_strided_slice %20 {offsets = [0, 3], sizes = [64, 1], strides = [1, 1]} : vector<64x4xi32> to vector<64x1xi32>
    %96 = vector.broadcast %95 : vector<64x1xi32> to vector<64x64xi32>
    %97 = arith.cmpi eq, %94, %96 : vector<64x64xi32>
    %cst_41 = arith.constant 1.000000e+00 : f32
    %cst_42 = arith.constant 0.000000e+00 : f32
    %98 = vector.broadcast %cst_41 : f32 to vector<64x64xf32>
    %99 = vector.broadcast %cst_42 : f32 to vector<64x64xf32>
    %100 = arith.select %97, %98, %99 : vector<64x64xi1>, vector<64x64xf32>
    %101 = arith.truncf %100 : vector<64x64xf32> to vector<64x64xbf16>
    %c0_43 = arith.constant 0 : index
    %c0_44 = arith.constant 0 : index
    %102 = vector.load %arg17[%c0_43, %c0_44] : memref<64x128xbf16, #tpu.memory_space<vmem>>, vector<64x128xbf16>
    %cst_45 = arith.constant dense<0.000000e+00> : vector<64x128xf32>
    %103 = tpu.matmul %101, %102, %cst_45 {dimension_numbers = #tpu.dot_dimension_numbers<[1], [0], [0], [1], [0, 0, 1, 1], [], []>} : vector<64x64xbf16>, vector<64x128xbf16>, vector<64x128xf32> -> vector<64x128xf32>
    %104 = arith.addf %18, %103 : vector<64x128xf32>
    %105 = vector.extract_strided_slice %22 {offsets = [0, 3], sizes = [64, 1], strides = [1, 1]} : vector<64x4xf32> to vector<64x1xf32>
    %106 = vector.broadcast %105 : vector<64x1xf32> to vector<64x128xf32>
    %107 = vector.broadcast %26 : vector<1x128xf32> to vector<64x128xf32>
    %108 = arith.mulf %106, %107 : vector<64x128xf32>
    %109 = arith.addf %104, %108 : vector<64x128xf32>
    %cst_46 = arith.constant 0.000000e+00 : f32
    %110 = vector.broadcast %cst_46 : f32 to vector<64x128xf32>
    %111 = arith.maximumf %109, %110 : vector<64x128xf32>
    %112 = vector.extract_strided_slice %24 {offsets = [0, 3], sizes = [64, 1], strides = [1, 1]} : vector<64x4xf32> to vector<64x1xf32>
    %113 = vector.broadcast %112 : vector<64x1xf32> to vector<64x128xf32>
    %114 = arith.mulf %111, %113 : vector<64x128xf32>
    %115 = arith.addf %93, %114 : vector<64x128xf32>
    %116 = arith.index_cast %16 : i32 to index
    %c0_47 = arith.constant 0 : index
    %117 = vector.load %arg16[%116, %c0_47] : memref<64x128xbf16, #tpu.memory_space<vmem>>, vector<64x128xbf16>
    %118 = arith.truncf %115 : vector<64x128xf32> to vector<64x128xbf16>
    %119 = tpu.concatenate %117, %118 in 1 : vector<64x128xbf16>, vector<64x128xbf16> -> vector<64x256xbf16>
    %c0_48 = arith.constant 0 : index
    %c0_49 = arith.constant 0 : index
    %c0_50 = arith.constant 0 : index
    %120 = vector.load %arg9[%c0_48, %c0_49, %c0_50] : memref<2x256x128xbf16, #tpu.memory_space<vmem>>, vector<1x256x128xbf16>
    %121 = vector.shape_cast %120 : vector<1x256x128xbf16> to vector<256x128xbf16>
    %cst_51 = arith.constant dense<0.000000e+00> : vector<64x128xf32>
    %122 = tpu.matmul %119, %121, %cst_51 {dimension_numbers = #tpu.dot_dimension_numbers<[1], [0], [0], [1], [0, 0, 1, 1], [], []>} : vector<64x256xbf16>, vector<256x128xbf16>, vector<64x128xf32> -> vector<64x128xf32>
    %c0_52 = arith.constant 0 : index
    %c0_53 = arith.constant 0 : index
    %c0_54 = arith.constant 0 : index
    %123 = vector.load %arg10[%c0_52, %c0_53, %c0_54] : memref<2x1x128xf32, #tpu.memory_space<vmem>>, vector<1x1x128xf32>
    %124 = vector.shape_cast %123 : vector<1x1x128xf32> to vector<1x128xf32>
    %125 = vector.broadcast %124 : vector<1x128xf32> to vector<64x128xf32>
    %126 = arith.addf %122, %125 : vector<64x128xf32>
    %cst_55 = arith.constant 0.000000e+00 : f32
    %127 = vector.broadcast %cst_55 : f32 to vector<64x128xf32>
    %128 = arith.maximumf %126, %127 : vector<64x128xf32>
    %129 = arith.extf %117 : vector<64x128xbf16> to vector<64x128xf32>
    %130 = arith.addf %129, %128 : vector<64x128xf32>
    %131 = arith.truncf %130 : vector<64x128xf32> to vector<64x128xbf16>
    %132 = arith.index_cast %16 : i32 to index
    %c0_56 = arith.constant 0 : index
    %133 = vector.load %arg16[%132, %c0_56] : memref<64x128xbf16, #tpu.memory_space<vmem>>, vector<64x128xbf16>
    tpu.vector_store %arg16[%132, %c0_56], %131 {strides = array<i32>} : memref<64x128xbf16, #tpu.memory_space<vmem>>, vector<64x128xbf16>,
    %c1_i32 = arith.constant 1 : i32
    %c0_57 = arith.constant 0 : index
    %c0_58 = arith.constant 0 : index
    %134 = vector.load %arg16[%c0_57, %c0_58] : memref<64x128xbf16, #tpu.memory_space<vmem>>, vector<64x128xbf16>
    %c1 = arith.constant 1 : index
    %c0_59 = arith.constant 0 : index
    %c0_60 = arith.constant 0 : index
    %135 = vector.load %arg6[%c1, %c0_59, %c0_60] : memref<2x128x256xbf16, #tpu.memory_space<vmem>>, vector<1x128x256xbf16>
    %136 = vector.shape_cast %135 : vector<1x128x256xbf16> to vector<128x256xbf16>
    %cst_61 = arith.constant dense<0.000000e+00> : vector<64x256xf32>
    %137 = tpu.matmul %134, %136, %cst_61 {dimension_numbers = #tpu.dot_dimension_numbers<[1], [0], [0], [1], [0, 0, 1, 1], [], []>} : vector<64x128xbf16>, vector<128x256xbf16>, vector<64x256xf32> -> vector<64x256xf32>
    %138 = vector.extract_strided_slice %137 {offsets = [0, 128], sizes = [64, 128], strides = [1, 1]} : vector<64x256xf32> to vector<64x128xf32>
    %139 = arith.truncf %138 : vector<64x128xf32> to vector<64x128xbf16>
    %c0_62 = arith.constant 0 : index
    %c0_63 = arith.constant 0 : index
    %140 = vector.load %arg17[%c0_62, %c0_63] : memref<64x128xbf16, #tpu.memory_space<vmem>>, vector<64x128xbf16>
    tpu.vector_store %arg17[%c0_62, %c0_63], %139 {strides = array<i32>} : memref<64x128xbf16, #tpu.memory_space<vmem>>, vector<64x128xbf16>,
    %141 = vector.extract_strided_slice %137 {offsets = [0, 0], sizes = [64, 128], strides = [1, 1]} : vector<64x256xf32> to vector<64x128xf32>
    %c1_64 = arith.constant 1 : index
    %c0_65 = arith.constant 0 : index
    %c0_66 = arith.constant 0 : index
    %142 = vector.load %arg8[%c1_64, %c0_65, %c0_66] : memref<2x1x128xf32, #tpu.memory_space<vmem>>, vector<1x1x128xf32>
    %143 = vector.shape_cast %142 : vector<1x1x128xf32> to vector<1x128xf32>
    %144 = vector.broadcast %143 : vector<1x128xf32> to vector<64x128xf32>
    %145 = arith.addf %141, %144 : vector<64x128xf32>
    %c0_67 = arith.constant 0 : index
    %c0_68 = arith.constant 0 : index
    %146 = vector.load %arg18[%c0_67, %c0_68] : memref<64x128xf32, #tpu.memory_space<vmem>>, vector<64x128xf32>
    tpu.vector_store %arg18[%c0_67, %c0_68], %145 {strides = array<i32>} : memref<64x128xf32, #tpu.memory_space<vmem>>, vector<64x128xf32>,
    %c0_i32_69 = arith.constant 0 : i32
    %c64_i32_70 = arith.constant 64 : i32
    %147 = arith.muli %c0_i32_69, %c64_i32_70 : i32
    %148 = tpu.assume_multiple %147, 64 : i32
    %149 = arith.index_cast %148 : i32 to index
    %c0_71 = arith.constant 0 : index
    %150 = vector.load %arg18[%149, %c0_71] : memref<64x128xf32, #tpu.memory_space<vmem>>, vector<64x128xf32>
    %151 = arith.index_cast %148 : i32 to index
    %c0_72 = arith.constant 0 : index
    %152 = vector.load %arg1[%151, %c0_72] : memref<64x4xi32, #tpu.memory_space<vmem>>, vector<64x4xi32>
    %153 = arith.index_cast %148 : i32 to index
    %c0_73 = arith.constant 0 : index
    %154 = vector.load %arg2[%153, %c0_73] : memref<64x4xf32, #tpu.memory_space<vmem>>, vector<64x4xf32>
    %155 = arith.index_cast %148 : i32 to index
    %c0_74 = arith.constant 0 : index
    %156 = vector.load %arg3[%155, %c0_74] : memref<64x4xf32, #tpu.memory_space<vmem>>, vector<64x4xf32>
    %c1_75 = arith.constant 1 : index
    %c0_76 = arith.constant 0 : index
    %c0_77 = arith.constant 0 : index
    %157 = vector.load %arg7[%c1_75, %c0_76, %c0_77] : memref<2x1x128xf32, #tpu.memory_space<vmem>>, vector<1x1x128xf32>
    %158 = vector.shape_cast %157 : vector<1x1x128xf32> to vector<1x128xf32>
    %cst_78 = arith.constant 0.000000e+00 : f32
    %159 = vector.broadcast %cst_78 : f32 to vector<64x128xf32>
    %160 = tpu.iota {dimensions = array<i32: 1>} : vector<64x64xi32>
    %161 = vector.extract_strided_slice %152 {offsets = [0, 0], sizes = [64, 1], strides = [1, 1]} : vector<64x4xi32> to vector<64x1xi32>
    %162 = vector.broadcast %161 : vector<64x1xi32> to vector<64x64xi32>
    %163 = arith.cmpi eq, %160, %162 : vector<64x64xi32>
    %cst_79 = arith.constant 1.000000e+00 : f32
    %cst_80 = arith.constant 0.000000e+00 : f32
    %164 = vector.broadcast %cst_79 : f32 to vector<64x64xf32>
    %165 = vector.broadcast %cst_80 : f32 to vector<64x64xf32>
    %166 = arith.select %163, %164, %165 : vector<64x64xi1>, vector<64x64xf32>
    %167 = arith.truncf %166 : vector<64x64xf32> to vector<64x64xbf16>
    %c0_81 = arith.constant 0 : index
    %c0_82 = arith.constant 0 : index
    %168 = vector.load %arg17[%c0_81, %c0_82] : memref<64x128xbf16, #tpu.memory_space<vmem>>, vector<64x128xbf16>
    %cst_83 = arith.constant dense<0.000000e+00> : vector<64x128xf32>
    %169 = tpu.matmul %167, %168, %cst_83 {dimension_numbers = #tpu.dot_dimension_numbers<[1], [0], [0], [1], [0, 0, 1, 1], [], []>} : vector<64x64xbf16>, vector<64x128xbf16>, vector<64x128xf32> -> vector<64x128xf32>
    %170 = arith.addf %150, %169 : vector<64x128xf32>
    %171 = vector.extract_strided_slice %154 {offsets = [0, 0], sizes = [64, 1], strides = [1, 1]} : vector<64x4xf32> to vector<64x1xf32>
    %172 = vector.broadcast %171 : vector<64x1xf32> to vector<64x128xf32>
    %173 = vector.broadcast %158 : vector<1x128xf32> to vector<64x128xf32>
    %174 = arith.mulf %172, %173 : vector<64x128xf32>
    %175 = arith.addf %170, %174 : vector<64x128xf32>
    %cst_84 = arith.constant 0.000000e+00 : f32
    %176 = vector.broadcast %cst_84 : f32 to vector<64x128xf32>
    %177 = arith.maximumf %175, %176 : vector<64x128xf32>
    %178 = vector.extract_strided_slice %156 {offsets = [0, 0], sizes = [64, 1], strides = [1, 1]} : vector<64x4xf32> to vector<64x1xf32>
    %179 = vector.broadcast %178 : vector<64x1xf32> to vector<64x128xf32>
    %180 = arith.mulf %177, %179 : vector<64x128xf32>
    %181 = arith.addf %159, %180 : vector<64x128xf32>
    %182 = tpu.iota {dimensions = array<i32: 1>} : vector<64x64xi32>
    %183 = vector.extract_strided_slice %152 {offsets = [0, 1], sizes = [64, 1], strides = [1, 1]} : vector<64x4xi32> to vector<64x1xi32>
    %184 = vector.broadcast %183 : vector<64x1xi32> to vector<64x64xi32>
    %185 = arith.cmpi eq, %182, %184 : vector<64x64xi32>
    %cst_85 = arith.constant 1.000000e+00 : f32
    %cst_86 = arith.constant 0.000000e+00 : f32
    %186 = vector.broadcast %cst_85 : f32 to vector<64x64xf32>
    %187 = vector.broadcast %cst_86 : f32 to vector<64x64xf32>
    %188 = arith.select %185, %186, %187 : vector<64x64xi1>, vector<64x64xf32>
    %189 = arith.truncf %188 : vector<64x64xf32> to vector<64x64xbf16>
    %c0_87 = arith.constant 0 : index
    %c0_88 = arith.constant 0 : index
    %190 = vector.load %arg17[%c0_87, %c0_88] : memref<64x128xbf16, #tpu.memory_space<vmem>>, vector<64x128xbf16>
    %cst_89 = arith.constant dense<0.000000e+00> : vector<64x128xf32>
    %191 = tpu.matmul %189, %190, %cst_89 {dimension_numbers = #tpu.dot_dimension_numbers<[1], [0], [0], [1], [0, 0, 1, 1], [], []>} : vector<64x64xbf16>, vector<64x128xbf16>, vector<64x128xf32> -> vector<64x128xf32>
    %192 = arith.addf %150, %191 : vector<64x128xf32>
    %193 = vector.extract_strided_slice %154 {offsets = [0, 1], sizes = [64, 1], strides = [1, 1]} : vector<64x4xf32> to vector<64x1xf32>
    %194 = vector.broadcast %193 : vector<64x1xf32> to vector<64x128xf32>
    %195 = vector.broadcast %158 : vector<1x128xf32> to vector<64x128xf32>
    %196 = arith.mulf %194, %195 : vector<64x128xf32>
    %197 = arith.addf %192, %196 : vector<64x128xf32>
    %cst_90 = arith.constant 0.000000e+00 : f32
    %198 = vector.broadcast %cst_90 : f32 to vector<64x128xf32>
    %199 = arith.maximumf %197, %198 : vector<64x128xf32>
    %200 = vector.extract_strided_slice %156 {offsets = [0, 1], sizes = [64, 1], strides = [1, 1]} : vector<64x4xf32> to vector<64x1xf32>
    %201 = vector.broadcast %200 : vector<64x1xf32> to vector<64x128xf32>
    %202 = arith.mulf %199, %201 : vector<64x128xf32>
    %203 = arith.addf %181, %202 : vector<64x128xf32>
    %204 = tpu.iota {dimensions = array<i32: 1>} : vector<64x64xi32>
    %205 = vector.extract_strided_slice %152 {offsets = [0, 2], sizes = [64, 1], strides = [1, 1]} : vector<64x4xi32> to vector<64x1xi32>
    %206 = vector.broadcast %205 : vector<64x1xi32> to vector<64x64xi32>
    %207 = arith.cmpi eq, %204, %206 : vector<64x64xi32>
    %cst_91 = arith.constant 1.000000e+00 : f32
    %cst_92 = arith.constant 0.000000e+00 : f32
    %208 = vector.broadcast %cst_91 : f32 to vector<64x64xf32>
    %209 = vector.broadcast %cst_92 : f32 to vector<64x64xf32>
    %210 = arith.select %207, %208, %209 : vector<64x64xi1>, vector<64x64xf32>
    %211 = arith.truncf %210 : vector<64x64xf32> to vector<64x64xbf16>
    %c0_93 = arith.constant 0 : index
    %c0_94 = arith.constant 0 : index
    %212 = vector.load %arg17[%c0_93, %c0_94] : memref<64x128xbf16, #tpu.memory_space<vmem>>, vector<64x128xbf16>
    %cst_95 = arith.constant dense<0.000000e+00> : vector<64x128xf32>
    %213 = tpu.matmul %211, %212, %cst_95 {dimension_numbers = #tpu.dot_dimension_numbers<[1], [0], [0], [1], [0, 0, 1, 1], [], []>} : vector<64x64xbf16>, vector<64x128xbf16>, vector<64x128xf32> -> vector<64x128xf32>
    %214 = arith.addf %150, %213 : vector<64x128xf32>
    %215 = vector.extract_strided_slice %154 {offsets = [0, 2], sizes = [64, 1], strides = [1, 1]} : vector<64x4xf32> to vector<64x1xf32>
    %216 = vector.broadcast %215 : vector<64x1xf32> to vector<64x128xf32>
    %217 = vector.broadcast %158 : vector<1x128xf32> to vector<64x128xf32>
    %218 = arith.mulf %216, %217 : vector<64x128xf32>
    %219 = arith.addf %214, %218 : vector<64x128xf32>
    %cst_96 = arith.constant 0.000000e+00 : f32
    %220 = vector.broadcast %cst_96 : f32 to vector<64x128xf32>
    %221 = arith.maximumf %219, %220 : vector<64x128xf32>
    %222 = vector.extract_strided_slice %156 {offsets = [0, 2], sizes = [64, 1], strides = [1, 1]} : vector<64x4xf32> to vector<64x1xf32>
    %223 = vector.broadcast %222 : vector<64x1xf32> to vector<64x128xf32>
    %224 = arith.mulf %221, %223 : vector<64x128xf32>
    %225 = arith.addf %203, %224 : vector<64x128xf32>
    %226 = tpu.iota {dimensions = array<i32: 1>} : vector<64x64xi32>
    %227 = vector.extract_strided_slice %152 {offsets = [0, 3], sizes = [64, 1], strides = [1, 1]} : vector<64x4xi32> to vector<64x1xi32>
    %228 = vector.broadcast %227 : vector<64x1xi32> to vector<64x64xi32>
    %229 = arith.cmpi eq, %226, %228 : vector<64x64xi32>
    %cst_97 = arith.constant 1.000000e+00 : f32
    %cst_98 = arith.constant 0.000000e+00 : f32
    %230 = vector.broadcast %cst_97 : f32 to vector<64x64xf32>
    %231 = vector.broadcast %cst_98 : f32 to vector<64x64xf32>
    %232 = arith.select %229, %230, %231 : vector<64x64xi1>, vector<64x64xf32>
    %233 = arith.truncf %232 : vector<64x64xf32> to vector<64x64xbf16>
    %c0_99 = arith.constant 0 : index
    %c0_100 = arith.constant 0 : index
    %234 = vector.load %arg17[%c0_99, %c0_100] : memref<64x128xbf16, #tpu.memory_space<vmem>>, vector<64x128xbf16>
    %cst_101 = arith.constant dense<0.000000e+00> : vector<64x128xf32>
    %235 = tpu.matmul %233, %234, %cst_101 {dimension_numbers = #tpu.dot_dimension_numbers<[1], [0], [0], [1], [0, 0, 1, 1], [], []>} : vector<64x64xbf16>, vector<64x128xbf16>, vector<64x128xf32> -> vector<64x128xf32>
    %236 = arith.addf %150, %235 : vector<64x128xf32>
    %237 = vector.extract_strided_slice %154 {offsets = [0, 3], sizes = [64, 1], strides = [1, 1]} : vector<64x4xf32> to vector<64x1xf32>
    %238 = vector.broadcast %237 : vector<64x1xf32> to vector<64x128xf32>
    %239 = vector.broadcast %158 : vector<1x128xf32> to vector<64x128xf32>
    %240 = arith.mulf %238, %239 : vector<64x128xf32>
    %241 = arith.addf %236, %240 : vector<64x128xf32>
    %cst_102 = arith.constant 0.000000e+00 : f32
    %242 = vector.broadcast %cst_102 : f32 to vector<64x128xf32>
    %243 = arith.maximumf %241, %242 : vector<64x128xf32>
    %244 = vector.extract_strided_slice %156 {offsets = [0, 3], sizes = [64, 1], strides = [1, 1]} : vector<64x4xf32> to vector<64x1xf32>
    %245 = vector.broadcast %244 : vector<64x1xf32> to vector<64x128xf32>
    %246 = arith.mulf %243, %245 : vector<64x128xf32>
    %247 = arith.addf %225, %246 : vector<64x128xf32>
    %248 = arith.index_cast %148 : i32 to index
    %c0_103 = arith.constant 0 : index
    %249 = vector.load %arg16[%248, %c0_103] : memref<64x128xbf16, #tpu.memory_space<vmem>>, vector<64x128xbf16>
    %250 = arith.truncf %247 : vector<64x128xf32> to vector<64x128xbf16>
    %251 = tpu.concatenate %249, %250 in 1 : vector<64x128xbf16>, vector<64x128xbf16> -> vector<64x256xbf16>
    %c1_104 = arith.constant 1 : index
    %c0_105 = arith.constant 0 : index
    %c0_106 = arith.constant 0 : index
    %252 = vector.load %arg9[%c1_104, %c0_105, %c0_106] : memref<2x256x128xbf16, #tpu.memory_space<vmem>>, vector<1x256x128xbf16>
    %253 = vector.shape_cast %252 : vector<1x256x128xbf16> to vector<256x128xbf16>
    %cst_107 = arith.constant dense<0.000000e+00> : vector<64x128xf32>
    %254 = tpu.matmul %251, %253, %cst_107 {dimension_numbers = #tpu.dot_dimension_numbers<[1], [0], [0], [1], [0, 0, 1, 1], [], []>} : vector<64x256xbf16>, vector<256x128xbf16>, vector<64x128xf32> -> vector<64x128xf32>
    %c1_108 = arith.constant 1 : index
    %c0_109 = arith.constant 0 : index
    %c0_110 = arith.constant 0 : index
    %255 = vector.load %arg10[%c1_108, %c0_109, %c0_110] : memref<2x1x128xf32, #tpu.memory_space<vmem>>, vector<1x1x128xf32>
    %256 = vector.shape_cast %255 : vector<1x1x128xf32> to vector<1x128xf32>
    %257 = vector.broadcast %256 : vector<1x128xf32> to vector<64x128xf32>
    %258 = arith.addf %254, %257 : vector<64x128xf32>
    %cst_111 = arith.constant 0.000000e+00 : f32
    %259 = vector.broadcast %cst_111 : f32 to vector<64x128xf32>
    %260 = arith.maximumf %258, %259 : vector<64x128xf32>
    %261 = arith.extf %249 : vector<64x128xbf16> to vector<64x128xf32>
    %262 = arith.addf %261, %260 : vector<64x128xf32>
    %263 = arith.truncf %262 : vector<64x128xf32> to vector<64x128xbf16>
    %264 = arith.index_cast %148 : i32 to index
    %c0_112 = arith.constant 0 : index
    %265 = vector.load %arg16[%264, %c0_112] : memref<64x128xbf16, #tpu.memory_space<vmem>>, vector<64x128xbf16>
    tpu.vector_store %arg16[%264, %c0_112], %263 {strides = array<i32>} : memref<64x128xbf16, #tpu.memory_space<vmem>>, vector<64x128xbf16>,
    %c1_i32_113 = arith.constant 1 : i32
    %c0_114 = arith.constant 0 : index
    %c0_115 = arith.constant 0 : index
    %266 = vector.load %arg4[%c0_114, %c0_115] : memref<8x64xbf16, #tpu.memory_space<vmem>>, vector<8x64xbf16>
    %c0_116 = arith.constant 0 : index
    %c0_117 = arith.constant 0 : index
    %267 = vector.load %arg16[%c0_116, %c0_117] : memref<64x128xbf16, #tpu.memory_space<vmem>>, vector<64x128xbf16>
    %cst_118 = arith.constant dense<0.000000e+00> : vector<8x128xf32>
    %268 = tpu.matmul %266, %267, %cst_118 {dimension_numbers = #tpu.dot_dimension_numbers<[1], [0], [0], [1], [0, 0, 1, 1], [], []>} : vector<8x64xbf16>, vector<64x128xbf16>, vector<8x128xf32> -> vector<8x128xf32>
    %269 = arith.truncf %268 : vector<8x128xf32> to vector<8x128xbf16>
    %c0_119 = arith.constant 0 : index
    %c0_120 = arith.constant 0 : index
    %c0_121 = arith.constant 0 : index
    %270 = vector.load %arg11[%c0_119, %c0_120, %c0_121] : memref<4x128x128xbf16, #tpu.memory_space<vmem>>, vector<1x128x128xbf16>
    %271 = vector.shape_cast %270 : vector<1x128x128xbf16> to vector<128x128xbf16>
    %cst_122 = arith.constant dense<0.000000e+00> : vector<8x128xf32>
    %272 = tpu.matmul %269, %271, %cst_122 {dimension_numbers = #tpu.dot_dimension_numbers<[1], [0], [0], [1], [0, 0, 1, 1], [], []>} : vector<8x128xbf16>, vector<128x128xbf16>, vector<8x128xf32> -> vector<8x128xf32>
    %c0_123 = arith.constant 0 : index
    %c0_124 = arith.constant 0 : index
    %c0_125 = arith.constant 0 : index
    %273 = vector.load %arg12[%c0_123, %c0_124, %c0_125] : memref<4x1x128xf32, #tpu.memory_space<vmem>>, vector<1x1x128xf32>
    %274 = vector.shape_cast %273 : vector<1x1x128xf32> to vector<1x128xf32>
    %275 = vector.broadcast %274 : vector<1x128xf32> to vector<8x128xf32>
    %276 = arith.addf %272, %275 : vector<8x128xf32>
    %cst_126 = arith.constant 0.000000e+00 : f32
    %277 = vector.broadcast %cst_126 : f32 to vector<8x128xf32>
    %278 = arith.maximumf %276, %277 : vector<8x128xf32>
    %279 = arith.truncf %278 : vector<8x128xf32> to vector<8x128xbf16>
    %c1_127 = arith.constant 1 : index
    %c0_128 = arith.constant 0 : index
    %c0_129 = arith.constant 0 : index
    %280 = vector.load %arg11[%c1_127, %c0_128, %c0_129] : memref<4x128x128xbf16, #tpu.memory_space<vmem>>, vector<1x128x128xbf16>
    %281 = vector.shape_cast %280 : vector<1x128x128xbf16> to vector<128x128xbf16>
    %cst_130 = arith.constant dense<0.000000e+00> : vector<8x128xf32>
    %282 = tpu.matmul %279, %281, %cst_130 {dimension_numbers = #tpu.dot_dimension_numbers<[1], [0], [0], [1], [0, 0, 1, 1], [], []>} : vector<8x128xbf16>, vector<128x128xbf16>, vector<8x128xf32> -> vector<8x128xf32>
    %c1_131 = arith.constant 1 : index
    %c0_132 = arith.constant 0 : index
    %c0_133 = arith.constant 0 : index
    %283 = vector.load %arg12[%c1_131, %c0_132, %c0_133] : memref<4x1x128xf32, #tpu.memory_space<vmem>>, vector<1x1x128xf32>
    %284 = vector.shape_cast %283 : vector<1x1x128xf32> to vector<1x128xf32>
    %285 = vector.broadcast %284 : vector<1x128xf32> to vector<8x128xf32>
    %286 = arith.addf %282, %285 : vector<8x128xf32>
    %cst_134 = arith.constant 0.000000e+00 : f32
    %287 = vector.broadcast %cst_134 : f32 to vector<8x128xf32>
    %288 = arith.maximumf %286, %287 : vector<8x128xf32>
    %289 = arith.truncf %288 : vector<8x128xf32> to vector<8x128xbf16>
    %c2 = arith.constant 2 : index
    %c0_135 = arith.constant 0 : index
    %c0_136 = arith.constant 0 : index
    %290 = vector.load %arg11[%c2, %c0_135, %c0_136] : memref<4x128x128xbf16, #tpu.memory_space<vmem>>, vector<1x128x128xbf16>
    %291 = vector.shape_cast %290 : vector<1x128x128xbf16> to vector<128x128xbf16>
    %cst_137 = arith.constant dense<0.000000e+00> : vector<8x128xf32>
    %292 = tpu.matmul %289, %291, %cst_137 {dimension_numbers = #tpu.dot_dimension_numbers<[1], [0], [0], [1], [0, 0, 1, 1], [], []>} : vector<8x128xbf16>, vector<128x128xbf16>, vector<8x128xf32> -> vector<8x128xf32>
    %c2_138 = arith.constant 2 : index
    %c0_139 = arith.constant 0 : index
    %c0_140 = arith.constant 0 : index
    %293 = vector.load %arg12[%c2_138, %c0_139, %c0_140] : memref<4x1x128xf32, #tpu.memory_space<vmem>>, vector<1x1x128xf32>
    %294 = vector.shape_cast %293 : vector<1x1x128xf32> to vector<1x128xf32>
    %295 = vector.broadcast %294 : vector<1x128xf32> to vector<8x128xf32>
    %296 = arith.addf %292, %295 : vector<8x128xf32>
    %cst_141 = arith.constant 0.000000e+00 : f32
    %297 = vector.broadcast %cst_141 : f32 to vector<8x128xf32>
    %298 = arith.maximumf %296, %297 : vector<8x128xf32>
    %299 = arith.truncf %298 : vector<8x128xf32> to vector<8x128xbf16>
    %c3 = arith.constant 3 : index
    %c0_142 = arith.constant 0 : index
    %c0_143 = arith.constant 0 : index
    %300 = vector.load %arg11[%c3, %c0_142, %c0_143] : memref<4x128x128xbf16, #tpu.memory_space<vmem>>, vector<1x128x128xbf16>
    %301 = vector.shape_cast %300 : vector<1x128x128xbf16> to vector<128x128xbf16>
    %cst_144 = arith.constant dense<0.000000e+00> : vector<8x128xf32>
    %302 = tpu.matmul %299, %301, %cst_144 {dimension_numbers = #tpu.dot_dimension_numbers<[1], [0], [0], [1], [0, 0, 1, 1], [], []>} : vector<8x128xbf16>, vector<128x128xbf16>, vector<8x128xf32> -> vector<8x128xf32>
    %c3_145 = arith.constant 3 : index
    %c0_146 = arith.constant 0 : index
    %c0_147 = arith.constant 0 : index
    %303 = vector.load %arg12[%c3_145, %c0_146, %c0_147] : memref<4x1x128xf32, #tpu.memory_space<vmem>>, vector<1x1x128xf32>
    %304 = vector.shape_cast %303 : vector<1x1x128xf32> to vector<1x128xf32>
    %305 = vector.broadcast %304 : vector<1x128xf32> to vector<8x128xf32>
    %306 = arith.addf %302, %305 : vector<8x128xf32>
    %cst_148 = arith.constant 0.000000e+00 : f32
    %307 = vector.broadcast %cst_148 : f32 to vector<8x128xf32>
    %308 = arith.maximumf %306, %307 : vector<8x128xf32>
    %309 = arith.truncf %308 : vector<8x128xf32> to vector<8x128xbf16>
    %c0_149 = arith.constant 0 : index
    %c0_150 = arith.constant 0 : index
    %310 = vector.load %arg13[%c0_149, %c0_150] : memref<128x128xbf16, #tpu.memory_space<vmem>>, vector<128x128xbf16>
    %cst_151 = arith.constant dense<0.000000e+00> : vector<8x128xf32>
    %311 = tpu.matmul %309, %310, %cst_151 {dimension_numbers = #tpu.dot_dimension_numbers<[1], [0], [0], [1], [0, 0, 1, 1], [], []>} : vector<8x128xbf16>, vector<128x128xbf16>, vector<8x128xf32> -> vector<8x128xf32>
    %c0_152 = arith.constant 0 : index
    %c0_153 = arith.constant 0 : index
    %312 = vector.load %arg14[%c0_152, %c0_153] : memref<1x128xf32, #tpu.memory_space<vmem>>, vector<1x128xf32>
    %313 = vector.broadcast %312 : vector<1x128xf32> to vector<8x128xf32>
    %314 = arith.addf %311, %313 : vector<8x128xf32>
    %c0_154 = arith.constant 0 : index
    %c0_155 = arith.constant 0 : index
    %315 = vector.load %arg15[%c0_154, %c0_155] : memref<8x128xf32, #tpu.memory_space<vmem>>, vector<8x128xf32>
    tpu.vector_store %arg15[%c0_154, %c0_155], %314 {strides = array<i32>} : memref<8x128xf32, #tpu.memory_space<vmem>>, vector<8x128xf32>,
    return
  }
  func.func @transform_0(%arg0: i32) -> (i32, i32) {
    %c0_i32 = arith.constant 0 : i32
    %c0_i32_0 = arith.constant 0 : i32
    return %arg0, %c0_i32 : i32, i32
  }
  func.func @transform_1(%arg0: i32) -> (i32, i32) {
    %c0_i32 = arith.constant 0 : i32
    %c0_i32_0 = arith.constant 0 : i32
    return %arg0, %c0_i32 : i32, i32
  }
  func.func @transform_2(%arg0: i32) -> (i32, i32) {
    %c0_i32 = arith.constant 0 : i32
    %c0_i32_0 = arith.constant 0 : i32
    return %arg0, %c0_i32 : i32, i32
  }
  func.func @transform_3(%arg0: i32) -> (i32, i32) {
    %c0_i32 = arith.constant 0 : i32
    %c0_i32_0 = arith.constant 0 : i32
    return %arg0, %c0_i32 : i32, i32
  }
  func.func @transform_4(%arg0: i32) -> (i32, i32) {
    %c0_i32 = arith.constant 0 : i32
    %c0_i32_0 = arith.constant 0 : i32
    return %arg0, %c0_i32 : i32, i32
  }
  func.func @transform_5(%arg0: i32) -> (i32, i32, i32) {
    %c0_i32 = arith.constant 0 : i32
    %c0_i32_0 = arith.constant 0 : i32
    %c0_i32_1 = arith.constant 0 : i32
    %c0_i32_2 = arith.constant 0 : i32
    return %c0_i32, %c0_i32_0, %c0_i32_1 : i32, i32, i32
  }
  func.func @transform_6(%arg0: i32) -> (i32, i32, i32) {
    %c0_i32 = arith.constant 0 : i32
    %c0_i32_0 = arith.constant 0 : i32
    %c0_i32_1 = arith.constant 0 : i32
    %c0_i32_2 = arith.constant 0 : i32
    return %c0_i32, %c0_i32_0, %c0_i32_1 : i32, i32, i32
  }
  func.func @transform_7(%arg0: i32) -> (i32, i32, i32) {
    %c0_i32 = arith.constant 0 : i32
    %c0_i32_0 = arith.constant 0 : i32
    %c0_i32_1 = arith.constant 0 : i32
    %c0_i32_2 = arith.constant 0 : i32
    return %c0_i32, %c0_i32_0, %c0_i32_1 : i32, i32, i32
  }
  func.func @transform_8(%arg0: i32) -> (i32, i32, i32) {
    %c0_i32 = arith.constant 0 : i32
    %c0_i32_0 = arith.constant 0 : i32
    %c0_i32_1 = arith.constant 0 : i32
    %c0_i32_2 = arith.constant 0 : i32
    return %c0_i32, %c0_i32_0, %c0_i32_1 : i32, i32, i32
  }
  func.func @transform_9(%arg0: i32) -> (i32, i32, i32) {
    %c0_i32 = arith.constant 0 : i32
    %c0_i32_0 = arith.constant 0 : i32
    %c0_i32_1 = arith.constant 0 : i32
    %c0_i32_2 = arith.constant 0 : i32
    return %c0_i32, %c0_i32_0, %c0_i32_1 : i32, i32, i32
  }
  func.func @transform_10(%arg0: i32) -> (i32, i32, i32) {
    %c0_i32 = arith.constant 0 : i32
    %c0_i32_0 = arith.constant 0 : i32
    %c0_i32_1 = arith.constant 0 : i32
    %c0_i32_2 = arith.constant 0 : i32
    return %c0_i32, %c0_i32_0, %c0_i32_1 : i32, i32, i32
  }
  func.func @transform_11(%arg0: i32) -> (i32, i32, i32) {
    %c0_i32 = arith.constant 0 : i32
    %c0_i32_0 = arith.constant 0 : i32
    %c0_i32_1 = arith.constant 0 : i32
    %c0_i32_2 = arith.constant 0 : i32
    return %c0_i32, %c0_i32_0, %c0_i32_1 : i32, i32, i32
  }
  func.func @transform_12(%arg0: i32) -> (i32, i32) {
    %c0_i32 = arith.constant 0 : i32
    %c0_i32_0 = arith.constant 0 : i32
    %c0_i32_1 = arith.constant 0 : i32
    return %c0_i32, %c0_i32_0 : i32, i32
  }
  func.func @transform_13(%arg0: i32) -> (i32, i32) {
    %c0_i32 = arith.constant 0 : i32
    %c0_i32_0 = arith.constant 0 : i32
    %c0_i32_1 = arith.constant 0 : i32
    return %c0_i32, %c0_i32_0 : i32, i32
  }
  func.func @transform_14(%arg0: i32) -> (i32, i32) {
    %c0_i32 = arith.constant 0 : i32
    %c0_i32_0 = arith.constant 0 : i32
    return %arg0, %c0_i32 : i32, i32
  }
}

</mosaic_0001>

<llo_original>
// kernel: _forward_impl.1
$region0: #{_forward_impl.1}
  #allocation0 [shape = 'u32[]', space=smem, size = 0x4, offset = 0x4, fixed_abs, tag = 'smem constant byte address 0x4 - core index']
  #allocation1 [shape = 'u32[72,128]{1,0:T(1,128)}', space=vmem, size = 0x9000, scoped, tag = 'internal scratch']
  #allocation2 [shape = 'bf16[64,128]{1,0:T(8,128)(2,1)}', space=vmem, size = 0x4000, scoped, tag = 'scratch operand']
  #allocation3 [shape = 'bf16[64,128]{1,0:T(8,128)(2,1)}', space=vmem, size = 0x4000, scoped, tag = 'scratch operand']
  #allocation4 [shape = 'f32[64,128]{1,0:T(8,128)}', space=vmem, size = 0x8000, scoped, tag = 'scratch operand']
  %s0 = inlined_call_operand.vmem [shape: s32[64,4], index: 0, kind: input, shape index: {}]
  %s1 = inlined_call_operand.vmem [shape: f32[64,4], index: 1, kind: input, shape index: {}]
  %s2 = inlined_call_operand.vmem [shape: f32[64,4], index: 2, kind: input, shape index: {}]
  %s3 = inlined_call_operand.vmem [shape: bf16[8,64], index: 3, kind: input, shape index: {}]
  %s4 = inlined_call_operand.vmem [shape: bf16[64,128], index: 4, kind: input, shape index: {}]
  %s5 = inlined_call_operand.vmem [shape: bf16[2,128,256], index: 5, kind: input, shape index: {}]
  %s6 = inlined_call_operand.vmem [shape: f32[2,1,128], index: 6, kind: input, shape index: {}]
  %s7 = inlined_call_operand.vmem [shape: f32[2,1,128], index: 7, kind: input, shape index: {}]
  %s8 = inlined_call_operand.vmem [shape: bf16[2,256,128], index: 8, kind: input, shape index: {}]
  %s9 = inlined_call_operand.vmem [shape: f32[2,1,128], index: 9, kind: input, shape index: {}]
  %s10 = inlined_call_operand.vmem [shape: bf16[4,128,128], index: 10, kind: input, shape index: {}]
  %s11 = inlined_call_operand.vmem [shape: f32[4,1,128], index: 11, kind: input, shape index: {}]
  %s12 = inlined_call_operand.vmem [shape: bf16[128,128], index: 12, kind: input, shape index: {}]
  %s13 = inlined_call_operand.vmem [shape: f32[1,128], index: 13, kind: input, shape index: {}]
  %s14 = inlined_call_operand.hbm [shape: f32[8,128], index: 14, kind: output, shape index: {}]
  %s15 = sld [smem:[#allocation0]]
  $region66: #{_forward_impl.1} parent=0
    _
  %s17 = ssub.s32 1, %s15
  %s18 = scalar_select 0, %s17, %s15
  $region1: #{_forward_impl.1} parent=0
    #allocation5 [shape = 'u8[4096]{0}', space=vmem, size = 0x1000, scoped, tag = 'output window, operand 0, single buffered']
    #allocation6 [shape = 's32[1]{0}', space=sflag, size = 0x4, scoped, tag = 'scoped memory for _forward_impl.1']
    %19 = vsyncpa [#allocation6], 0
    // Predicated region
    $region2: #{_forward_impl.1} parent=1 // pred_check
      _
    $region3: #{_forward_impl.1} parent=1 // pred_check_branch
      %21 = sbr.rel (0) target = $region5
    $region4: #{_forward_impl.1} parent=1 // pred_region
      _
    $region5: #{_forward_impl.1} parent=1 // pred_fallthru
      _
    // Predicated region
    $region6: #{_forward_impl.1} parent=1 // pred_check
      _
    $region7: #{_forward_impl.1} parent=1 // pred_check_branch
      %23 = sbr.rel (0) target = $region9
    $region8: #{_forward_impl.1} parent=1 // pred_region
      _
    $region9: #{_forward_impl.1} parent=1 // pred_fallthru
      _
    // Predicated region
    $region10: #{_forward_impl.1} parent=1 // pred_check
      _
    $region11: #{_forward_impl.1} parent=1 // pred_check_branch
      %25 = sbr.rel (0) target = $region13
    $region12: #{_forward_impl.1} parent=1 // pred_region
      _
    $region13: #{_forward_impl.1} parent=1 // pred_fallthru
      _
    // Predicated region
    $region14: #{_forward_impl.1} parent=1 // pred_check
      _
    $region15: #{_forward_impl.1} parent=1 // pred_check_branch
      %27 = sbr.rel (0) target = $region17
    $region16: #{_forward_impl.1} parent=1 // pred_region
      _
    $region17: #{_forward_impl.1} parent=1 // pred_fallthru
      _
    // Predicated region
    $region18: #{_forward_impl.1} parent=1 // pred_check
      _
    $region19: #{_forward_impl.1} parent=1 // pred_check_branch
      %29 = sbr.rel (0) target = $region21
    $region20: #{_forward_impl.1} parent=1 // pred_region
      _
    $region21: #{_forward_impl.1} parent=1 // pred_fallthru
      _
    // Predicated region
    $region22: #{_forward_impl.1} parent=1 // pred_check
      _
    $region23: #{_forward_impl.1} parent=1 // pred_check_branch
      %31 = sbr.rel (0) target = $region25
    $region24: #{_forward_impl.1} parent=1 // pred_region
      _
    $region25: #{_forward_impl.1} parent=1 // pred_fallthru
      _
    // Predicated region
    $region26: #{_forward_impl.1} parent=1 // pred_check
      _
    $region27: #{_forward_impl.1} parent=1 // pred_check_branch
      %33 = sbr.rel (0) target = $region29
    $region28: #{_forward_impl.1} parent=1 // pred_region
      _
    $region29: #{_forward_impl.1} parent=1 // pred_fallthru
      _
    // Predicated region
    $region30: #{_forward_impl.1} parent=1 // pred_check
      _
    $region31: #{_forward_impl.1} parent=1 // pred_check_branch
      %35 = sbr.rel (0) target = $region33
    $region32: #{_forward_impl.1} parent=1 // pred_region
      _
    $region33: #{_forward_impl.1} parent=1 // pred_fallthru
      _
    // Predicated region
    $region34: #{_forward_impl.1} parent=1 // pred_check
      _
    $region35: #{_forward_impl.1} parent=1 // pred_check_branch
      %37 = sbr.rel (0) target = $region37
    $region36: #{_forward_impl.1} parent=1 // pred_region
      _
    $region37: #{_forward_impl.1} parent=1 // pred_fallthru
      _
    // Predicated region
    $region38: #{_forward_impl.1} parent=1 // pred_check
      _
    $region39: #{_forward_impl.1} parent=1 // pred_check_branch
      %39 = sbr.rel (0) target = $region41
    $region40: #{_forward_impl.1} parent=1 // pred_region
      _
    $region41: #{_forward_impl.1} parent=1 // pred_fallthru
      _
    // Predicated region
    $region42: #{_forward_impl.1} parent=1 // pred_check
      _
    $region43: #{_forward_impl.1} parent=1 // pred_check_branch
      %41 = sbr.rel (0) target = $region45
    $region44: #{_forward_impl.1} parent=1 // pred_region
      _
    $region45: #{_forward_impl.1} parent=1 // pred_fallthru
      _
    // Predicated region
    $region46: #{_forward_impl.1} parent=1 // pred_check
      _
    $region47: #{_forward_impl.1} parent=1 // pred_check_branch
      %43 = sbr.rel (0) target = $region49
    $region48: #{_forward_impl.1} parent=1 // pred_region
      _
    $region49: #{_forward_impl.1} parent=1 // pred_fallthru
      _
    // Predicated region
    $region50: #{_forward_impl.1} parent=1 // pred_check
      _
    $region51: #{_forward_impl.1} parent=1 // pred_check_branch
      %45 = sbr.rel (0) target = $region53
    $region52: #{_forward_impl.1} parent=1 // pred_region
      _
    $region53: #{_forward_impl.1} parent=1 // pred_fallthru
      _
    // Predicated region
    $region54: #{_forward_impl.1} parent=1 // pred_check
      _
    $region55: #{_forward_impl.1} parent=1 // pred_check_branch
      %47 = sbr.rel (0) target = $region57
    $region56: #{_forward_impl.1} parent=1 // pred_region
      _
    $region57: #{_forward_impl.1} parent=1 // pred_fallthru
      _
    %v49 = vld [vmem:[%s4] sm:$0xf]
    %v50 = vld [vmem:[%s4 + $0x4] sm:$0xf]
    %v51 = vld [vmem:[%s4 + $0x8] sm:$0xf]
    %v52 = vld [vmem:[%s4 + $0xc] sm:$0xf]
    %v53 = vld [vmem:[%s4 + $0x10] sm:$0xf]
    %v54 = vld [vmem:[%s4 + $0x14] sm:$0xf]
    %v55 = vld [vmem:[%s4 + $0x18] sm:$0xf]
    %v56 = vld [vmem:[%s4 + $0x1c] sm:$0xf]
    %57 = vst [vmem:[#allocation2] sm:$0xf] %v49
    %58 = vst [vmem:[#allocation2 + $0x4] sm:$0xf] %v50
    %59 = vst [vmem:[#allocation2 + $0x8] sm:$0xf] %v51
    %60 = vst [vmem:[#allocation2 + $0xc] sm:$0xf] %v52
    %61 = vst [vmem:[#allocation2 + $0x10] sm:$0xf] %v53
    %62 = vst [vmem:[#allocation2 + $0x14] sm:$0xf] %v54
    %63 = vst [vmem:[#allocation2 + $0x18] sm:$0xf] %v55
    %64 = vst [vmem:[#allocation2 + $0x1c] sm:$0xf] %v56
    %v65 = vld [vmem:[#allocation2] sm:$0xf]
    %v66 = vld [vmem:[#allocation2 + $0x4] sm:$0xf]
    %v67 = vld [vmem:[#allocation2 + $0x8] sm:$0xf]
    %v68 = vld [vmem:[#allocation2 + $0xc] sm:$0xf]
    %v69 = vld [vmem:[#allocation2 + $0x10] sm:$0xf]
    %v70 = vld [vmem:[#allocation2 + $0x14] sm:$0xf]
    %v71 = vld [vmem:[#allocation2 + $0x18] sm:$0xf]
    %v72 = vld [vmem:[#allocation2 + $0x1c] sm:$0xf]
    %v73 = vld [vmem:[%s5] sm:$0xff]
    %v74 = vld [vmem:[%s5 + $0x8] sm:$0xff]
    %v75 = vld [vmem:[%s5 + $0x10] sm:$0xff]
    %v76 = vld [vmem:[%s5 + $0x18] sm:$0xff]
    %v77 = vld [vmem:[%s5 + $0x20] sm:$0xff]
    %v78 = vld [vmem:[%s5 + $0x28] sm:$0xff]
    %v79 = vld [vmem:[%s5 + $0x30] sm:$0xff]
    %v80 = vld [vmem:[%s5 + $0x38] sm:$0xff]
    %v81 = vld [vmem:[%s5 + $0x40] sm:$0xff]
    %v82 = vld [vmem:[%s5 + $0x48] sm:$0xff]
    %v83 = vld [vmem:[%s5 + $0x50] sm:$0xff]
    %v84 = vld [vmem:[%s5 + $0x58] sm:$0xff]
    %v85 = vld [vmem:[%s5 + $0x60] sm:$0xff]
    %v86 = vld [vmem:[%s5 + $0x68] sm:$0xff]
    %v87 = vld [vmem:[%s5 + $0x70] sm:$0xff]
    %v88 = vld [vmem:[%s5 + $0x78] sm:$0xff]
    %v97 = vunpack.c.l.b16 %v65
    %v98 = vunpack.c.l.b16 %v66
    %v99 = vunpack.c.l.b16 %v67
    %v100 = vunpack.c.l.b16 %v68
    %v101 = vunpack.c.l.b16 %v69
    %v102 = vunpack.c.l.b16 %v70
    %v103 = vunpack.c.l.b16 %v71
    %v104 = vunpack.c.l.b16 %v72
    %v105 = vpack.c.b16 %v98, %v97
    %v106 = vpack.c.b16 %v100, %v99
    %v107 = vpack.c.b16 %v102, %v101
    %v108 = vpack.c.b16 %v104, %v103
    %v129 = vunpack.c.l.b16 %v73
    %v130 = vunpack.c.h.b16 %v73
    %v131 = vunpack.c.l.b16 %v74
    %v132 = vunpack.c.h.b16 %v74
    %v133 = vunpack.c.l.b16 %v75
    %v134 = vunpack.c.h.b16 %v75
    %v135 = vunpack.c.l.b16 %v76
    %v136 = vunpack.c.h.b16 %v76
    %v137 = vunpack.c.l.b16 %v77
    %v138 = vunpack.c.h.b16 %v77
    %v139 = vunpack.c.l.b16 %v78
    %v140 = vunpack.c.h.b16 %v78
    %v141 = vunpack.c.l.b16 %v79
    %v142 = vunpack.c.h.b16 %v79
    %v143 = vunpack.c.l.b16 %v80
    %v144 = vunpack.c.h.b16 %v80
    %v145 = vunpack.c.l.b16 %v81
    %v146 = vunpack.c.h.b16 %v81
    %v147 = vunpack.c.l.b16 %v82
    %v148 = vunpack.c.h.b16 %v82
    %v149 = vunpack.c.l.b16 %v83
    %v150 = vunpack.c.h.b16 %v83
    %v151 = vunpack.c.l.b16 %v84
    %v152 = vunpack.c.h.b16 %v84
    %v153 = vunpack.c.l.b16 %v85
    %v154 = vunpack.c.h.b16 %v85
    %v155 = vunpack.c.l.b16 %v86
    %v156 = vunpack.c.h.b16 %v86
    %v157 = vunpack.c.l.b16 %v87
    %v158 = vunpack.c.h.b16 %v87
    %v159 = vunpack.c.l.b16 %v88
    %v160 = vunpack.c.h.b16 %v88
    %v161 = vpack.c.b16 %v131, %v129
    %v162 = vpack.c.b16 %v132, %v130
    %v163 = vpack.c.b16 %v135, %v133
    %v164 = vpack.c.b16 %v136, %v134
    %v165 = vpack.c.b16 %v139, %v137
    %v166 = vpack.c.b16 %v140, %v138
    %v167 = vpack.c.b16 %v143, %v141
    %v168 = vpack.c.b16 %v144, %v142
    %v169 = vpack.c.b16 %v147, %v145
    %v170 = vpack.c.b16 %v148, %v146
    %v171 = vpack.c.b16 %v151, %v149
    %v172 = vpack.c.b16 %v152, %v150
    %v173 = vpack.c.b16 %v155, %v153
    %v174 = vpack.c.b16 %v156, %v154
    %v175 = vpack.c.b16 %v159, %v157
    %v176 = vpack.c.b16 %v160, %v158
    %193 = vmatpush.bf16.msra.mxu0 %v175
    %194 = vmatpush.bf16.msra.mxu0 %v173
    %195 = vmatpush.bf16.msra.mxu0 %v171
    %196 = vmatpush.bf16.msra.mxu0 %v169
    %197 = vmatpush.bf16.msra.mxu0 %v167
    %198 = vmatpush.bf16.msra.mxu0 %v165
    %199 = vmatpush.bf16.msra.mxu0 %v163
    %200 = vmatpush.bf16.msra.mxu0 %v161
    %201 = vmatmul.bf16.gmra.mxu0 %v105
    %v202 = vpop.f32.mrf.mxu0
    %v203 = vadd.f32 0.0, %v202
    %v204 = vpop.f32.mrf.mxu0
    %v205 = vadd.f32 0.0, %v204
    %206 = vmatmul.bf16.gmra.mxu0 %v106
    %v207 = vpop.f32.mrf.mxu0
    %v208 = vadd.f32 0.0, %v207
    %v209 = vpop.f32.mrf.mxu0
    %v210 = vadd.f32 0.0, %v209
    %211 = vmatmul.bf16.gmra.mxu0 %v107
    %v212 = vpop.f32.mrf.mxu0
    %v213 = vadd.f32 0.0, %v212
    %v214 = vpop.f32.mrf.mxu0
    %v215 = vadd.f32 0.0, %v214
    %216 = vmatmul.bf16.gmra.mxu0 %v108
    %v217 = vpop.f32.mrf.mxu0
    %v218 = vadd.f32 0.0, %v217
    %v219 = vpop.f32.mrf.mxu0
    %v220 = vadd.f32 0.0, %v219
    %221 = vdwg.mxu0
    %222 = vmatpush.bf16.msra.mxu0 %v176
    %223 = vmatpush.bf16.msra.mxu0 %v174
    %224 = vmatpush.bf16.msra.mxu0 %v172
    %225 = vmatpush.bf16.msra.mxu0 %v170
    %226 = vmatpush.bf16.msra.mxu0 %v168
    %227 = vmatpush.bf16.msra.mxu0 %v166
    %228 = vmatpush.bf16.msra.mxu0 %v164
    %229 = vmatpush.bf16.msra.mxu0 %v162
    %230 = vmatmul.bf16.gmra.mxu0 %v105
    %v231 = vpop.f32.mrf.mxu0
    %v232 = vadd.f32 0.0, %v231
    %v233 = vpop.f32.mrf.mxu0
    %v234 = vadd.f32 0.0, %v233
    %235 = vmatmul.bf16.gmra.mxu0 %v106
    %v236 = vpop.f32.mrf.mxu0
    %v237 = vadd.f32 0.0, %v236
    %v238 = vpop.f32.mrf.mxu0
    %v239 = vadd.f32 0.0, %v238
    %240 = vmatmul.bf16.gmra.mxu0 %v107
    %v241 = vpop.f32.mrf.mxu0
    %v242 = vadd.f32 0.0, %v241
    %v243 = vpop.f32.mrf.mxu0
    %v244 = vadd.f32 0.0, %v243
    %245 = vmatmul.bf16.gmra.mxu0 %v108
    %v246 = vpop.f32.mrf.mxu0
    %v247 = vadd.f32 0.0, %v246
    %v248 = vpop.f32.mrf.mxu0
    %v249 = vadd.f32 0.0, %v248
    %250 = vdwg.mxu0
    %v251 = vpack.c.bf16 %v232, %v232
    %v252 = vpack.c.bf16 %v234, %v234
    %v253 = vpack.c.bf16 %v237, %v237
    %v254 = vpack.c.bf16 %v239, %v239
    %v255 = vpack.c.bf16 %v242, %v242
    %v256 = vpack.c.bf16 %v244, %v244
    %v257 = vpack.c.bf16 %v247, %v247
    %v258 = vpack.c.bf16 %v249, %v249
    %259 = vst [vmem:[#allocation3] sm:$0xf] %v251
    %260 = vst [vmem:[#allocation3 + $0x4] sm:$0xf] %v252
    %261 = vst [vmem:[#allocation3 + $0x8] sm:$0xf] %v253
    %262 = vst [vmem:[#allocation3 + $0xc] sm:$0xf] %v254
    %263 = vst [vmem:[#allocation3 + $0x10] sm:$0xf] %v255
    %264 = vst [vmem:[#allocation3 + $0x14] sm:$0xf] %v256
    %265 = vst [vmem:[#allocation3 + $0x18] sm:$0xf] %v257
    %266 = vst [vmem:[#allocation3 + $0x1c] sm:$0xf] %v258
    %v267 = vld [vmem:[%s7] sm:$0x1]
    %v269 = vperm.slane %v267, 0
    %v271 = vadd.f32 %v203, %v269
    %v272 = vadd.f32 %v205, %v269
    %v273 = vadd.f32 %v208, %v269
    %v274 = vadd.f32 %v210, %v269
    %v275 = vadd.f32 %v213, %v269
    %v276 = vadd.f32 %v215, %v269
    %v277 = vadd.f32 %v218, %v269
    %v278 = vadd.f32 %v220, %v269
    %279 = vst [vmem:[#allocation4] sm:$0xff] %v271
    %280 = vst [vmem:[#allocation4 + $0x8] sm:$0xff] %v272
    %281 = vst [vmem:[#allocation4 + $0x10] sm:$0xff] %v273
    %282 = vst [vmem:[#allocation4 + $0x18] sm:$0xff] %v274
    %283 = vst [vmem:[#allocation4 + $0x20] sm:$0xff] %v275
    %284 = vst [vmem:[#allocation4 + $0x28] sm:$0xff] %v276
    %285 = vst [vmem:[#allocation4 + $0x30] sm:$0xff] %v277
    %286 = vst [vmem:[#allocation4 + $0x38] sm:$0xff] %v278
    %v287 = vld [vmem:[#allocation4] sm:$0xff]
    %v288 = vld [vmem:[#allocation4 + $0x8] sm:$0xff]
    %v289 = vld [vmem:[#allocation4 + $0x10] sm:$0xff]
    %v290 = vld [vmem:[#allocation4 + $0x18] sm:$0xff]
    %v291 = vld [vmem:[#allocation4 + $0x20] sm:$0xff]
    %v292 = vld [vmem:[#allocation4 + $0x28] sm:$0xff]
    %v293 = vld [vmem:[#allocation4 + $0x30] sm:$0xff]
    %v294 = vld [vmem:[#allocation4 + $0x38] sm:$0xff]
    %v295 = vld [vmem:[%s0] sm:$0xff]
    %v296 = vld [vmem:[%s0 + $0x8] sm:$0xff]
    %v297 = vld [vmem:[%s0 + $0x10] sm:$0xff]
    %v298 = vld [vmem:[%s0 + $0x18] sm:$0xff]
    %v299 = vld [vmem:[%s0 + $0x20] sm:$0xff]
    %v300 = vld [vmem:[%s0 + $0x28] sm:$0xff]
    %v301 = vld [vmem:[%s0 + $0x30] sm:$0xff]
    %v302 = vld [vmem:[%s0 + $0x38] sm:$0xff]
    %v303 = vld [vmem:[%s1] sm:$0xff]
    %v304 = vld [vmem:[%s1 + $0x8] sm:$0xff]
    %v305 = vld [vmem:[%s1 + $0x10] sm:$0xff]
    %v306 = vld [vmem:[%s1 + $0x18] sm:$0xff]
    %v307 = vld [vmem:[%s1 + $0x20] sm:$0xff]
    %v308 = vld [vmem:[%s1 + $0x28] sm:$0xff]
    %v309 = vld [vmem:[%s1 + $0x30] sm:$0xff]
    %v310 = vld [vmem:[%s1 + $0x38] sm:$0xff]
    %v311 = vld [vmem:[%s2] sm:$0xff]
    %v312 = vld [vmem:[%s2 + $0x8] sm:$0xff]
    %v313 = vld [vmem:[%s2 + $0x10] sm:$0xff]
    %v314 = vld [vmem:[%s2 + $0x18] sm:$0xff]
    %v315 = vld [vmem:[%s2 + $0x20] sm:$0xff]
    %v316 = vld [vmem:[%s2 + $0x28] sm:$0xff]
    %v317 = vld [vmem:[%s2 + $0x30] sm:$0xff]
    %v318 = vld [vmem:[%s2 + $0x38] sm:$0xff]
    %v319 = vld [vmem:[%s6] sm:$0x1]
    %v320 = vlaneseq
    %v321 = vand.u32 %v320, 127
    %322 = vset.pattern.permute.xlu0 0
    %323 = vperm.xlu0 %322, %v295
    %v324 = vpop.permute.xlu0 %323
    %325 = vset.pattern.permute.xlu0 0
    %326 = vperm.xlu0 %325, %v296
    %v327 = vpop.permute.xlu0 %326
    %328 = vset.pattern.permute.xlu0 0
    %329 = vperm.xlu0 %328, %v297
    %v330 = vpop.permute.xlu0 %329
    %331 = vset.pattern.permute.xlu0 0
    %332 = vperm.xlu0 %331, %v298
    %v333 = vpop.permute.xlu0 %332
    %334 = vset.pattern.permute.xlu0 0
    %335 = vperm.xlu0 %334, %v299
    %v336 = vpop.permute.xlu0 %335
    %337 = vset.pattern.permute.xlu0 0
    %338 = vperm.xlu0 %337, %v300
    %v339 = vpop.permute.xlu0 %338
    %340 = vset.pattern.permute.xlu0 0
    %341 = vperm.xlu0 %340, %v301
    %v342 = vpop.permute.xlu0 %341
    %343 = vset.pattern.permute.xlu0 0
    %344 = vperm.xlu0 %343, %v302
    %v345 = vpop.permute.xlu0 %344
    %vm346 = vcmp.eq.s32.totalorder %v321, %v324
    %vm347 = vcmp.eq.s32.totalorder %v321, %v327
    %vm348 = vcmp.eq.s32.totalorder %v321, %v330
    %vm349 = vcmp.eq.s32.totalorder %v321, %v333
    %vm350 = vcmp.eq.s32.totalorder %v321, %v336
    %vm351 = vcmp.eq.s32.totalorder %v321, %v339
    %vm352 = vcmp.eq.s32.totalorder %v321, %v342
    %vm353 = vcmp.eq.s32.totalorder %v321, %v345
    %v354 = vsel %vm346, 1.0, 0.0
    %v355 = vsel %vm347, 1.0, 0.0
    %v356 = vsel %vm348, 1.0, 0.0
    %v357 = vsel %vm349, 1.0, 0.0
    %v358 = vsel %vm350, 1.0, 0.0
    %v359 = vsel %vm351, 1.0, 0.0
    %v360 = vsel %vm352, 1.0, 0.0
    %v361 = vsel %vm353, 1.0, 0.0
    %v362 = vpack.c.bf16 %v355, %v354
    %v363 = vpack.c.bf16 %v357, %v356
    %v364 = vpack.c.bf16 %v359, %v358
    %v365 = vpack.c.bf16 %v361, %v360
    %v366 = vld [vmem:[#allocation3] sm:$0xf]
    %v367 = vld [vmem:[#allocation3 + $0x4] sm:$0xf]
    %v368 = vld [vmem:[#allocation3 + $0x8] sm:$0xf]
    %v369 = vld [vmem:[#allocation3 + $0xc] sm:$0xf]
    %v370 = vld [vmem:[#allocation3 + $0x10] sm:$0xf]
    %v371 = vld [vmem:[#allocation3 + $0x14] sm:$0xf]
    %v372 = vld [vmem:[#allocation3 + $0x18] sm:$0xf]
    %v373 = vld [vmem:[#allocation3 + $0x1c] sm:$0xf]
    %v382 = vunpack.c.l.b16 %v366
    %v383 = vunpack.c.l.b16 %v367
    %v384 = vunpack.c.l.b16 %v368
    %v385 = vunpack.c.l.b16 %v369
    %v386 = vunpack.c.l.b16 %v370
    %v387 = vunpack.c.l.b16 %v371
    %v388 = vunpack.c.l.b16 %v372
    %v389 = vunpack.c.l.b16 %v373
    %v390 = vpack.c.b16 %v383, %v382
    %v391 = vpack.c.b16 %v385, %v384
    %v392 = vpack.c.b16 %v387, %v386
    %v393 = vpack.c.b16 %v389, %v388
    %vm398 = vcmask 523264
    %v400 = vsel %vm398, %v362, 0
    %v403 = vsel %vm398, %v363, 0
    %v406 = vsel %vm398, %v364, 0
    %v409 = vsel %vm398, %v365, 0
    %411 = vmatpush.bf16.msra.mxu0 0
    %412 = vmatpush.bf16.msra.mxu0 0
    %413 = vmatpush.bf16.msra.mxu0 0
    %414 = vmatpush.bf16.msra.mxu0 0
    %415 = vmatpush.bf16.msra.mxu0 %v393
    %416 = vmatpush.bf16.msra.mxu0 %v392
    %417 = vmatpush.bf16.msra.mxu0 %v391
    %418 = vmatpush.bf16.msra.mxu0 %v390
    %419 = vmatmul.bf16.gmra.mxu0 %v400
    %v420 = vpop.f32.mrf.mxu0
    %v421 = vadd.f32 0.0, %v420
    %v422 = vpop.f32.mrf.mxu0
    %v423 = vadd.f32 0.0, %v422
    %424 = vmatmul.bf16.gmra.mxu0 %v403
    %v425 = vpop.f32.mrf.mxu0
    %v426 = vadd.f32 0.0, %v425
    %v427 = vpop.f32.mrf.mxu0
    %v428 = vadd.f32 0.0, %v427
    %429 = vmatmul.bf16.gmra.mxu0 %v406
    %v430 = vpop.f32.mrf.mxu0
    %v431 = vadd.f32 0.0, %v430
    %v432 = vpop.f32.mrf.mxu0
    %v433 = vadd.f32 0.0, %v432
    %434 = vmatmul.bf16.gmra.mxu0 %v409
    %v435 = vpop.f32.mrf.mxu0
    %v436 = vadd.f32 0.0, %v435
    %v437 = vpop.f32.mrf.mxu0
    %v438 = vadd.f32 0.0, %v437
    %439 = vdwg.mxu0
    %v440 = vadd.f32 %v287, %v421
    %v441 = vadd.f32 %v288, %v423
    %v442 = vadd.f32 %v289, %v426
    %v443 = vadd.f32 %v290, %v428
    %v444 = vadd.f32 %v291, %v431
    %v445 = vadd.f32 %v292, %v433
    %v446 = vadd.f32 %v293, %v436
    %v447 = vadd.f32 %v294, %v438
    %449 = vset.pattern.permute.xlu0 0
    %450 = vperm.xlu0 %449, %v303
    %v451 = vpop.permute.xlu0 %450
    %454 = vset.pattern.permute.xlu0 0
    %455 = vperm.xlu0 %454, %v304
    %v456 = vpop.permute.xlu0 %455
    %459 = vset.pattern.permute.xlu0 0
    %460 = vperm.xlu0 %459, %v305
    %v461 = vpop.permute.xlu0 %460
    %464 = vset.pattern.permute.xlu0 0
    %465 = vperm.xlu0 %464, %v306
    %v466 = vpop.permute.xlu0 %465
    %469 = vset.pattern.permute.xlu0 0
    %470 = vperm.xlu0 %469, %v307
    %v471 = vpop.permute.xlu0 %470
    %474 = vset.pattern.permute.xlu0 0
    %475 = vperm.xlu0 %474, %v308
    %v476 = vpop.permute.xlu0 %475
    %479 = vset.pattern.permute.xlu0 0
    %480 = vperm.xlu0 %479, %v309
    %v481 = vpop.permute.xlu0 %480
    %484 = vset.pattern.permute.xlu0 0
    %485 = vperm.xlu0 %484, %v310
    %v486 = vpop.permute.xlu0 %485
    %v489 = vperm.slane %v319, 0
    %v491 = vmul.f32 %v451, %v489
    %v492 = vmul.f32 %v456, %v489
    %v493 = vmul.f32 %v461, %v489
    %v494 = vmul.f32 %v466, %v489
    %v495 = vmul.f32 %v471, %v489
    %v496 = vmul.f32 %v476, %v489
    %v497 = vmul.f32 %v481, %v489
    %v498 = vmul.f32 %v486, %v489
    %v499 = vadd.f32 %v440, %v491
    %v500 = vadd.f32 %v441, %v492
    %v501 = vadd.f32 %v442, %v493
    %v502 = vadd.f32 %v443, %v494
    %v503 = vadd.f32 %v444, %v495
    %v504 = vadd.f32 %v445, %v496
    %v505 = vadd.f32 %v446, %v497
    %v506 = vadd.f32 %v447, %v498
    %v507 = vmax.f32 %v499, 0.0
    %v508 = vmax.f32 %v500, 0.0
    %v509 = vmax.f32 %v501, 0.0
    %v510 = vmax.f32 %v502, 0.0
    %v511 = vmax.f32 %v503, 0.0
    %v512 = vmax.f32 %v504, 0.0
    %v513 = vmax.f32 %v505, 0.0
    %v514 = vmax.f32 %v506, 0.0
    %516 = vset.pattern.permute.xlu0 0
    %517 = vperm.xlu0 %516, %v311
    %v518 = vpop.permute.xlu0 %517
    %521 = vset.pattern.permute.xlu0 0
    %522 = vperm.xlu0 %521, %v312
    %v523 = vpop.permute.xlu0 %522
    %526 = vset.pattern.permute.xlu0 0
    %527 = vperm.xlu0 %526, %v313
    %v528 = vpop.permute.xlu0 %527
    %531 = vset.pattern.permute.xlu0 0
    %532 = vperm.xlu0 %531, %v314
    %v533 = vpop.permute.xlu0 %532
    %536 = vset.pattern.permute.xlu0 0
    %537 = vperm.xlu0 %536, %v315
    %v538 = vpop.permute.xlu0 %537
    %541 = vset.pattern.permute.xlu0 0
    %542 = vperm.xlu0 %541, %v316
    %v543 = vpop.permute.xlu0 %542
    %546 = vset.pattern.permute.xlu0 0
    %547 = vperm.xlu0 %546, %v317
    %v548 = vpop.permute.xlu0 %547
    %551 = vset.pattern.permute.xlu0 0
    %552 = vperm.xlu0 %551, %v318
    %v553 = vpop.permute.xlu0 %552
    %v555 = vmul.f32 %v507, %v518
    %v556 = vmul.f32 %v508, %v523
    %v557 = vmul.f32 %v509, %v528
    %v558 = vmul.f32 %v510, %v533
    %v559 = vmul.f32 %v511, %v538
    %v560 = vmul.f32 %v512, %v543
    %v561 = vmul.f32 %v513, %v548
    %v562 = vmul.f32 %v514, %v553
    %v563 = vadd.f32 %v555, 0.0
    %v564 = vadd.f32 %v556, 0.0
    %v565 = vadd.f32 %v557, 0.0
    %v566 = vadd.f32 %v558, 0.0
    %v567 = vadd.f32 %v559, 0.0
    %v568 = vadd.f32 %v560, 0.0
    %v569 = vadd.f32 %v561, 0.0
    %v570 = vadd.f32 %v562, 0.0
    %571 = vset.pattern.permute.xlu0 1
    %572 = vperm.xlu0 %571, %v295
    %v573 = vpop.permute.xlu0 %572
    %574 = vset.pattern.permute.xlu0 1
    %575 = vperm.xlu0 %574, %v296
    %v576 = vpop.permute.xlu0 %575
    %577 = vset.pattern.permute.xlu0 1
    %578 = vperm.xlu0 %577, %v297
    %v579 = vpop.permute.xlu0 %578
    %580 = vset.pattern.permute.xlu0 1
    %581 = vperm.xlu0 %580, %v298
    %v582 = vpop.permute.xlu0 %581
    %583 = vset.pattern.permute.xlu0 1
    %584 = vperm.xlu0 %583, %v299
    %v585 = vpop.permute.xlu0 %584
    %586 = vset.pattern.permute.xlu0 1
    %587 = vperm.xlu0 %586, %v300
    %v588 = vpop.permute.xlu0 %587
    %589 = vset.pattern.permute.xlu0 1
    %590 = vperm.xlu0 %589, %v301
    %v591 = vpop.permute.xlu0 %590
    %592 = vset.pattern.permute.xlu0 1
    %593 = vperm.xlu0 %592, %v302
    %v594 = vpop.permute.xlu0 %593
    %vm595 = vcmp.eq.s32.totalorder %v321, %v573
    %vm596 = vcmp.eq.s32.totalorder %v321, %v576
    %vm597 = vcmp.eq.s32.totalorder %v321, %v579
    %vm598 = vcmp.eq.s32.totalorder %v321, %v582
    %vm599 = vcmp.eq.s32.totalorder %v321, %v585
    %vm600 = vcmp.eq.s32.totalorder %v321, %v588
    %vm601 = vcmp.eq.s32.totalorder %v321, %v591
    %vm602 = vcmp.eq.s32.totalorder %v321, %v594
    %v603 = vsel %vm595, 1.0, 0.0
    %v604 = vsel %vm596, 1.0, 0.0
    %v605 = vsel %vm597, 1.0, 0.0
    %v606 = vsel %vm598, 1.0, 0.0
    %v607 = vsel %vm599, 1.0, 0.0
    %v608 = vsel %vm600, 1.0, 0.0
    %v609 = vsel %vm601, 1.0, 0.0
    %v610 = vsel %vm602, 1.0, 0.0
    %v611 = vpack.c.bf16 %v604, %v603
    %v612 = vpack.c.bf16 %v606, %v605
    %v613 = vpack.c.bf16 %v608, %v607
    %v614 = vpack.c.bf16 %v610, %v609
    %v616 = vsel %vm398, %v611, 0
    %v619 = vsel %vm398, %v612, 0
    %v622 = vsel %vm398, %v613, 0
    %v625 = vsel %vm398, %v614, 0
    %627 = vmatpush.bf16.msra.mxu0 0
    %628 = vmatpush.bf16.msra.mxu0 0
    %629 = vmatpush.bf16.msra.mxu0 0
    %630 = vmatpush.bf16.msra.mxu0 0
    %631 = vmatpush.bf16.msra.mxu0 %v393
    %632 = vmatpush.bf16.msra.mxu0 %v392
    %633 = vmatpush.bf16.msra.mxu0 %v391
    %634 = vmatpush.bf16.msra.mxu0 %v390
    %635 = vmatmul.bf16.gmra.mxu0 %v616
    %v636 = vpop.f32.mrf.mxu0
    %v637 = vadd.f32 0.0, %v636
    %v638 = vpop.f32.mrf.mxu0
    %v639 = vadd.f32 0.0, %v638
    %640 = vmatmul.bf16.gmra.mxu0 %v619
    %v641 = vpop.f32.mrf.mxu0
    %v642 = vadd.f32 0.0, %v641
    %v643 = vpop.f32.mrf.mxu0
    %v644 = vadd.f32 0.0, %v643
    %645 = vmatmul.bf16.gmra.mxu0 %v622
    %v646 = vpop.f32.mrf.mxu0
    %v647 = vadd.f32 0.0, %v646
    %v648 = vpop.f32.mrf.mxu0
    %v649 = vadd.f32 0.0, %v648
    %650 = vmatmul.bf16.gmra.mxu0 %v625
    %v651 = vpop.f32.mrf.mxu0
    %v652 = vadd.f32 0.0, %v651
    %v653 = vpop.f32.mrf.mxu0
    %v654 = vadd.f32 0.0, %v653
    %655 = vdwg.mxu0
    %v656 = vadd.f32 %v287, %v637
    %v657 = vadd.f32 %v288, %v639
    %v658 = vadd.f32 %v289, %v642
    %v659 = vadd.f32 %v290, %v644
    %v660 = vadd.f32 %v291, %v647
    %v661 = vadd.f32 %v292, %v649
    %v662 = vadd.f32 %v293, %v652
    %v663 = vadd.f32 %v294, %v654
    %664 = vset.pattern.permute.xlu0 1
    %665 = vperm.xlu0 %664, %v303
    %v666 = vpop.permute.xlu0 %665
    %668 = vset.pattern.permute.xlu0 1
    %669 = vperm.xlu0 %668, %v304
    %v670 = vpop.permute.xlu0 %669
    %672 = vset.pattern.permute.xlu0 1
    %673 = vperm.xlu0 %672, %v305
    %v674 = vpop.permute.xlu0 %673
    %676 = vset.pattern.permute.xlu0 1
    %677 = vperm.xlu0 %676, %v306
    %v678 = vpop.permute.xlu0 %677
    %680 = vset.pattern.permute.xlu0 1
    %681 = vperm.xlu0 %680, %v307
    %v682 = vpop.permute.xlu0 %681
    %684 = vset.pattern.permute.xlu0 1
    %685 = vperm.xlu0 %684, %v308
    %v686 = vpop.permute.xlu0 %685
    %688 = vset.pattern.permute.xlu0 1
    %689 = vperm.xlu0 %688, %v309
    %v690 = vpop.permute.xlu0 %689
    %692 = vset.pattern.permute.xlu0 1
    %693 = vperm.xlu0 %692, %v310
    %v694 = vpop.permute.xlu0 %693
    %v696 = vmul.f32 %v666, %v489
    %v697 = vmul.f32 %v670, %v489
    %v698 = vmul.f32 %v674, %v489
    %v699 = vmul.f32 %v678, %v489
    %v700 = vmul.f32 %v682, %v489
    %v701 = vmul.f32 %v686, %v489
    %v702 = vmul.f32 %v690, %v489
    %v703 = vmul.f32 %v694, %v489
    %v704 = vadd.f32 %v656, %v696
    %v705 = vadd.f32 %v657, %v697
    %v706 = vadd.f32 %v658, %v698
    %v707 = vadd.f32 %v659, %v699
    %v708 = vadd.f32 %v660, %v700
    %v709 = vadd.f32 %v661, %v701
    %v710 = vadd.f32 %v662, %v702
    %v711 = vadd.f32 %v663, %v703
    %v712 = vmax.f32 %v704, 0.0
    %v713 = vmax.f32 %v705, 0.0
    %v714 = vmax.f32 %v706, 0.0
    %v715 = vmax.f32 %v707, 0.0
    %v716 = vmax.f32 %v708, 0.0
    %v717 = vmax.f32 %v709, 0.0
    %v718 = vmax.f32 %v710, 0.0
    %v719 = vmax.f32 %v711, 0.0
    %720 = vset.pattern.permute.xlu0 1
    %721 = vperm.xlu0 %720, %v311
    %v722 = vpop.permute.xlu0 %721
    %724 = vset.pattern.permute.xlu0 1
    %725 = vperm.xlu0 %724, %v312
    %v726 = vpop.permute.xlu0 %725
    %728 = vset.pattern.permute.xlu0 1
    %729 = vperm.xlu0 %728, %v313
    %v730 = vpop.permute.xlu0 %729
    %732 = vset.pattern.permute.xlu0 1
    %733 = vperm.xlu0 %732, %v314
    %v734 = vpop.permute.xlu0 %733
    %736 = vset.pattern.permute.xlu0 1
    %737 = vperm.xlu0 %736, %v315
    %v738 = vpop.permute.xlu0 %737
    %740 = vset.pattern.permute.xlu0 1
    %741 = vperm.xlu0 %740, %v316
    %v742 = vpop.permute.xlu0 %741
    %744 = vset.pattern.permute.xlu0 1
    %745 = vperm.xlu0 %744, %v317
    %v746 = vpop.permute.xlu0 %745
    %748 = vset.pattern.permute.xlu0 1
    %749 = vperm.xlu0 %748, %v318
    %v750 = vpop.permute.xlu0 %749
    %v752 = vmul.f32 %v712, %v722
    %v753 = vmul.f32 %v713, %v726
    %v754 = vmul.f32 %v714, %v730
    %v755 = vmul.f32 %v715, %v734
    %v756 = vmul.f32 %v716, %v738
    %v757 = vmul.f32 %v717, %v742
    %v758 = vmul.f32 %v718, %v746
    %v759 = vmul.f32 %v719, %v750
    %v760 = vadd.f32 %v563, %v752
    %v761 = vadd.f32 %v564, %v753
    %v762 = vadd.f32 %v565, %v754
    %v763 = vadd.f32 %v566, %v755
    %v764 = vadd.f32 %v567, %v756
    %v765 = vadd.f32 %v568, %v757
    %v766 = vadd.f32 %v569, %v758
    %v767 = vadd.f32 %v570, %v759
    %768 = vset.pattern.permute.xlu0 2
    %769 = vperm.xlu0 %768, %v295
    %v770 = vpop.permute.xlu0 %769
    %771 = vset.pattern.permute.xlu0 2
    %772 = vperm.xlu0 %771, %v296
    %v773 = vpop.permute.xlu0 %772
    %774 = vset.pattern.permute.xlu0 2
    %775 = vperm.xlu0 %774, %v297
    %v776 = vpop.permute.xlu0 %775
    %777 = vset.pattern.permute.xlu0 2
    %778 = vperm.xlu0 %777, %v298
    %v779 = vpop.permute.xlu0 %778
    %780 = vset.pattern.permute.xlu0 2
    %781 = vperm.xlu0 %780, %v299
    %v782 = vpop.permute.xlu0 %781
    %783 = vset.pattern.permute.xlu0 2
    %784 = vperm.xlu0 %783, %v300
    %v785 = vpop.permute.xlu0 %784
    %786 = vset.pattern.permute.xlu0 2
    %787 = vperm.xlu0 %786, %v301
    %v788 = vpop.permute.xlu0 %787
    %789 = vset.pattern.permute.xlu0 2
    %790 = vperm.xlu0 %789, %v302
    %v791 = vpop.permute.xlu0 %790
    %vm792 = vcmp.eq.s32.totalorder %v321, %v770
    %vm793 = vcmp.eq.s32.totalorder %v321, %v773
    %vm794 = vcmp.eq.s32.totalorder %v321, %v776
    %vm795 = vcmp.eq.s32.totalorder %v321, %v779
    %vm796 = vcmp.eq.s32.totalorder %v321, %v782
    %vm797 = vcmp.eq.s32.totalorder %v321, %v785
    %vm798 = vcmp.eq.s32.totalorder %v321, %v788
    %vm799 = vcmp.eq.s32.totalorder %v321, %v791
    %v800 = vsel %vm792, 1.0, 0.0
    %v801 = vsel %vm793, 1.0, 0.0
    %v802 = vsel %vm794, 1.0, 0.0
    %v803 = vsel %vm795, 1.0, 0.0
    %v804 = vsel %vm796, 1.0, 0.0
    %v805 = vsel %vm797, 1.0, 0.0
    %v806 = vsel %vm798, 1.0, 0.0
    %v807 = vsel %vm799, 1.0, 0.0
    %v808 = vpack.c.bf16 %v801, %v800
    %v809 = vpack.c.bf16 %v803, %v802
    %v810 = vpack.c.bf16 %v805, %v804
    %v811 = vpack.c.bf16 %v807, %v806
    %v813 = vsel %vm398, %v808, 0
    %v816 = vsel %vm398, %v809, 0
    %v819 = vsel %vm398, %v810, 0
    %v822 = vsel %vm398, %v811, 0
    %824 = vmatpush.bf16.msra.mxu0 0
    %825 = vmatpush.bf16.msra.mxu0 0
    %826 = vmatpush.bf16.msra.mxu0 0
    %827 = vmatpush.bf16.msra.mxu0 0
    %828 = vmatpush.bf16.msra.mxu0 %v393
    %829 = vmatpush.bf16.msra.mxu0 %v392
    %830 = vmatpush.bf16.msra.mxu0 %v391
    %831 = vmatpush.bf16.msra.mxu0 %v390
    %832 = vmatmul.bf16.gmra.mxu0 %v813
    %v833 = vpop.f32.mrf.mxu0
    %v834 = vadd.f32 0.0, %v833
    %v835 = vpop.f32.mrf.mxu0
    %v836 = vadd.f32 0.0, %v835
    %837 = vmatmul.bf16.gmra.mxu0 %v816
    %v838 = vpop.f32.mrf.mxu0
    %v839 = vadd.f32 0.0, %v838
    %v840 = vpop.f32.mrf.mxu0
    %v841 = vadd.f32 0.0, %v840
    %842 = vmatmul.bf16.gmra.mxu0 %v819
    %v843 = vpop.f32.mrf.mxu0
    %v844 = vadd.f32 0.0, %v843
    %v845 = vpop.f32.mrf.mxu0
    %v846 = vadd.f32 0.0, %v845
    %847 = vmatmul.bf16.gmra.mxu0 %v822
    %v848 = vpop.f32.mrf.mxu0
    %v849 = vadd.f32 0.0, %v848
    %v850 = vpop.f32.mrf.mxu0
    %v851 = vadd.f32 0.0, %v850
    %852 = vdwg.mxu0
    %v853 = vadd.f32 %v287, %v834
    %v854 = vadd.f32 %v288, %v836
    %v855 = vadd.f32 %v289, %v839
    %v856 = vadd.f32 %v290, %v841
    %v857 = vadd.f32 %v291, %v844
    %v858 = vadd.f32 %v292, %v846
    %v859 = vadd.f32 %v293, %v849
    %v860 = vadd.f32 %v294, %v851
    %861 = vset.pattern.permute.xlu0 2
    %862 = vperm.xlu0 %861, %v303
    %v863 = vpop.permute.xlu0 %862
    %865 = vset.pattern.permute.xlu0 2
    %866 = vperm.xlu0 %865, %v304
    %v867 = vpop.permute.xlu0 %866
    %869 = vset.pattern.permute.xlu0 2
    %870 = vperm.xlu0 %869, %v305
    %v871 = vpop.permute.xlu0 %870
    %873 = vset.pattern.permute.xlu0 2
    %874 = vperm.xlu0 %873, %v306
    %v875 = vpop.permute.xlu0 %874
    %877 = vset.pattern.permute.xlu0 2
    %878 = vperm.xlu0 %877, %v307
    %v879 = vpop.permute.xlu0 %878
    %881 = vset.pattern.permute.xlu0 2
    %882 = vperm.xlu0 %881, %v308
    %v883 = vpop.permute.xlu0 %882
    %885 = vset.pattern.permute.xlu0 2
    %886 = vperm.xlu0 %885, %v309
    %v887 = vpop.permute.xlu0 %886
    %889 = vset.pattern.permute.xlu0 2
    %890 = vperm.xlu0 %889, %v310
    %v891 = vpop.permute.xlu0 %890
    %v893 = vmul.f32 %v863, %v489
    %v894 = vmul.f32 %v867, %v489
    %v895 = vmul.f32 %v871, %v489
    %v896 = vmul.f32 %v875, %v489
    %v897 = vmul.f32 %v879, %v489
    %v898 = vmul.f32 %v883, %v489
    %v899 = vmul.f32 %v887, %v489
    %v900 = vmul.f32 %v891, %v489
    %v901 = vadd.f32 %v853, %v893
    %v902 = vadd.f32 %v854, %v894
    %v903 = vadd.f32 %v855, %v895
    %v904 = vadd.f32 %v856, %v896
    %v905 = vadd.f32 %v857, %v897
    %v906 = vadd.f32 %v858, %v898
    %v907 = vadd.f32 %v859, %v899
    %v908 = vadd.f32 %v860, %v900
    %v909 = vmax.f32 %v901, 0.0
    %v910 = vmax.f32 %v902, 0.0
    %v911 = vmax.f32 %v903, 0.0
    %v912 = vmax.f32 %v904, 0.0
    %v913 = vmax.f32 %v905, 0.0
    %v914 = vmax.f32 %v906, 0.0
    %v915 = vmax.f32 %v907, 0.0
    %v916 = vmax.f32 %v908, 0.0
    %917 = vset.pattern.permute.xlu0 2
    %918 = vperm.xlu0 %917, %v311
    %v919 = vpop.permute.xlu0 %918
    %921 = vset.pattern.permute.xlu0 2
    %922 = vperm.xlu0 %921, %v312
    %v923 = vpop.permute.xlu0 %922
    %925 = vset.pattern.permute.xlu0 2
    %926 = vperm.xlu0 %925, %v313
    %v927 = vpop.permute.xlu0 %926
    %929 = vset.pattern.permute.xlu0 2
    %930 = vperm.xlu0 %929, %v314
    %v931 = vpop.permute.xlu0 %930
    %933 = vset.pattern.permute.xlu0 2
    %934 = vperm.xlu0 %933, %v315
    %v935 = vpop.permute.xlu0 %934
    %937 = vset.pattern.permute.xlu0 2
    %938 = vperm.xlu0 %937, %v316
    %v939 = vpop.permute.xlu0 %938
    %941 = vset.pattern.permute.xlu0 2
    %942 = vperm.xlu0 %941, %v317
    %v943 = vpop.permute.xlu0 %942
    %945 = vset.pattern.permute.xlu0 2
    %946 = vperm.xlu0 %945, %v318
    %v947 = vpop.permute.xlu0 %946
    %v949 = vmul.f32 %v909, %v919
    %v950 = vmul.f32 %v910, %v923
    %v951 = vmul.f32 %v911, %v927
    %v952 = vmul.f32 %v912, %v931
    %v953 = vmul.f32 %v913, %v935
    %v954 = vmul.f32 %v914, %v939
    %v955 = vmul.f32 %v915, %v943
    %v956 = vmul.f32 %v916, %v947
    %v957 = vadd.f32 %v760, %v949
    %v958 = vadd.f32 %v761, %v950
    %v959 = vadd.f32 %v762, %v951
    %v960 = vadd.f32 %v763, %v952
    %v961 = vadd.f32 %v764, %v953
    %v962 = vadd.f32 %v765, %v954
    %v963 = vadd.f32 %v766, %v955
    %v964 = vadd.f32 %v767, %v956
    %965 = vset.pattern.permute.xlu0 3
    %966 = vperm.xlu0 %965, %v295
    %v967 = vpop.permute.xlu0 %966
    %968 = vset.pattern.permute.xlu0 3
    %969 = vperm.xlu0 %968, %v296
    %v970 = vpop.permute.xlu0 %969
    %971 = vset.pattern.permute.xlu0 3
    %972 = vperm.xlu0 %971, %v297
    %v973 = vpop.permute.xlu0 %972
    %974 = vset.pattern.permute.xlu0 3
    %975 = vperm.xlu0 %974, %v298
    %v976 = vpop.permute.xlu0 %975
    %977 = vset.pattern.permute.xlu0 3
    %978 = vperm.xlu0 %977, %v299
    %v979 = vpop.permute.xlu0 %978
    %980 = vset.pattern.permute.xlu0 3
    %981 = vperm.xlu0 %980, %v300
    %v982 = vpop.permute.xlu0 %981
    %983 = vset.pattern.permute.xlu0 3
    %984 = vperm.xlu0 %983, %v301
    %v985 = vpop.permute.xlu0 %984
    %986 = vset.pattern.permute.xlu0 3
    %987 = vperm.xlu0 %986, %v302
    %v988 = vpop.permute.xlu0 %987
    %vm989 = vcmp.eq.s32.totalorder %v321, %v967
    %vm990 = vcmp.eq.s32.totalorder %v321, %v970
    %vm991 = vcmp.eq.s32.totalorder %v321, %v973
    %vm992 = vcmp.eq.s32.totalorder %v321, %v976
    %vm993 = vcmp.eq.s32.totalorder %v321, %v979
    %vm994 = vcmp.eq.s32.totalorder %v321, %v982
    %vm995 = vcmp.eq.s32.totalorder %v321, %v985
    %vm996 = vcmp.eq.s32.totalorder %v321, %v988
    %v997 = vsel %vm989, 1.0, 0.0
    %v998 = vsel %vm990, 1.0, 0.0
    %v999 = vsel %vm991, 1.0, 0.0
    %v1000 = vsel %vm992, 1.0, 0.0
    %v1001 = vsel %vm993, 1.0, 0.0
    %v1002 = vsel %vm994, 1.0, 0.0
    %v1003 = vsel %vm995, 1.0, 0.0
    %v1004 = vsel %vm996, 1.0, 0.0
    %v1005 = vpack.c.bf16 %v998, %v997
    %v1006 = vpack.c.bf16 %v1000, %v999
    %v1007 = vpack.c.bf16 %v1002, %v1001
    %v1008 = vpack.c.bf16 %v1004, %v1003
    %v1010 = vsel %vm398, %v1005, 0
    %v1013 = vsel %vm398, %v1006, 0
    %v1016 = vsel %vm398, %v1007, 0
    %v1019 = vsel %vm398, %v1008, 0
    %1021 = vmatpush.bf16.msra.mxu0 0
    %1022 = vmatpush.bf16.msra.mxu0 0
    %1023 = vmatpush.bf16.msra.mxu0 0
    %1024 = vmatpush.bf16.msra.mxu0 0
    %1025 = vmatpush.bf16.msra.mxu0 %v393
    %1026 = vmatpush.bf16.msra.mxu0 %v392
    %1027 = vmatpush.bf16.msra.mxu0 %v391
    %1028 = vmatpush.bf16.msra.mxu0 %v390
    %1029 = vmatmul.bf16.gmra.mxu0 %v1010
    %v1030 = vpop.f32.mrf.mxu0
    %v1031 = vadd.f32 0.0, %v1030
    %v1032 = vpop.f32.mrf.mxu0
    %v1033 = vadd.f32 0.0, %v1032
    %1034 = vmatmul.bf16.gmra.mxu0 %v1013
    %v1035 = vpop.f32.mrf.mxu0
    %v1036 = vadd.f32 0.0, %v1035
    %v1037 = vpop.f32.mrf.mxu0
    %v1038 = vadd.f32 0.0, %v1037
    %1039 = vmatmul.bf16.gmra.mxu0 %v1016
    %v1040 = vpop.f32.mrf.mxu0
    %v1041 = vadd.f32 0.0, %v1040
    %v1042 = vpop.f32.mrf.mxu0
    %v1043 = vadd.f32 0.0, %v1042
    %1044 = vmatmul.bf16.gmra.mxu0 %v1019
    %v1045 = vpop.f32.mrf.mxu0
    %v1046 = vadd.f32 0.0, %v1045
    %v1047 = vpop.f32.mrf.mxu0
    %v1048 = vadd.f32 0.0, %v1047
    %1049 = vdwg.mxu0
    %v1050 = vadd.f32 %v287, %v1031
    %v1051 = vadd.f32 %v288, %v1033
    %v1052 = vadd.f32 %v289, %v1036
    %v1053 = vadd.f32 %v290, %v1038
    %v1054 = vadd.f32 %v291, %v1041
    %v1055 = vadd.f32 %v292, %v1043
    %v1056 = vadd.f32 %v293, %v1046
    %v1057 = vadd.f32 %v294, %v1048
    %1058 = vset.pattern.permute.xlu0 3
    %1059 = vperm.xlu0 %1058, %v303
    %v1060 = vpop.permute.xlu0 %1059
    %1062 = vset.pattern.permute.xlu0 3
    %1063 = vperm.xlu0 %1062, %v304
    %v1064 = vpop.permute.xlu0 %1063
    %1066 = vset.pattern.permute.xlu0 3
    %1067 = vperm.xlu0 %1066, %v305
    %v1068 = vpop.permute.xlu0 %1067
    %1070 = vset.pattern.permute.xlu0 3
    %1071 = vperm.xlu0 %1070, %v306
    %v1072 = vpop.permute.xlu0 %1071
    %1074 = vset.pattern.permute.xlu0 3
    %1075 = vperm.xlu0 %1074, %v307
    %v1076 = vpop.permute.xlu0 %1075
    %1078 = vset.pattern.permute.xlu0 3
    %1079 = vperm.xlu0 %1078, %v308
    %v1080 = vpop.permute.xlu0 %1079
    %1082 = vset.pattern.permute.xlu0 3
    %1083 = vperm.xlu0 %1082, %v309
    %v1084 = vpop.permute.xlu0 %1083
    %1086 = vset.pattern.permute.xlu0 3
    %1087 = vperm.xlu0 %1086, %v310
    %v1088 = vpop.permute.xlu0 %1087
    %v1090 = vmul.f32 %v1060, %v489
    %v1091 = vmul.f32 %v1064, %v489
    %v1092 = vmul.f32 %v1068, %v489
    %v1093 = vmul.f32 %v1072, %v489
    %v1094 = vmul.f32 %v1076, %v489
    %v1095 = vmul.f32 %v1080, %v489
    %v1096 = vmul.f32 %v1084, %v489
    %v1097 = vmul.f32 %v1088, %v489
    %v1098 = vadd.f32 %v1050, %v1090
    %v1099 = vadd.f32 %v1051, %v1091
    %v1100 = vadd.f32 %v1052, %v1092
    %v1101 = vadd.f32 %v1053, %v1093
    %v1102 = vadd.f32 %v1054, %v1094
    %v1103 = vadd.f32 %v1055, %v1095
    %v1104 = vadd.f32 %v1056, %v1096
    %v1105 = vadd.f32 %v1057, %v1097
    %v1106 = vmax.f32 %v1098, 0.0
    %v1107 = vmax.f32 %v1099, 0.0
    %v1108 = vmax.f32 %v1100, 0.0
    %v1109 = vmax.f32 %v1101, 0.0
    %v1110 = vmax.f32 %v1102, 0.0
    %v1111 = vmax.f32 %v1103, 0.0
    %v1112 = vmax.f32 %v1104, 0.0
    %v1113 = vmax.f32 %v1105, 0.0
    %1114 = vset.pattern.permute.xlu0 3
    %1115 = vperm.xlu0 %1114, %v311
    %v1116 = vpop.permute.xlu0 %1115
    %1118 = vset.pattern.permute.xlu0 3
    %1119 = vperm.xlu0 %1118, %v312
    %v1120 = vpop.permute.xlu0 %1119
    %1122 = vset.pattern.permute.xlu0 3
    %1123 = vperm.xlu0 %1122, %v313
    %v1124 = vpop.permute.xlu0 %1123
    %1126 = vset.pattern.permute.xlu0 3
    %1127 = vperm.xlu0 %1126, %v314
    %v1128 = vpop.permute.xlu0 %1127
    %1130 = vset.pattern.permute.xlu0 3
    %1131 = vperm.xlu0 %1130, %v315
    %v1132 = vpop.permute.xlu0 %1131
    %1134 = vset.pattern.permute.xlu0 3
    %1135 = vperm.xlu0 %1134, %v316
    %v1136 = vpop.permute.xlu0 %1135
    %1138 = vset.pattern.permute.xlu0 3
    %1139 = vperm.xlu0 %1138, %v317
    %v1140 = vpop.permute.xlu0 %1139
    %1142 = vset.pattern.permute.xlu0 3
    %1143 = vperm.xlu0 %1142, %v318
    %v1144 = vpop.permute.xlu0 %1143
    %v1146 = vmul.f32 %v1106, %v1116
    %v1147 = vmul.f32 %v1107, %v1120
    %v1148 = vmul.f32 %v1108, %v1124
    %v1149 = vmul.f32 %v1109, %v1128
    %v1150 = vmul.f32 %v1110, %v1132
    %v1151 = vmul.f32 %v1111, %v1136
    %v1152 = vmul.f32 %v1112, %v1140
    %v1153 = vmul.f32 %v1113, %v1144
    %v1154 = vadd.f32 %v957, %v1146
    %v1155 = vadd.f32 %v958, %v1147
    %v1156 = vadd.f32 %v959, %v1148
    %v1157 = vadd.f32 %v960, %v1149
    %v1158 = vadd.f32 %v961, %v1150
    %v1159 = vadd.f32 %v962, %v1151
    %v1160 = vadd.f32 %v963, %v1152
    %v1161 = vadd.f32 %v964, %v1153
    %v1162 = vld [vmem:[#allocation2] sm:$0xf]
    %v1163 = vld [vmem:[#allocation2 + $0x4] sm:$0xf]
    %v1164 = vld [vmem:[#allocation2 + $0x8] sm:$0xf]
    %v1165 = vld [vmem:[#allocation2 + $0xc] sm:$0xf]
    %v1166 = vld [vmem:[#allocation2 + $0x10] sm:$0xf]
    %v1167 = vld [vmem:[#allocation2 + $0x14] sm:$0xf]
    %v1168 = vld [vmem:[#allocation2 + $0x18] sm:$0xf]
    %v1169 = vld [vmem:[#allocation2 + $0x1c] sm:$0xf]
    %v1170 = vpack.c.bf16 %v1154, %v1154
    %v1171 = vpack.c.bf16 %v1155, %v1155
    %v1172 = vpack.c.bf16 %v1156, %v1156
    %v1173 = vpack.c.bf16 %v1157, %v1157
    %v1174 = vpack.c.bf16 %v1158, %v1158
    %v1175 = vpack.c.bf16 %v1159, %v1159
    %v1176 = vpack.c.bf16 %v1160, %v1160
    %v1177 = vpack.c.bf16 %v1161, %v1161
    %v1186 = vunpack.c.l.b16 %v1162
    %v1187 = vunpack.c.l.b16 %v1163
    %v1188 = vunpack.c.l.b16 %v1164
    %v1189 = vunpack.c.l.b16 %v1165
    %v1190 = vunpack.c.l.b16 %v1166
    %v1191 = vunpack.c.l.b16 %v1167
    %v1192 = vunpack.c.l.b16 %v1168
    %v1193 = vunpack.c.l.b16 %v1169
    %v1194 = vpack.c.b16 %v1187, %v1186
    %v1195 = vpack.c.b16 %v1189, %v1188
    %v1196 = vpack.c.b16 %v1191, %v1190
    %v1197 = vpack.c.b16 %v1193, %v1192
    %v1210 = vunpack.c.l.b16 %v1170
    %v1211 = vunpack.c.l.b16 %v1171
    %v1212 = vunpack.c.l.b16 %v1172
    %v1213 = vunpack.c.l.b16 %v1173
    %v1214 = vunpack.c.l.b16 %v1174
    %v1215 = vunpack.c.l.b16 %v1175
    %v1216 = vunpack.c.l.b16 %v1176
    %v1217 = vunpack.c.l.b16 %v1177
    %v1218 = vpack.c.b16 %v1211, %v1210
    %v1219 = vpack.c.b16 %v1213, %v1212
    %v1220 = vpack.c.b16 %v1215, %v1214
    %v1221 = vpack.c.b16 %v1217, %v1216
    %v1226 = vld [vmem:[%s8] sm:$0xf]
    %v1227 = vld [vmem:[%s8 + $0x4] sm:$0xf]
    %v1228 = vld [vmem:[%s8 + $0x8] sm:$0xf]
    %v1229 = vld [vmem:[%s8 + $0xc] sm:$0xf]
    %v1230 = vld [vmem:[%s8 + $0x10] sm:$0xf]
    %v1231 = vld [vmem:[%s8 + $0x14] sm:$0xf]
    %v1232 = vld [vmem:[%s8 + $0x18] sm:$0xf]
    %v1233 = vld [vmem:[%s8 + $0x1c] sm:$0xf]
    %v1234 = vld [vmem:[%s8 + $0x20] sm:$0xf]
    %v1235 = vld [vmem:[%s8 + $0x24] sm:$0xf]
    %v1236 = vld [vmem:[%s8 + $0x28] sm:$0xf]
    %v1237 = vld [vmem:[%s8 + $0x2c] sm:$0xf]
    %v1238 = vld [vmem:[%s8 + $0x30] sm:$0xf]
    %v1239 = vld [vmem:[%s8 + $0x34] sm:$0xf]
    %v1240 = vld [vmem:[%s8 + $0x38] sm:$0xf]
    %v1241 = vld [vmem:[%s8 + $0x3c] sm:$0xf]
    %v1242 = vld [vmem:[%s8 + $0x40] sm:$0xf]
    %v1243 = vld [vmem:[%s8 + $0x44] sm:$0xf]
    %v1244 = vld [vmem:[%s8 + $0x48] sm:$0xf]
    %v1245 = vld [vmem:[%s8 + $0x4c] sm:$0xf]
    %v1246 = vld [vmem:[%s8 + $0x50] sm:$0xf]
    %v1247 = vld [vmem:[%s8 + $0x54] sm:$0xf]
    %v1248 = vld [vmem:[%s8 + $0x58] sm:$0xf]
    %v1249 = vld [vmem:[%s8 + $0x5c] sm:$0xf]
    %v1250 = vld [vmem:[%s8 + $0x60] sm:$0xf]
    %v1251 = vld [vmem:[%s8 + $0x64] sm:$0xf]
    %v1252 = vld [vmem:[%s8 + $0x68] sm:$0xf]
    %v1253 = vld [vmem:[%s8 + $0x6c] sm:$0xf]
    %v1254 = vld [vmem:[%s8 + $0x70] sm:$0xf]
    %v1255 = vld [vmem:[%s8 + $0x74] sm:$0xf]
    %v1256 = vld [vmem:[%s8 + $0x78] sm:$0xf]
    %v1257 = vld [vmem:[%s8 + $0x7c] sm:$0xf]
    %v1258 = vld [vmem:[%s9] sm:$0x1]
    %v1260 = vperm.slane %v1258, 0
    %v1294 = vunpack.c.l.b16 %v1226
    %v1295 = vunpack.c.l.b16 %v1227
    %v1296 = vunpack.c.l.b16 %v1228
    %v1297 = vunpack.c.l.b16 %v1229
    %v1298 = vunpack.c.l.b16 %v1230
    %v1299 = vunpack.c.l.b16 %v1231
    %v1300 = vunpack.c.l.b16 %v1232
    %v1301 = vunpack.c.l.b16 %v1233
    %v1302 = vunpack.c.l.b16 %v1234
    %v1303 = vunpack.c.l.b16 %v1235
    %v1304 = vunpack.c.l.b16 %v1236
    %v1305 = vunpack.c.l.b16 %v1237
    %v1306 = vunpack.c.l.b16 %v1238
    %v1307 = vunpack.c.l.b16 %v1239
    %v1308 = vunpack.c.l.b16 %v1240
    %v1309 = vunpack.c.l.b16 %v1241
    %v1310 = vunpack.c.l.b16 %v1242
    %v1311 = vunpack.c.l.b16 %v1243
    %v1312 = vunpack.c.l.b16 %v1244
    %v1313 = vunpack.c.l.b16 %v1245
    %v1314 = vunpack.c.l.b16 %v1246
    %v1315 = vunpack.c.l.b16 %v1247
    %v1316 = vunpack.c.l.b16 %v1248
    %v1317 = vunpack.c.l.b16 %v1249
    %v1318 = vunpack.c.l.b16 %v1250
    %v1319 = vunpack.c.l.b16 %v1251
    %v1320 = vunpack.c.l.b16 %v1252
    %v1321 = vunpack.c.l.b16 %v1253
    %v1322 = vunpack.c.l.b16 %v1254
    %v1323 = vunpack.c.l.b16 %v1255
    %v1324 = vunpack.c.l.b16 %v1256
    %v1325 = vunpack.c.l.b16 %v1257
    %v1326 = vpack.c.b16 %v1295, %v1294
    %v1327 = vpack.c.b16 %v1297, %v1296
    %v1328 = vpack.c.b16 %v1299, %v1298
    %v1329 = vpack.c.b16 %v1301, %v1300
    %v1330 = vpack.c.b16 %v1303, %v1302
    %v1331 = vpack.c.b16 %v1305, %v1304
    %v1332 = vpack.c.b16 %v1307, %v1306
    %v1333 = vpack.c.b16 %v1309, %v1308
    %v1334 = vpack.c.b16 %v1311, %v1310
    %v1335 = vpack.c.b16 %v1313, %v1312
    %v1336 = vpack.c.b16 %v1315, %v1314
    %v1337 = vpack.c.b16 %v1317, %v1316
    %v1338 = vpack.c.b16 %v1319, %v1318
    %v1339 = vpack.c.b16 %v1321, %v1320
    %v1340 = vpack.c.b16 %v1323, %v1322
    %v1341 = vpack.c.b16 %v1325, %v1324
    %1358 = vmatpush.bf16.msra.mxu0 %v1333
    %1359 = vmatpush.bf16.msra.mxu0 %v1332
    %1360 = vmatpush.bf16.msra.mxu0 %v1331
    %1361 = vmatpush.bf16.msra.mxu0 %v1330
    %1362 = vmatpush.bf16.msra.mxu0 %v1329
    %1363 = vmatpush.bf16.msra.mxu0 %v1328
    %1364 = vmatpush.bf16.msra.mxu0 %v1327
    %1365 = vmatpush.bf16.msra.mxu0 %v1326
    %1366 = vmatmul.bf16.gmra.mxu0 %v1194
    %v1367 = vpop.f32.mrf.mxu0
    %v1368 = vadd.f32 %v1260, %v1367
    %v1369 = vpop.f32.mrf.mxu0
    %v1370 = vadd.f32 %v1260, %v1369
    %1371 = vmatmul.bf16.gmra.mxu0 %v1195
    %v1372 = vpop.f32.mrf.mxu0
    %v1373 = vadd.f32 %v1260, %v1372
    %v1374 = vpop.f32.mrf.mxu0
    %v1375 = vadd.f32 %v1260, %v1374
    %1376 = vmatmul.bf16.gmra.mxu0 %v1196
    %v1377 = vpop.f32.mrf.mxu0
    %v1378 = vadd.f32 %v1260, %v1377
    %v1379 = vpop.f32.mrf.mxu0
    %v1380 = vadd.f32 %v1260, %v1379
    %1381 = vmatmul.bf16.gmra.mxu0 %v1197
    %v1382 = vpop.f32.mrf.mxu0
    %v1383 = vadd.f32 %v1260, %v1382
    %v1384 = vpop.f32.mrf.mxu0
    %v1385 = vadd.f32 %v1260, %v1384
    %1386 = vdwg.mxu0
    %1387 = vmatpush.bf16.msra.mxu0 %v1341
    %1388 = vmatpush.bf16.msra.mxu0 %v1340
    %1389 = vmatpush.bf16.msra.mxu0 %v1339
    %1390 = vmatpush.bf16.msra.mxu0 %v1338
    %1391 = vmatpush.bf16.msra.mxu0 %v1337
    %1392 = vmatpush.bf16.msra.mxu0 %v1336
    %1393 = vmatpush.bf16.msra.mxu0 %v1335
    %1394 = vmatpush.bf16.msra.mxu0 %v1334
    %1395 = vmatmul.bf16.gmra.mxu0 %v1218
    %v1396 = vpop.f32.mrf.mxu0
    %v1397 = vadd.f32 %v1368, %v1396
    %v1398 = vpop.f32.mrf.mxu0
    %v1399 = vadd.f32 %v1370, %v1398
    %1400 = vmatmul.bf16.gmra.mxu0 %v1219
    %v1401 = vpop.f32.mrf.mxu0
    %v1402 = vadd.f32 %v1373, %v1401
    %v1403 = vpop.f32.mrf.mxu0
    %v1404 = vadd.f32 %v1375, %v1403
    %1405 = vmatmul.bf16.gmra.mxu0 %v1220
    %v1406 = vpop.f32.mrf.mxu0
    %v1407 = vadd.f32 %v1378, %v1406
    %v1408 = vpop.f32.mrf.mxu0
    %v1409 = vadd.f32 %v1380, %v1408
    %1410 = vmatmul.bf16.gmra.mxu0 %v1221
    %v1411 = vpop.f32.mrf.mxu0
    %v1412 = vadd.f32 %v1383, %v1411
    %v1413 = vpop.f32.mrf.mxu0
    %v1414 = vadd.f32 %v1385, %v1413
    %1415 = vdwg.mxu0
    %v1416 = vmax.f32 %v1397, 0.0
    %v1417 = vmax.f32 %v1399, 0.0
    %v1418 = vmax.f32 %v1402, 0.0
    %v1419 = vmax.f32 %v1404, 0.0
    %v1420 = vmax.f32 %v1407, 0.0
    %v1421 = vmax.f32 %v1409, 0.0
    %v1422 = vmax.f32 %v1412, 0.0
    %v1423 = vmax.f32 %v1414, 0.0
    %v1424 = vunpack.c.l.bf16 %v1162
    %v1425 = vunpack.c.l.bf16 %v1163
    %v1426 = vunpack.c.l.bf16 %v1164
    %v1427 = vunpack.c.l.bf16 %v1165
    %v1428 = vunpack.c.l.bf16 %v1166
    %v1429 = vunpack.c.l.bf16 %v1167
    %v1430 = vunpack.c.l.bf16 %v1168
    %v1431 = vunpack.c.l.bf16 %v1169
    %v1432 = vadd.f32 %v1424, %v1416
    %v1433 = vadd.f32 %v1425, %v1417
    %v1434 = vadd.f32 %v1426, %v1418
    %v1435 = vadd.f32 %v1427, %v1419
    %v1436 = vadd.f32 %v1428, %v1420
    %v1437 = vadd.f32 %v1429, %v1421
    %v1438 = vadd.f32 %v1430, %v1422
    %v1439 = vadd.f32 %v1431, %v1423
    %v1440 = vpack.c.bf16 %v1432, %v1432
    %v1441 = vpack.c.bf16 %v1433, %v1433
    %v1442 = vpack.c.bf16 %v1434, %v1434
    %v1443 = vpack.c.bf16 %v1435, %v1435
    %v1444 = vpack.c.bf16 %v1436, %v1436
    %v1445 = vpack.c.bf16 %v1437, %v1437
    %v1446 = vpack.c.bf16 %v1438, %v1438
    %v1447 = vpack.c.bf16 %v1439, %v1439
    %1448 = vst [vmem:[#allocation2] sm:$0xf] %v1440
    %1449 = vst [vmem:[#allocation2 + $0x4] sm:$0xf] %v1441
    %1450 = vst [vmem:[#allocation2 + $0x8] sm:$0xf] %v1442
    %1451 = vst [vmem:[#allocation2 + $0xc] sm:$0xf] %v1443
    %1452 = vst [vmem:[#allocation2 + $0x10] sm:$0xf] %v1444
    %1453 = vst [vmem:[#allocation2 + $0x14] sm:$0xf] %v1445
    %1454 = vst [vmem:[#allocation2 + $0x18] sm:$0xf] %v1446
    %1455 = vst [vmem:[#allocation2 + $0x1c] sm:$0xf] %v1447
    %v1456 = vld [vmem:[#allocation2] sm:$0xf]
    %v1457 = vld [vmem:[#allocation2 + $0x4] sm:$0xf]
    %v1458 = vld [vmem:[#allocation2 + $0x8] sm:$0xf]
    %v1459 = vld [vmem:[#allocation2 + $0xc] sm:$0xf]
    %v1460 = vld [vmem:[#allocation2 + $0x10] sm:$0xf]
    %v1461 = vld [vmem:[#allocation2 + $0x14] sm:$0xf]
    %v1462 = vld [vmem:[#allocation2 + $0x18] sm:$0xf]
    %v1463 = vld [vmem:[#allocation2 + $0x1c] sm:$0xf]
    %s1464 = scalar_lea.vmem %s5, 128
    %v1465 = vld [vmem:[%s1464] sm:$0xff]
    %v1466 = vld [vmem:[%s1464 + $0x8] sm:$0xff]
    %v1467 = vld [vmem:[%s1464 + $0x10] sm:$0xff]
    %v1468 = vld [vmem:[%s1464 + $0x18] sm:$0xff]
    %v1469 = vld [vmem:[%s1464 + $0x20] sm:$0xff]
    %v1470 = vld [vmem:[%s1464 + $0x28] sm:$0xff]
    %v1471 = vld [vmem:[%s1464 + $0x30] sm:$0xff]
    %v1472 = vld [vmem:[%s1464 + $0x38] sm:$0xff]
    %v1473 = vld [vmem:[%s1464 + $0x40] sm:$0xff]
    %v1474 = vld [vmem:[%s1464 + $0x48] sm:$0xff]
    %v1475 = vld [vmem:[%s1464 + $0x50] sm:$0xff]
    %v1476 = vld [vmem:[%s1464 + $0x58] sm:$0xff]
    %v1477 = vld [vmem:[%s1464 + $0x60] sm:$0xff]
    %v1478 = vld [vmem:[%s1464 + $0x68] sm:$0xff]
    %v1479 = vld [vmem:[%s1464 + $0x70] sm:$0xff]
    %v1480 = vld [vmem:[%s1464 + $0x78] sm:$0xff]
    %v1489 = vunpack.c.l.b16 %v1456
    %v1490 = vunpack.c.l.b16 %v1457
    %v1491 = vunpack.c.l.b16 %v1458
    %v1492 = vunpack.c.l.b16 %v1459
    %v1493 = vunpack.c.l.b16 %v1460
    %v1494 = vunpack.c.l.b16 %v1461
    %v1495 = vunpack.c.l.b16 %v1462
    %v1496 = vunpack.c.l.b16 %v1463
    %v1497 = vpack.c.b16 %v1490, %v1489
    %v1498 = vpack.c.b16 %v1492, %v1491
    %v1499 = vpack.c.b16 %v1494, %v1493
    %v1500 = vpack.c.b16 %v1496, %v1495
    %v1521 = vunpack.c.l.b16 %v1465
    %v1522 = vunpack.c.h.b16 %v1465
    %v1523 = vunpack.c.l.b16 %v1466
    %v1524 = vunpack.c.h.b16 %v1466
    %v1525 = vunpack.c.l.b16 %v1467
    %v1526 = vunpack.c.h.b16 %v1467
    %v1527 = vunpack.c.l.b16 %v1468
    %v1528 = vunpack.c.h.b16 %v1468
    %v1529 = vunpack.c.l.b16 %v1469
    %v1530 = vunpack.c.h.b16 %v1469
    %v1531 = vunpack.c.l.b16 %v1470
    %v1532 = vunpack.c.h.b16 %v1470
    %v1533 = vunpack.c.l.b16 %v1471
    %v1534 = vunpack.c.h.b16 %v1471
    %v1535 = vunpack.c.l.b16 %v1472
    %v1536 = vunpack.c.h.b16 %v1472
    %v1537 = vunpack.c.l.b16 %v1473
    %v1538 = vunpack.c.h.b16 %v1473
    %v1539 = vunpack.c.l.b16 %v1474
    %v1540 = vunpack.c.h.b16 %v1474
    %v1541 = vunpack.c.l.b16 %v1475
    %v1542 = vunpack.c.h.b16 %v1475
    %v1543 = vunpack.c.l.b16 %v1476
    %v1544 = vunpack.c.h.b16 %v1476
    %v1545 = vunpack.c.l.b16 %v1477
    %v1546 = vunpack.c.h.b16 %v1477
    %v1547 = vunpack.c.l.b16 %v1478
    %v1548 = vunpack.c.h.b16 %v1478
    %v1549 = vunpack.c.l.b16 %v1479
    %v1550 = vunpack.c.h.b16 %v1479
    %v1551 = vunpack.c.l.b16 %v1480
    %v1552 = vunpack.c.h.b16 %v1480
    %v1553 = vpack.c.b16 %v1523, %v1521
    %v1554 = vpack.c.b16 %v1524, %v1522
    %v1555 = vpack.c.b16 %v1527, %v1525
    %v1556 = vpack.c.b16 %v1528, %v1526
    %v1557 = vpack.c.b16 %v1531, %v1529
    %v1558 = vpack.c.b16 %v1532, %v1530
    %v1559 = vpack.c.b16 %v1535, %v1533
    %v1560 = vpack.c.b16 %v1536, %v1534
    %v1561 = vpack.c.b16 %v1539, %v1537
    %v1562 = vpack.c.b16 %v1540, %v1538
    %v1563 = vpack.c.b16 %v1543, %v1541
    %v1564 = vpack.c.b16 %v1544, %v1542
    %v1565 = vpack.c.b16 %v1547, %v1545
    %v1566 = vpack.c.b16 %v1548, %v1546
    %v1567 = vpack.c.b16 %v1551, %v1549
    %v1568 = vpack.c.b16 %v1552, %v1550
    %1585 = vmatpush.bf16.msra.mxu0 %v1567
    %1586 = vmatpush.bf16.msra.mxu0 %v1565
    %1587 = vmatpush.bf16.msra.mxu0 %v1563
    %1588 = vmatpush.bf16.msra.mxu0 %v1561
    %1589 = vmatpush.bf16.msra.mxu0 %v1559
    %1590 = vmatpush.bf16.msra.mxu0 %v1557
    %1591 = vmatpush.bf16.msra.mxu0 %v1555
    %1592 = vmatpush.bf16.msra.mxu0 %v1553
    %1593 = vmatmul.bf16.gmra.mxu0 %v1497
    %v1594 = vpop.f32.mrf.mxu0
    %v1595 = vadd.f32 0.0, %v1594
    %v1596 = vpop.f32.mrf.mxu0
    %v1597 = vadd.f32 0.0, %v1596
    %1598 = vmatmul.bf16.gmra.mxu0 %v1498
    %v1599 = vpop.f32.mrf.mxu0
    %v1600 = vadd.f32 0.0, %v1599
    %v1601 = vpop.f32.mrf.mxu0
    %v1602 = vadd.f32 0.0, %v1601
    %1603 = vmatmul.bf16.gmra.mxu0 %v1499
    %v1604 = vpop.f32.mrf.mxu0
    %v1605 = vadd.f32 0.0, %v1604
    %v1606 = vpop.f32.mrf.mxu0
    %v1607 = vadd.f32 0.0, %v1606
    %1608 = vmatmul.bf16.gmra.mxu0 %v1500
    %v1609 = vpop.f32.mrf.mxu0
    %v1610 = vadd.f32 0.0, %v1609
    %v1611 = vpop.f32.mrf.mxu0
    %v1612 = vadd.f32 0.0, %v1611
    %1613 = vdwg.mxu0
    %1614 = vmatpush.bf16.msra.mxu0 %v1568
    %1615 = vmatpush.bf16.msra.mxu0 %v1566
    %1616 = vmatpush.bf16.msra.mxu0 %v1564
    %1617 = vmatpush.bf16.msra.mxu0 %v1562
    %1618 = vmatpush.bf16.msra.mxu0 %v1560
    %1619 = vmatpush.bf16.msra.mxu0 %v1558
    %1620 = vmatpush.bf16.msra.mxu0 %v1556
    %1621 = vmatpush.bf16.msra.mxu0 %v1554
    %1622 = vmatmul.bf16.gmra.mxu0 %v1497
    %v1623 = vpop.f32.mrf.mxu0
    %v1624 = vadd.f32 0.0, %v1623
    %v1625 = vpop.f32.mrf.mxu0
    %v1626 = vadd.f32 0.0, %v1625
    %1627 = vmatmul.bf16.gmra.mxu0 %v1498
    %v1628 = vpop.f32.mrf.mxu0
    %v1629 = vadd.f32 0.0, %v1628
    %v1630 = vpop.f32.mrf.mxu0
    %v1631 = vadd.f32 0.0, %v1630
    %1632 = vmatmul.bf16.gmra.mxu0 %v1499
    %v1633 = vpop.f32.mrf.mxu0
    %v1634 = vadd.f32 0.0, %v1633
    %v1635 = vpop.f32.mrf.mxu0
    %v1636 = vadd.f32 0.0, %v1635
    %1637 = vmatmul.bf16.gmra.mxu0 %v1500
    %v1638 = vpop.f32.mrf.mxu0
    %v1639 = vadd.f32 0.0, %v1638
    %v1640 = vpop.f32.mrf.mxu0
    %v1641 = vadd.f32 0.0, %v1640
    %1642 = vdwg.mxu0
    %v1643 = vpack.c.bf16 %v1624, %v1624
    %v1644 = vpack.c.bf16 %v1626, %v1626
    %v1645 = vpack.c.bf16 %v1629, %v1629
    %v1646 = vpack.c.bf16 %v1631, %v1631
    %v1647 = vpack.c.bf16 %v1634, %v1634
    %v1648 = vpack.c.bf16 %v1636, %v1636
    %v1649 = vpack.c.bf16 %v1639, %v1639
    %v1650 = vpack.c.bf16 %v1641, %v1641
    %1651 = vst [vmem:[#allocation3] sm:$0xf] %v1643
    %1652 = vst [vmem:[#allocation3 + $0x4] sm:$0xf] %v1644
    %1653 = vst [vmem:[#allocation3 + $0x8] sm:$0xf] %v1645
    %1654 = vst [vmem:[#allocation3 + $0xc] sm:$0xf] %v1646
    %1655 = vst [vmem:[#allocation3 + $0x10] sm:$0xf] %v1647
    %1656 = vst [vmem:[#allocation3 + $0x14] sm:$0xf] %v1648
    %1657 = vst [vmem:[#allocation3 + $0x18] sm:$0xf] %v1649
    %1658 = vst [vmem:[#allocation3 + $0x1c] sm:$0xf] %v1650
    %s1659 = scalar_lea.vmem %s7, 1
    %v1660 = vld [vmem:[%s1659] sm:$0x1]
    %v1662 = vperm.slane %v1660, 0
    %v1664 = vadd.f32 %v1595, %v1662
    %v1665 = vadd.f32 %v1597, %v1662
    %v1666 = vadd.f32 %v1600, %v1662
    %v1667 = vadd.f32 %v1602, %v1662
    %v1668 = vadd.f32 %v1605, %v1662
    %v1669 = vadd.f32 %v1607, %v1662
    %v1670 = vadd.f32 %v1610, %v1662
    %v1671 = vadd.f32 %v1612, %v1662
    %1672 = vst [vmem:[#allocation4] sm:$0xff] %v1664
    %1673 = vst [vmem:[#allocation4 + $0x8] sm:$0xff] %v1665
    %1674 = vst [vmem:[#allocation4 + $0x10] sm:$0xff] %v1666
    %1675 = vst [vmem:[#allocation4 + $0x18] sm:$0xff] %v1667
    %1676 = vst [vmem:[#allocation4 + $0x20] sm:$0xff] %v1668
    %1677 = vst [vmem:[#allocation4 + $0x28] sm:$0xff] %v1669
    %1678 = vst [vmem:[#allocation4 + $0x30] sm:$0xff] %v1670
    %1679 = vst [vmem:[#allocation4 + $0x38] sm:$0xff] %v1671
    %v1680 = vld [vmem:[#allocation4] sm:$0xff]
    %v1681 = vld [vmem:[#allocation4 + $0x8] sm:$0xff]
    %v1682 = vld [vmem:[#allocation4 + $0x10] sm:$0xff]
    %v1683 = vld [vmem:[#allocation4 + $0x18] sm:$0xff]
    %v1684 = vld [vmem:[#allocation4 + $0x20] sm:$0xff]
    %v1685 = vld [vmem:[#allocation4 + $0x28] sm:$0xff]
    %v1686 = vld [vmem:[#allocation4 + $0x30] sm:$0xff]
    %v1687 = vld [vmem:[#allocation4 + $0x38] sm:$0xff]
    %v1688 = vld [vmem:[%s0] sm:$0xff]
    %v1689 = vld [vmem:[%s0 + $0x8] sm:$0xff]
    %v1690 = vld [vmem:[%s0 + $0x10] sm:$0xff]
    %v1691 = vld [vmem:[%s0 + $0x18] sm:$0xff]
    %v1692 = vld [vmem:[%s0 + $0x20] sm:$0xff]
    %v1693 = vld [vmem:[%s0 + $0x28] sm:$0xff]
    %v1694 = vld [vmem:[%s0 + $0x30] sm:$0xff]
    %v1695 = vld [vmem:[%s0 + $0x38] sm:$0xff]
    %v1696 = vld [vmem:[%s1] sm:$0xff]
    %v1697 = vld [vmem:[%s1 + $0x8] sm:$0xff]
    %v1698 = vld [vmem:[%s1 + $0x10] sm:$0xff]
    %v1699 = vld [vmem:[%s1 + $0x18] sm:$0xff]
    %v1700 = vld [vmem:[%s1 + $0x20] sm:$0xff]
    %v1701 = vld [vmem:[%s1 + $0x28] sm:$0xff]
    %v1702 = vld [vmem:[%s1 + $0x30] sm:$0xff]
    %v1703 = vld [vmem:[%s1 + $0x38] sm:$0xff]
    %v1704 = vld [vmem:[%s2] sm:$0xff]
    %v1705 = vld [vmem:[%s2 + $0x8] sm:$0xff]
    %v1706 = vld [vmem:[%s2 + $0x10] sm:$0xff]
    %v1707 = vld [vmem:[%s2 + $0x18] sm:$0xff]
    %v1708 = vld [vmem:[%s2 + $0x20] sm:$0xff]
    %v1709 = vld [vmem:[%s2 + $0x28] sm:$0xff]
    %v1710 = vld [vmem:[%s2 + $0x30] sm:$0xff]
    %v1711 = vld [vmem:[%s2 + $0x38] sm:$0xff]
    %s1712 = scalar_lea.vmem %s6, 1
    %v1713 = vld [vmem:[%s1712] sm:$0x1]
    %1714 = vset.pattern.permute.xlu0 0
    %1715 = vperm.xlu0 %1714, %v1688
    %v1716 = vpop.permute.xlu0 %1715
    %1717 = vset.pattern.permute.xlu0 0
    %1718 = vperm.xlu0 %1717, %v1689
    %v1719 = vpop.permute.xlu0 %1718
    %1720 = vset.pattern.permute.xlu0 0
    %1721 = vperm.xlu0 %1720, %v1690
    %v1722 = vpop.permute.xlu0 %1721
    %1723 = vset.pattern.permute.xlu0 0
    %1724 = vperm.xlu0 %1723, %v1691
    %v1725 = vpop.permute.xlu0 %1724
    %1726 = vset.pattern.permute.xlu0 0
    %1727 = vperm.xlu0 %1726, %v1692
    %v1728 = vpop.permute.xlu0 %1727
    %1729 = vset.pattern.permute.xlu0 0
    %1730 = vperm.xlu0 %1729, %v1693
    %v1731 = vpop.permute.xlu0 %1730
    %1732 = vset.pattern.permute.xlu0 0
    %1733 = vperm.xlu0 %1732, %v1694
    %v1734 = vpop.permute.xlu0 %1733
    %1735 = vset.pattern.permute.xlu0 0
    %1736 = vperm.xlu0 %1735, %v1695
    %v1737 = vpop.permute.xlu0 %1736
    %vm1738 = vcmp.eq.s32.totalorder %v321, %v1716
    %vm1739 = vcmp.eq.s32.totalorder %v321, %v1719
    %vm1740 = vcmp.eq.s32.totalorder %v321, %v1722
    %vm1741 = vcmp.eq.s32.totalorder %v321, %v1725
    %vm1742 = vcmp.eq.s32.totalorder %v321, %v1728
    %vm1743 = vcmp.eq.s32.totalorder %v321, %v1731
    %vm1744 = vcmp.eq.s32.totalorder %v321, %v1734
    %vm1745 = vcmp.eq.s32.totalorder %v321, %v1737
    %v1746 = vsel %vm1738, 1.0, 0.0
    %v1747 = vsel %vm1739, 1.0, 0.0
    %v1748 = vsel %vm1740, 1.0, 0.0
    %v1749 = vsel %vm1741, 1.0, 0.0
    %v1750 = vsel %vm1742, 1.0, 0.0
    %v1751 = vsel %vm1743, 1.0, 0.0
    %v1752 = vsel %vm1744, 1.0, 0.0
    %v1753 = vsel %vm1745, 1.0, 0.0
    %v1754 = vpack.c.bf16 %v1747, %v1746
    %v1755 = vpack.c.bf16 %v1749, %v1748
    %v1756 = vpack.c.bf16 %v1751, %v1750
    %v1757 = vpack.c.bf16 %v1753, %v1752
    %v1758 = vld [vmem:[#allocation3] sm:$0xf]
    %v1759 = vld [vmem:[#allocation3 + $0x4] sm:$0xf]
    %v1760 = vld [vmem:[#allocation3 + $0x8] sm:$0xf]
    %v1761 = vld [vmem:[#allocation3 + $0xc] sm:$0xf]
    %v1762 = vld [vmem:[#allocation3 + $0x10] sm:$0xf]
    %v1763 = vld [vmem:[#allocation3 + $0x14] sm:$0xf]
    %v1764 = vld [vmem:[#allocation3 + $0x18] sm:$0xf]
    %v1765 = vld [vmem:[#allocation3 + $0x1c] sm:$0xf]
    %v1774 = vunpack.c.l.b16 %v1758
    %v1775 = vunpack.c.l.b16 %v1759
    %v1776 = vunpack.c.l.b16 %v1760
    %v1777 = vunpack.c.l.b16 %v1761
    %v1778 = vunpack.c.l.b16 %v1762
    %v1779 = vunpack.c.l.b16 %v1763
    %v1780 = vunpack.c.l.b16 %v1764
    %v1781 = vunpack.c.l.b16 %v1765
    %v1782 = vpack.c.b16 %v1775, %v1774
    %v1783 = vpack.c.b16 %v1777, %v1776
    %v1784 = vpack.c.b16 %v1779, %v1778
    %v1785 = vpack.c.b16 %v1781, %v1780
    %v1791 = vsel %vm398, %v1754, 0
    %v1794 = vsel %vm398, %v1755, 0
    %v1797 = vsel %vm398, %v1756, 0
    %v1800 = vsel %vm398, %v1757, 0
    %1802 = vmatpush.bf16.msra.mxu0 0
    %1803 = vmatpush.bf16.msra.mxu0 0
    %1804 = vmatpush.bf16.msra.mxu0 0
    %1805 = vmatpush.bf16.msra.mxu0 0
    %1806 = vmatpush.bf16.msra.mxu0 %v1785
    %1807 = vmatpush.bf16.msra.mxu0 %v1784
    %1808 = vmatpush.bf16.msra.mxu0 %v1783
    %1809 = vmatpush.bf16.msra.mxu0 %v1782
    %1810 = vmatmul.bf16.gmra.mxu0 %v1791
    %v1811 = vpop.f32.mrf.mxu0
    %v1812 = vadd.f32 0.0, %v1811
    %v1813 = vpop.f32.mrf.mxu0
    %v1814 = vadd.f32 0.0, %v1813
    %1815 = vmatmul.bf16.gmra.mxu0 %v1794
    %v1816 = vpop.f32.mrf.mxu0
    %v1817 = vadd.f32 0.0, %v1816
    %v1818 = vpop.f32.mrf.mxu0
    %v1819 = vadd.f32 0.0, %v1818
    %1820 = vmatmul.bf16.gmra.mxu0 %v1797
    %v1821 = vpop.f32.mrf.mxu0
    %v1822 = vadd.f32 0.0, %v1821
    %v1823 = vpop.f32.mrf.mxu0
    %v1824 = vadd.f32 0.0, %v1823
    %1825 = vmatmul.bf16.gmra.mxu0 %v1800
    %v1826 = vpop.f32.mrf.mxu0
    %v1827 = vadd.f32 0.0, %v1826
    %v1828 = vpop.f32.mrf.mxu0
    %v1829 = vadd.f32 0.0, %v1828
    %1830 = vdwg.mxu0
    %v1831 = vadd.f32 %v1680, %v1812
    %v1832 = vadd.f32 %v1681, %v1814
    %v1833 = vadd.f32 %v1682, %v1817
    %v1834 = vadd.f32 %v1683, %v1819
    %v1835 = vadd.f32 %v1684, %v1822
    %v1836 = vadd.f32 %v1685, %v1824
    %v1837 = vadd.f32 %v1686, %v1827
    %v1838 = vadd.f32 %v1687, %v1829
    %1840 = vset.pattern.permute.xlu0 0
    %1841 = vperm.xlu0 %1840, %v1696
    %v1842 = vpop.permute.xlu0 %1841
    %1845 = vset.pattern.permute.xlu0 0
    %1846 = vperm.xlu0 %1845, %v1697
    %v1847 = vpop.permute.xlu0 %1846
    %1850 = vset.pattern.permute.xlu0 0
    %1851 = vperm.xlu0 %1850, %v1698
    %v1852 = vpop.permute.xlu0 %1851
    %1855 = vset.pattern.permute.xlu0 0
    %1856 = vperm.xlu0 %1855, %v1699
    %v1857 = vpop.permute.xlu0 %1856
    %1860 = vset.pattern.permute.xlu0 0
    %1861 = vperm.xlu0 %1860, %v1700
    %v1862 = vpop.permute.xlu0 %1861
    %1865 = vset.pattern.permute.xlu0 0
    %1866 = vperm.xlu0 %1865, %v1701
    %v1867 = vpop.permute.xlu0 %1866
    %1870 = vset.pattern.permute.xlu0 0
    %1871 = vperm.xlu0 %1870, %v1702
    %v1872 = vpop.permute.xlu0 %1871
    %1875 = vset.pattern.permute.xlu0 0
    %1876 = vperm.xlu0 %1875, %v1703
    %v1877 = vpop.permute.xlu0 %1876
    %v1880 = vperm.slane %v1713, 0
    %v1882 = vmul.f32 %v1842, %v1880
    %v1883 = vmul.f32 %v1847, %v1880
    %v1884 = vmul.f32 %v1852, %v1880
    %v1885 = vmul.f32 %v1857, %v1880
    %v1886 = vmul.f32 %v1862, %v1880
    %v1887 = vmul.f32 %v1867, %v1880
    %v1888 = vmul.f32 %v1872, %v1880
    %v1889 = vmul.f32 %v1877, %v1880
    %v1890 = vadd.f32 %v1831, %v1882
    %v1891 = vadd.f32 %v1832, %v1883
    %v1892 = vadd.f32 %v1833, %v1884
    %v1893 = vadd.f32 %v1834, %v1885
    %v1894 = vadd.f32 %v1835, %v1886
    %v1895 = vadd.f32 %v1836, %v1887
    %v1896 = vadd.f32 %v1837, %v1888
    %v1897 = vadd.f32 %v1838, %v1889
    %v1898 = vmax.f32 %v1890, 0.0
    %v1899 = vmax.f32 %v1891, 0.0
    %v1900 = vmax.f32 %v1892, 0.0
    %v1901 = vmax.f32 %v1893, 0.0
    %v1902 = vmax.f32 %v1894, 0.0
    %v1903 = vmax.f32 %v1895, 0.0
    %v1904 = vmax.f32 %v1896, 0.0
    %v1905 = vmax.f32 %v1897, 0.0
    %1907 = vset.pattern.permute.xlu0 0
    %1908 = vperm.xlu0 %1907, %v1704
    %v1909 = vpop.permute.xlu0 %1908
    %1912 = vset.pattern.permute.xlu0 0
    %1913 = vperm.xlu0 %1912, %v1705
    %v1914 = vpop.permute.xlu0 %1913
    %1917 = vset.pattern.permute.xlu0 0
    %1918 = vperm.xlu0 %1917, %v1706
    %v1919 = vpop.permute.xlu0 %1918
    %1922 = vset.pattern.permute.xlu0 0
    %1923 = vperm.xlu0 %1922, %v1707
    %v1924 = vpop.permute.xlu0 %1923
    %1927 = vset.pattern.permute.xlu0 0
    %1928 = vperm.xlu0 %1927, %v1708
    %v1929 = vpop.permute.xlu0 %1928
    %1932 = vset.pattern.permute.xlu0 0
    %1933 = vperm.xlu0 %1932, %v1709
    %v1934 = vpop.permute.xlu0 %1933
    %1937 = vset.pattern.permute.xlu0 0
    %1938 = vperm.xlu0 %1937, %v1710
    %v1939 = vpop.permute.xlu0 %1938
    %1942 = vset.pattern.permute.xlu0 0
    %1943 = vperm.xlu0 %1942, %v1711
    %v1944 = vpop.permute.xlu0 %1943
    %v1946 = vmul.f32 %v1898, %v1909
    %v1947 = vmul.f32 %v1899, %v1914
    %v1948 = vmul.f32 %v1900, %v1919
    %v1949 = vmul.f32 %v1901, %v1924
    %v1950 = vmul.f32 %v1902, %v1929
    %v1951 = vmul.f32 %v1903, %v1934
    %v1952 = vmul.f32 %v1904, %v1939
    %v1953 = vmul.f32 %v1905, %v1944
    %v1954 = vadd.f32 %v1946, 0.0
    %v1955 = vadd.f32 %v1947, 0.0
    %v1956 = vadd.f32 %v1948, 0.0
    %v1957 = vadd.f32 %v1949, 0.0
    %v1958 = vadd.f32 %v1950, 0.0
    %v1959 = vadd.f32 %v1951, 0.0
    %v1960 = vadd.f32 %v1952, 0.0
    %v1961 = vadd.f32 %v1953, 0.0
    %1962 = vset.pattern.permute.xlu0 1
    %1963 = vperm.xlu0 %1962, %v1688
    %v1964 = vpop.permute.xlu0 %1963
    %1965 = vset.pattern.permute.xlu0 1
    %1966 = vperm.xlu0 %1965, %v1689
    %v1967 = vpop.permute.xlu0 %1966
    %1968 = vset.pattern.permute.xlu0 1
    %1969 = vperm.xlu0 %1968, %v1690
    %v1970 = vpop.permute.xlu0 %1969
    %1971 = vset.pattern.permute.xlu0 1
    %1972 = vperm.xlu0 %1971, %v1691
    %v1973 = vpop.permute.xlu0 %1972
    %1974 = vset.pattern.permute.xlu0 1
    %1975 = vperm.xlu0 %1974, %v1692
    %v1976 = vpop.permute.xlu0 %1975
    %1977 = vset.pattern.permute.xlu0 1
    %1978 = vperm.xlu0 %1977, %v1693
    %v1979 = vpop.permute.xlu0 %1978
    %1980 = vset.pattern.permute.xlu0 1
    %1981 = vperm.xlu0 %1980, %v1694
    %v1982 = vpop.permute.xlu0 %1981
    %1983 = vset.pattern.permute.xlu0 1
    %1984 = vperm.xlu0 %1983, %v1695
    %v1985 = vpop.permute.xlu0 %1984
    %vm1986 = vcmp.eq.s32.totalorder %v321, %v1964
    %vm1987 = vcmp.eq.s32.totalorder %v321, %v1967
    %vm1988 = vcmp.eq.s32.totalorder %v321, %v1970
    %vm1989 = vcmp.eq.s32.totalorder %v321, %v1973
    %vm1990 = vcmp.eq.s32.totalorder %v321, %v1976
    %vm1991 = vcmp.eq.s32.totalorder %v321, %v1979
    %vm1992 = vcmp.eq.s32.totalorder %v321, %v1982
    %vm1993 = vcmp.eq.s32.totalorder %v321, %v1985
    %v1994 = vsel %vm1986, 1.0, 0.0
    %v1995 = vsel %vm1987, 1.0, 0.0
    %v1996 = vsel %vm1988, 1.0, 0.0
    %v1997 = vsel %vm1989, 1.0, 0.0
    %v1998 = vsel %vm1990, 1.0, 0.0
    %v1999 = vsel %vm1991, 1.0, 0.0
    %v2000 = vsel %vm1992, 1.0, 0.0
    %v2001 = vsel %vm1993, 1.0, 0.0
    %v2002 = vpack.c.bf16 %v1995, %v1994
    %v2003 = vpack.c.bf16 %v1997, %v1996
    %v2004 = vpack.c.bf16 %v1999, %v1998
    %v2005 = vpack.c.bf16 %v2001, %v2000
    %v2007 = vsel %vm398, %v2002, 0
    %v2010 = vsel %vm398, %v2003, 0
    %v2013 = vsel %vm398, %v2004, 0
    %v2016 = vsel %vm398, %v2005, 0
    %2018 = vmatpush.bf16.msra.mxu0 0
    %2019 = vmatpush.bf16.msra.mxu0 0
    %2020 = vmatpush.bf16.msra.mxu0 0
    %2021 = vmatpush.bf16.msra.mxu0 0
    %2022 = vmatpush.bf16.msra.mxu0 %v1785
    %2023 = vmatpush.bf16.msra.mxu0 %v1784
    %2024 = vmatpush.bf16.msra.mxu0 %v1783
    %2025 = vmatpush.bf16.msra.mxu0 %v1782
    %2026 = vmatmul.bf16.gmra.mxu0 %v2007
    %v2027 = vpop.f32.mrf.mxu0
    %v2028 = vadd.f32 0.0, %v2027
    %v2029 = vpop.f32.mrf.mxu0
    %v2030 = vadd.f32 0.0, %v2029
    %2031 = vmatmul.bf16.gmra.mxu0 %v2010
    %v2032 = vpop.f32.mrf.mxu0
    %v2033 = vadd.f32 0.0, %v2032
    %v2034 = vpop.f32.mrf.mxu0
    %v2035 = vadd.f32 0.0, %v2034
    %2036 = vmatmul.bf16.gmra.mxu0 %v2013
    %v2037 = vpop.f32.mrf.mxu0
    %v2038 = vadd.f32 0.0, %v2037
    %v2039 = vpop.f32.mrf.mxu0
    %v2040 = vadd.f32 0.0, %v2039
    %2041 = vmatmul.bf16.gmra.mxu0 %v2016
    %v2042 = vpop.f32.mrf.mxu0
    %v2043 = vadd.f32 0.0, %v2042
    %v2044 = vpop.f32.mrf.mxu0
    %v2045 = vadd.f32 0.0, %v2044
    %2046 = vdwg.mxu0
    %v2047 = vadd.f32 %v1680, %v2028
    %v2048 = vadd.f32 %v1681, %v2030
    %v2049 = vadd.f32 %v1682, %v2033
    %v2050 = vadd.f32 %v1683, %v2035
    %v2051 = vadd.f32 %v1684, %v2038
    %v2052 = vadd.f32 %v1685, %v2040
    %v2053 = vadd.f32 %v1686, %v2043
    %v2054 = vadd.f32 %v1687, %v2045
    %2055 = vset.pattern.permute.xlu0 1
    %2056 = vperm.xlu0 %2055, %v1696
    %v2057 = vpop.permute.xlu0 %2056
    %2059 = vset.pattern.permute.xlu0 1
    %2060 = vperm.xlu0 %2059, %v1697
    %v2061 = vpop.permute.xlu0 %2060
    %2063 = vset.pattern.permute.xlu0 1
    %2064 = vperm.xlu0 %2063, %v1698
    %v2065 = vpop.permute.xlu0 %2064
    %2067 = vset.pattern.permute.xlu0 1
    %2068 = vperm.xlu0 %2067, %v1699
    %v2069 = vpop.permute.xlu0 %2068
    %2071 = vset.pattern.permute.xlu0 1
    %2072 = vperm.xlu0 %2071, %v1700
    %v2073 = vpop.permute.xlu0 %2072
    %2075 = vset.pattern.permute.xlu0 1
    %2076 = vperm.xlu0 %2075, %v1701
    %v2077 = vpop.permute.xlu0 %2076
    %2079 = vset.pattern.permute.xlu0 1
    %2080 = vperm.xlu0 %2079, %v1702
    %v2081 = vpop.permute.xlu0 %2080
    %2083 = vset.pattern.permute.xlu0 1
    %2084 = vperm.xlu0 %2083, %v1703
    %v2085 = vpop.permute.xlu0 %2084
    %v2087 = vmul.f32 %v2057, %v1880
    %v2088 = vmul.f32 %v2061, %v1880
    %v2089 = vmul.f32 %v2065, %v1880
    %v2090 = vmul.f32 %v2069, %v1880
    %v2091 = vmul.f32 %v2073, %v1880
    %v2092 = vmul.f32 %v2077, %v1880
    %v2093 = vmul.f32 %v2081, %v1880
    %v2094 = vmul.f32 %v2085, %v1880
    %v2095 = vadd.f32 %v2047, %v2087
    %v2096 = vadd.f32 %v2048, %v2088
    %v2097 = vadd.f32 %v2049, %v2089
    %v2098 = vadd.f32 %v2050, %v2090
    %v2099 = vadd.f32 %v2051, %v2091
    %v2100 = vadd.f32 %v2052, %v2092
    %v2101 = vadd.f32 %v2053, %v2093
    %v2102 = vadd.f32 %v2054, %v2094
    %v2103 = vmax.f32 %v2095, 0.0
    %v2104 = vmax.f32 %v2096, 0.0
    %v2105 = vmax.f32 %v2097, 0.0
    %v2106 = vmax.f32 %v2098, 0.0
    %v2107 = vmax.f32 %v2099, 0.0
    %v2108 = vmax.f32 %v2100, 0.0
    %v2109 = vmax.f32 %v2101, 0.0
    %v2110 = vmax.f32 %v2102, 0.0
    %2111 = vset.pattern.permute.xlu0 1
    %2112 = vperm.xlu0 %2111, %v1704
    %v2113 = vpop.permute.xlu0 %2112
    %2115 = vset.pattern.permute.xlu0 1
    %2116 = vperm.xlu0 %2115, %v1705
    %v2117 = vpop.permute.xlu0 %2116
    %2119 = vset.pattern.permute.xlu0 1
    %2120 = vperm.xlu0 %2119, %v1706
    %v2121 = vpop.permute.xlu0 %2120
    %2123 = vset.pattern.permute.xlu0 1
    %2124 = vperm.xlu0 %2123, %v1707
    %v2125 = vpop.permute.xlu0 %2124
    %2127 = vset.pattern.permute.xlu0 1
    %2128 = vperm.xlu0 %2127, %v1708
    %v2129 = vpop.permute.xlu0 %2128
    %2131 = vset.pattern.permute.xlu0 1
    %2132 = vperm.xlu0 %2131, %v1709
    %v2133 = vpop.permute.xlu0 %2132
    %2135 = vset.pattern.permute.xlu0 1
    %2136 = vperm.xlu0 %2135, %v1710
    %v2137 = vpop.permute.xlu0 %2136
    %2139 = vset.pattern.permute.xlu0 1
    %2140 = vperm.xlu0 %2139, %v1711
    %v2141 = vpop.permute.xlu0 %2140
    %v2143 = vmul.f32 %v2103, %v2113
    %v2144 = vmul.f32 %v2104, %v2117
    %v2145 = vmul.f32 %v2105, %v2121
    %v2146 = vmul.f32 %v2106, %v2125
    %v2147 = vmul.f32 %v2107, %v2129
    %v2148 = vmul.f32 %v2108, %v2133
    %v2149 = vmul.f32 %v2109, %v2137
    %v2150 = vmul.f32 %v2110, %v2141
    %v2151 = vadd.f32 %v1954, %v2143
    %v2152 = vadd.f32 %v1955, %v2144
    %v2153 = vadd.f32 %v1956, %v2145
    %v2154 = vadd.f32 %v1957, %v2146
    %v2155 = vadd.f32 %v1958, %v2147
    %v2156 = vadd.f32 %v1959, %v2148
    %v2157 = vadd.f32 %v1960, %v2149
    %v2158 = vadd.f32 %v1961, %v2150
    %2159 = vset.pattern.permute.xlu0 2
    %2160 = vperm.xlu0 %2159, %v1688
    %v2161 = vpop.permute.xlu0 %2160
    %2162 = vset.pattern.permute.xlu0 2
    %2163 = vperm.xlu0 %2162, %v1689
    %v2164 = vpop.permute.xlu0 %2163
    %2165 = vset.pattern.permute.xlu0 2
    %2166 = vperm.xlu0 %2165, %v1690
    %v2167 = vpop.permute.xlu0 %2166
    %2168 = vset.pattern.permute.xlu0 2
    %2169 = vperm.xlu0 %2168, %v1691
    %v2170 = vpop.permute.xlu0 %2169
    %2171 = vset.pattern.permute.xlu0 2
    %2172 = vperm.xlu0 %2171, %v1692
    %v2173 = vpop.permute.xlu0 %2172
    %2174 = vset.pattern.permute.xlu0 2
    %2175 = vperm.xlu0 %2174, %v1693
    %v2176 = vpop.permute.xlu0 %2175
    %2177 = vset.pattern.permute.xlu0 2
    %2178 = vperm.xlu0 %2177, %v1694
    %v2179 = vpop.permute.xlu0 %2178
    %2180 = vset.pattern.permute.xlu0 2
    %2181 = vperm.xlu0 %2180, %v1695
    %v2182 = vpop.permute.xlu0 %2181
    %vm2183 = vcmp.eq.s32.totalorder %v321, %v2161
    %vm2184 = vcmp.eq.s32.totalorder %v321, %v2164
    %vm2185 = vcmp.eq.s32.totalorder %v321, %v2167
    %vm2186 = vcmp.eq.s32.totalorder %v321, %v2170
    %vm2187 = vcmp.eq.s32.totalorder %v321, %v2173
    %vm2188 = vcmp.eq.s32.totalorder %v321, %v2176
    %vm2189 = vcmp.eq.s32.totalorder %v321, %v2179
    %vm2190 = vcmp.eq.s32.totalorder %v321, %v2182
    %v2191 = vsel %vm2183, 1.0, 0.0
    %v2192 = vsel %vm2184, 1.0, 0.0
    %v2193 = vsel %vm2185, 1.0, 0.0
    %v2194 = vsel %vm2186, 1.0, 0.0
    %v2195 = vsel %vm2187, 1.0, 0.0
    %v2196 = vsel %vm2188, 1.0, 0.0
    %v2197 = vsel %vm2189, 1.0, 0.0
    %v2198 = vsel %vm2190, 1.0, 0.0
    %v2199 = vpack.c.bf16 %v2192, %v2191
    %v2200 = vpack.c.bf16 %v2194, %v2193
    %v2201 = vpack.c.bf16 %v2196, %v2195
    %v2202 = vpack.c.bf16 %v2198, %v2197
    %v2204 = vsel %vm398, %v2199, 0
    %v2207 = vsel %vm398, %v2200, 0
    %v2210 = vsel %vm398, %v2201, 0
    %v2213 = vsel %vm398, %v2202, 0
    %2215 = vmatpush.bf16.msra.mxu0 0
    %2216 = vmatpush.bf16.msra.mxu0 0
    %2217 = vmatpush.bf16.msra.mxu0 0
    %2218 = vmatpush.bf16.msra.mxu0 0
    %2219 = vmatpush.bf16.msra.mxu0 %v1785
    %2220 = vmatpush.bf16.msra.mxu0 %v1784
    %2221 = vmatpush.bf16.msra.mxu0 %v1783
    %2222 = vmatpush.bf16.msra.mxu0 %v1782
    %2223 = vmatmul.bf16.gmra.mxu0 %v2204
    %v2224 = vpop.f32.mrf.mxu0
    %v2225 = vadd.f32 0.0, %v2224
    %v2226 = vpop.f32.mrf.mxu0
    %v2227 = vadd.f32 0.0, %v2226
    %2228 = vmatmul.bf16.gmra.mxu0 %v2207
    %v2229 = vpop.f32.mrf.mxu0
    %v2230 = vadd.f32 0.0, %v2229
    %v2231 = vpop.f32.mrf.mxu0
    %v2232 = vadd.f32 0.0, %v2231
    %2233 = vmatmul.bf16.gmra.mxu0 %v2210
    %v2234 = vpop.f32.mrf.mxu0
    %v2235 = vadd.f32 0.0, %v2234
    %v2236 = vpop.f32.mrf.mxu0
    %v2237 = vadd.f32 0.0, %v2236
    %2238 = vmatmul.bf16.gmra.mxu0 %v2213
    %v2239 = vpop.f32.mrf.mxu0
    %v2240 = vadd.f32 0.0, %v2239
    %v2241 = vpop.f32.mrf.mxu0
    %v2242 = vadd.f32 0.0, %v2241
    %2243 = vdwg.mxu0
    %v2244 = vadd.f32 %v1680, %v2225
    %v2245 = vadd.f32 %v1681, %v2227
    %v2246 = vadd.f32 %v1682, %v2230
    %v2247 = vadd.f32 %v1683, %v2232
    %v2248 = vadd.f32 %v1684, %v2235
    %v2249 = vadd.f32 %v1685, %v2237
    %v2250 = vadd.f32 %v1686, %v2240
    %v2251 = vadd.f32 %v1687, %v2242
    %2252 = vset.pattern.permute.xlu0 2
    %2253 = vperm.xlu0 %2252, %v1696
    %v2254 = vpop.permute.xlu0 %2253
    %2256 = vset.pattern.permute.xlu0 2
    %2257 = vperm.xlu0 %2256, %v1697
    %v2258 = vpop.permute.xlu0 %2257
    %2260 = vset.pattern.permute.xlu0 2
    %2261 = vperm.xlu0 %2260, %v1698
    %v2262 = vpop.permute.xlu0 %2261
    %2264 = vset.pattern.permute.xlu0 2
    %2265 = vperm.xlu0 %2264, %v1699
    %v2266 = vpop.permute.xlu0 %2265
    %2268 = vset.pattern.permute.xlu0 2
    %2269 = vperm.xlu0 %2268, %v1700
    %v2270 = vpop.permute.xlu0 %2269
    %2272 = vset.pattern.permute.xlu0 2
    %2273 = vperm.xlu0 %2272, %v1701
    %v2274 = vpop.permute.xlu0 %2273
    %2276 = vset.pattern.permute.xlu0 2
    %2277 = vperm.xlu0 %2276, %v1702
    %v2278 = vpop.permute.xlu0 %2277
    %2280 = vset.pattern.permute.xlu0 2
    %2281 = vperm.xlu0 %2280, %v1703
    %v2282 = vpop.permute.xlu0 %2281
    %v2284 = vmul.f32 %v2254, %v1880
    %v2285 = vmul.f32 %v2258, %v1880
    %v2286 = vmul.f32 %v2262, %v1880
    %v2287 = vmul.f32 %v2266, %v1880
    %v2288 = vmul.f32 %v2270, %v1880
    %v2289 = vmul.f32 %v2274, %v1880
    %v2290 = vmul.f32 %v2278, %v1880
    %v2291 = vmul.f32 %v2282, %v1880
    %v2292 = vadd.f32 %v2244, %v2284
    %v2293 = vadd.f32 %v2245, %v2285
    %v2294 = vadd.f32 %v2246, %v2286
    %v2295 = vadd.f32 %v2247, %v2287
    %v2296 = vadd.f32 %v2248, %v2288
    %v2297 = vadd.f32 %v2249, %v2289
    %v2298 = vadd.f32 %v2250, %v2290
    %v2299 = vadd.f32 %v2251, %v2291
    %v2300 = vmax.f32 %v2292, 0.0
    %v2301 = vmax.f32 %v2293, 0.0
    %v2302 = vmax.f32 %v2294, 0.0
    %v2303 = vmax.f32 %v2295, 0.0
    %v2304 = vmax.f32 %v2296, 0.0
    %v2305 = vmax.f32 %v2297, 0.0
    %v2306 = vmax.f32 %v2298, 0.0
    %v2307 = vmax.f32 %v2299, 0.0
    %2308 = vset.pattern.permute.xlu0 2
    %2309 = vperm.xlu0 %2308, %v1704
    %v2310 = vpop.permute.xlu0 %2309
    %2312 = vset.pattern.permute.xlu0 2
    %2313 = vperm.xlu0 %2312, %v1705
    %v2314 = vpop.permute.xlu0 %2313
    %2316 = vset.pattern.permute.xlu0 2
    %2317 = vperm.xlu0 %2316, %v1706
    %v2318 = vpop.permute.xlu0 %2317
    %2320 = vset.pattern.permute.xlu0 2
    %2321 = vperm.xlu0 %2320, %v1707
    %v2322 = vpop.permute.xlu0 %2321
    %2324 = vset.pattern.permute.xlu0 2
    %2325 = vperm.xlu0 %2324, %v1708
    %v2326 = vpop.permute.xlu0 %2325
    %2328 = vset.pattern.permute.xlu0 2
    %2329 = vperm.xlu0 %2328, %v1709
    %v2330 = vpop.permute.xlu0 %2329
    %2332 = vset.pattern.permute.xlu0 2
    %2333 = vperm.xlu0 %2332, %v1710
    %v2334 = vpop.permute.xlu0 %2333
    %2336 = vset.pattern.permute.xlu0 2
    %2337 = vperm.xlu0 %2336, %v1711
    %v2338 = vpop.permute.xlu0 %2337
    %v2340 = vmul.f32 %v2300, %v2310
    %v2341 = vmul.f32 %v2301, %v2314
    %v2342 = vmul.f32 %v2302, %v2318
    %v2343 = vmul.f32 %v2303, %v2322
    %v2344 = vmul.f32 %v2304, %v2326
    %v2345 = vmul.f32 %v2305, %v2330
    %v2346 = vmul.f32 %v2306, %v2334
    %v2347 = vmul.f32 %v2307, %v2338
    %v2348 = vadd.f32 %v2151, %v2340
    %v2349 = vadd.f32 %v2152, %v2341
    %v2350 = vadd.f32 %v2153, %v2342
    %v2351 = vadd.f32 %v2154, %v2343
    %v2352 = vadd.f32 %v2155, %v2344
    %v2353 = vadd.f32 %v2156, %v2345
    %v2354 = vadd.f32 %v2157, %v2346
    %v2355 = vadd.f32 %v2158, %v2347
    %2356 = vset.pattern.permute.xlu0 3
    %2357 = vperm.xlu0 %2356, %v1688
    %v2358 = vpop.permute.xlu0 %2357
    %2359 = vset.pattern.permute.xlu0 3
    %2360 = vperm.xlu0 %2359, %v1689
    %v2361 = vpop.permute.xlu0 %2360
    %2362 = vset.pattern.permute.xlu0 3
    %2363 = vperm.xlu0 %2362, %v1690
    %v2364 = vpop.permute.xlu0 %2363
    %2365 = vset.pattern.permute.xlu0 3
    %2366 = vperm.xlu0 %2365, %v1691
    %v2367 = vpop.permute.xlu0 %2366
    %2368 = vset.pattern.permute.xlu0 3
    %2369 = vperm.xlu0 %2368, %v1692
    %v2370 = vpop.permute.xlu0 %2369
    %2371 = vset.pattern.permute.xlu0 3
    %2372 = vperm.xlu0 %2371, %v1693
    %v2373 = vpop.permute.xlu0 %2372
    %2374 = vset.pattern.permute.xlu0 3
    %2375 = vperm.xlu0 %2374, %v1694
    %v2376 = vpop.permute.xlu0 %2375
    %2377 = vset.pattern.permute.xlu0 3
    %2378 = vperm.xlu0 %2377, %v1695
    %v2379 = vpop.permute.xlu0 %2378
    %vm2380 = vcmp.eq.s32.totalorder %v321, %v2358
    %vm2381 = vcmp.eq.s32.totalorder %v321, %v2361
    %vm2382 = vcmp.eq.s32.totalorder %v321, %v2364
    %vm2383 = vcmp.eq.s32.totalorder %v321, %v2367
    %vm2384 = vcmp.eq.s32.totalorder %v321, %v2370
    %vm2385 = vcmp.eq.s32.totalorder %v321, %v2373
    %vm2386 = vcmp.eq.s32.totalorder %v321, %v2376
    %vm2387 = vcmp.eq.s32.totalorder %v321, %v2379
    %v2388 = vsel %vm2380, 1.0, 0.0
    %v2389 = vsel %vm2381, 1.0, 0.0
    %v2390 = vsel %vm2382, 1.0, 0.0
    %v2391 = vsel %vm2383, 1.0, 0.0
    %v2392 = vsel %vm2384, 1.0, 0.0
    %v2393 = vsel %vm2385, 1.0, 0.0
    %v2394 = vsel %vm2386, 1.0, 0.0
    %v2395 = vsel %vm2387, 1.0, 0.0
    %v2396 = vpack.c.bf16 %v2389, %v2388
    %v2397 = vpack.c.bf16 %v2391, %v2390
    %v2398 = vpack.c.bf16 %v2393, %v2392
    %v2399 = vpack.c.bf16 %v2395, %v2394
    %v2401 = vsel %vm398, %v2396, 0
    %v2404 = vsel %vm398, %v2397, 0
    %v2407 = vsel %vm398, %v2398, 0
    %v2410 = vsel %vm398, %v2399, 0
    %2412 = vmatpush.bf16.msra.mxu0 0
    %2413 = vmatpush.bf16.msra.mxu0 0
    %2414 = vmatpush.bf16.msra.mxu0 0
    %2415 = vmatpush.bf16.msra.mxu0 0
    %2416 = vmatpush.bf16.msra.mxu0 %v1785
    %2417 = vmatpush.bf16.msra.mxu0 %v1784
    %2418 = vmatpush.bf16.msra.mxu0 %v1783
    %2419 = vmatpush.bf16.msra.mxu0 %v1782
    %2420 = vmatmul.bf16.gmra.mxu0 %v2401
    %v2421 = vpop.f32.mrf.mxu0
    %v2422 = vadd.f32 0.0, %v2421
    %v2423 = vpop.f32.mrf.mxu0
    %v2424 = vadd.f32 0.0, %v2423
    %2425 = vmatmul.bf16.gmra.mxu0 %v2404
    %v2426 = vpop.f32.mrf.mxu0
    %v2427 = vadd.f32 0.0, %v2426
    %v2428 = vpop.f32.mrf.mxu0
    %v2429 = vadd.f32 0.0, %v2428
    %2430 = vmatmul.bf16.gmra.mxu0 %v2407
    %v2431 = vpop.f32.mrf.mxu0
    %v2432 = vadd.f32 0.0, %v2431
    %v2433 = vpop.f32.mrf.mxu0
    %v2434 = vadd.f32 0.0, %v2433
    %2435 = vmatmul.bf16.gmra.mxu0 %v2410
    %v2436 = vpop.f32.mrf.mxu0
    %v2437 = vadd.f32 0.0, %v2436
    %v2438 = vpop.f32.mrf.mxu0
    %v2439 = vadd.f32 0.0, %v2438
    %2440 = vdwg.mxu0
    %v2441 = vadd.f32 %v1680, %v2422
    %v2442 = vadd.f32 %v1681, %v2424
    %v2443 = vadd.f32 %v1682, %v2427
    %v2444 = vadd.f32 %v1683, %v2429
    %v2445 = vadd.f32 %v1684, %v2432
    %v2446 = vadd.f32 %v1685, %v2434
    %v2447 = vadd.f32 %v1686, %v2437
    %v2448 = vadd.f32 %v1687, %v2439
    %2449 = vset.pattern.permute.xlu0 3
    %2450 = vperm.xlu0 %2449, %v1696
    %v2451 = vpop.permute.xlu0 %2450
    %2453 = vset.pattern.permute.xlu0 3
    %2454 = vperm.xlu0 %2453, %v1697
    %v2455 = vpop.permute.xlu0 %2454
    %2457 = vset.pattern.permute.xlu0 3
    %2458 = vperm.xlu0 %2457, %v1698
    %v2459 = vpop.permute.xlu0 %2458
    %2461 = vset.pattern.permute.xlu0 3
    %2462 = vperm.xlu0 %2461, %v1699
    %v2463 = vpop.permute.xlu0 %2462
    %2465 = vset.pattern.permute.xlu0 3
    %2466 = vperm.xlu0 %2465, %v1700
    %v2467 = vpop.permute.xlu0 %2466
    %2469 = vset.pattern.permute.xlu0 3
    %2470 = vperm.xlu0 %2469, %v1701
    %v2471 = vpop.permute.xlu0 %2470
    %2473 = vset.pattern.permute.xlu0 3
    %2474 = vperm.xlu0 %2473, %v1702
    %v2475 = vpop.permute.xlu0 %2474
    %2477 = vset.pattern.permute.xlu0 3
    %2478 = vperm.xlu0 %2477, %v1703
    %v2479 = vpop.permute.xlu0 %2478
    %v2481 = vmul.f32 %v2451, %v1880
    %v2482 = vmul.f32 %v2455, %v1880
    %v2483 = vmul.f32 %v2459, %v1880
    %v2484 = vmul.f32 %v2463, %v1880
    %v2485 = vmul.f32 %v2467, %v1880
    %v2486 = vmul.f32 %v2471, %v1880
    %v2487 = vmul.f32 %v2475, %v1880
    %v2488 = vmul.f32 %v2479, %v1880
    %v2489 = vadd.f32 %v2441, %v2481
    %v2490 = vadd.f32 %v2442, %v2482
    %v2491 = vadd.f32 %v2443, %v2483
    %v2492 = vadd.f32 %v2444, %v2484
    %v2493 = vadd.f32 %v2445, %v2485
    %v2494 = vadd.f32 %v2446, %v2486
    %v2495 = vadd.f32 %v2447, %v2487
    %v2496 = vadd.f32 %v2448, %v2488
    %v2497 = vmax.f32 %v2489, 0.0
    %v2498 = vmax.f32 %v2490, 0.0
    %v2499 = vmax.f32 %v2491, 0.0
    %v2500 = vmax.f32 %v2492, 0.0
    %v2501 = vmax.f32 %v2493, 0.0
    %v2502 = vmax.f32 %v2494, 0.0
    %v2503 = vmax.f32 %v2495, 0.0
    %v2504 = vmax.f32 %v2496, 0.0
    %2505 = vset.pattern.permute.xlu0 3
    %2506 = vperm.xlu0 %2505, %v1704
    %v2507 = vpop.permute.xlu0 %2506
    %2509 = vset.pattern.permute.xlu0 3
    %2510 = vperm.xlu0 %2509, %v1705
    %v2511 = vpop.permute.xlu0 %2510
    %2513 = vset.pattern.permute.xlu0 3
    %2514 = vperm.xlu0 %2513, %v1706
    %v2515 = vpop.permute.xlu0 %2514
    %2517 = vset.pattern.permute.xlu0 3
    %2518 = vperm.xlu0 %2517, %v1707
    %v2519 = vpop.permute.xlu0 %2518
    %2521 = vset.pattern.permute.xlu0 3
    %2522 = vperm.xlu0 %2521, %v1708
    %v2523 = vpop.permute.xlu0 %2522
    %2525 = vset.pattern.permute.xlu0 3
    %2526 = vperm.xlu0 %2525, %v1709
    %v2527 = vpop.permute.xlu0 %2526
    %2529 = vset.pattern.permute.xlu0 3
    %2530 = vperm.xlu0 %2529, %v1710
    %v2531 = vpop.permute.xlu0 %2530
    %2533 = vset.pattern.permute.xlu0 3
    %2534 = vperm.xlu0 %2533, %v1711
    %v2535 = vpop.permute.xlu0 %2534
    %v2537 = vmul.f32 %v2497, %v2507
    %v2538 = vmul.f32 %v2498, %v2511
    %v2539 = vmul.f32 %v2499, %v2515
    %v2540 = vmul.f32 %v2500, %v2519
    %v2541 = vmul.f32 %v2501, %v2523
    %v2542 = vmul.f32 %v2502, %v2527
    %v2543 = vmul.f32 %v2503, %v2531
    %v2544 = vmul.f32 %v2504, %v2535
    %v2545 = vadd.f32 %v2348, %v2537
    %v2546 = vadd.f32 %v2349, %v2538
    %v2547 = vadd.f32 %v2350, %v2539
    %v2548 = vadd.f32 %v2351, %v2540
    %v2549 = vadd.f32 %v2352, %v2541
    %v2550 = vadd.f32 %v2353, %v2542
    %v2551 = vadd.f32 %v2354, %v2543
    %v2552 = vadd.f32 %v2355, %v2544
    %v2553 = vld [vmem:[#allocation2] sm:$0xf]
    %v2554 = vld [vmem:[#allocation2 + $0x4] sm:$0xf]
    %v2555 = vld [vmem:[#allocation2 + $0x8] sm:$0xf]
    %v2556 = vld [vmem:[#allocation2 + $0xc] sm:$0xf]
    %v2557 = vld [vmem:[#allocation2 + $0x10] sm:$0xf]
    %v2558 = vld [vmem:[#allocation2 + $0x14] sm:$0xf]
    %v2559 = vld [vmem:[#allocation2 + $0x18] sm:$0xf]
    %v2560 = vld [vmem:[#allocation2 + $0x1c] sm:$0xf]
    %v2561 = vpack.c.bf16 %v2545, %v2545
    %v2562 = vpack.c.bf16 %v2546, %v2546
    %v2563 = vpack.c.bf16 %v2547, %v2547
    %v2564 = vpack.c.bf16 %v2548, %v2548
    %v2565 = vpack.c.bf16 %v2549, %v2549
    %v2566 = vpack.c.bf16 %v2550, %v2550
    %v2567 = vpack.c.bf16 %v2551, %v2551
    %v2568 = vpack.c.bf16 %v2552, %v2552
    %v2577 = vunpack.c.l.b16 %v2553
    %v2578 = vunpack.c.l.b16 %v2554
    %v2579 = vunpack.c.l.b16 %v2555
    %v2580 = vunpack.c.l.b16 %v2556
    %v2581 = vunpack.c.l.b16 %v2557
    %v2582 = vunpack.c.l.b16 %v2558
    %v2583 = vunpack.c.l.b16 %v2559
    %v2584 = vunpack.c.l.b16 %v2560
    %v2585 = vpack.c.b16 %v2578, %v2577
    %v2586 = vpack.c.b16 %v2580, %v2579
    %v2587 = vpack.c.b16 %v2582, %v2581
    %v2588 = vpack.c.b16 %v2584, %v2583
    %v2601 = vunpack.c.l.b16 %v2561
    %v2602 = vunpack.c.l.b16 %v2562
    %v2603 = vunpack.c.l.b16 %v2563
    %v2604 = vunpack.c.l.b16 %v2564
    %v2605 = vunpack.c.l.b16 %v2565
    %v2606 = vunpack.c.l.b16 %v2566
    %v2607 = vunpack.c.l.b16 %v2567
    %v2608 = vunpack.c.l.b16 %v2568
    %v2609 = vpack.c.b16 %v2602, %v2601
    %v2610 = vpack.c.b16 %v2604, %v2603
    %v2611 = vpack.c.b16 %v2606, %v2605
    %v2612 = vpack.c.b16 %v2608, %v2607
    %s2617 = scalar_lea.vmem %s8, 128
    %v2618 = vld [vmem:[%s2617] sm:$0xf]
    %v2619 = vld [vmem:[%s2617 + $0x4] sm:$0xf]
    %v2620 = vld [vmem:[%s2617 + $0x8] sm:$0xf]
    %v2621 = vld [vmem:[%s2617 + $0xc] sm:$0xf]
    %v2622 = vld [vmem:[%s2617 + $0x10] sm:$0xf]
    %v2623 = vld [vmem:[%s2617 + $0x14] sm:$0xf]
    %v2624 = vld [vmem:[%s2617 + $0x18] sm:$0xf]
    %v2625 = vld [vmem:[%s2617 + $0x1c] sm:$0xf]
    %v2626 = vld [vmem:[%s2617 + $0x20] sm:$0xf]
    %v2627 = vld [vmem:[%s2617 + $0x24] sm:$0xf]
    %v2628 = vld [vmem:[%s2617 + $0x28] sm:$0xf]
    %v2629 = vld [vmem:[%s2617 + $0x2c] sm:$0xf]
    %v2630 = vld [vmem:[%s2617 + $0x30] sm:$0xf]
    %v2631 = vld [vmem:[%s2617 + $0x34] sm:$0xf]
    %v2632 = vld [vmem:[%s2617 + $0x38] sm:$0xf]
    %v2633 = vld [vmem:[%s2617 + $0x3c] sm:$0xf]
    %v2634 = vld [vmem:[%s2617 + $0x40] sm:$0xf]
    %v2635 = vld [vmem:[%s2617 + $0x44] sm:$0xf]
    %v2636 = vld [vmem:[%s2617 + $0x48] sm:$0xf]
    %v2637 = vld [vmem:[%s2617 + $0x4c] sm:$0xf]
    %v2638 = vld [vmem:[%s2617 + $0x50] sm:$0xf]
    %v2639 = vld [vmem:[%s2617 + $0x54] sm:$0xf]
    %v2640 = vld [vmem:[%s2617 + $0x58] sm:$0xf]
    %v2641 = vld [vmem:[%s2617 + $0x5c] sm:$0xf]
    %v2642 = vld [vmem:[%s2617 + $0x60] sm:$0xf]
    %v2643 = vld [vmem:[%s2617 + $0x64] sm:$0xf]
    %v2644 = vld [vmem:[%s2617 + $0x68] sm:$0xf]
    %v2645 = vld [vmem:[%s2617 + $0x6c] sm:$0xf]
    %v2646 = vld [vmem:[%s2617 + $0x70] sm:$0xf]
    %v2647 = vld [vmem:[%s2617 + $0x74] sm:$0xf]
    %v2648 = vld [vmem:[%s2617 + $0x78] sm:$0xf]
    %v2649 = vld [vmem:[%s2617 + $0x7c] sm:$0xf]
    %s2650 = scalar_lea.vmem %s9, 1
    %v2651 = vld [vmem:[%s2650] sm:$0x1]
    %v2653 = vperm.slane %v2651, 0
    %v2687 = vunpack.c.l.b16 %v2618
    %v2688 = vunpack.c.l.b16 %v2619
    %v2689 = vunpack.c.l.b16 %v2620
    %v2690 = vunpack.c.l.b16 %v2621
    %v2691 = vunpack.c.l.b16 %v2622
    %v2692 = vunpack.c.l.b16 %v2623
    %v2693 = vunpack.c.l.b16 %v2624
    %v2694 = vunpack.c.l.b16 %v2625
    %v2695 = vunpack.c.l.b16 %v2626
    %v2696 = vunpack.c.l.b16 %v2627
    %v2697 = vunpack.c.l.b16 %v2628
    %v2698 = vunpack.c.l.b16 %v2629
    %v2699 = vunpack.c.l.b16 %v2630
    %v2700 = vunpack.c.l.b16 %v2631
    %v2701 = vunpack.c.l.b16 %v2632
    %v2702 = vunpack.c.l.b16 %v2633
    %v2703 = vunpack.c.l.b16 %v2634
    %v2704 = vunpack.c.l.b16 %v2635
    %v2705 = vunpack.c.l.b16 %v2636
    %v2706 = vunpack.c.l.b16 %v2637
    %v2707 = vunpack.c.l.b16 %v2638
    %v2708 = vunpack.c.l.b16 %v2639
    %v2709 = vunpack.c.l.b16 %v2640
    %v2710 = vunpack.c.l.b16 %v2641
    %v2711 = vunpack.c.l.b16 %v2642
    %v2712 = vunpack.c.l.b16 %v2643
    %v2713 = vunpack.c.l.b16 %v2644
    %v2714 = vunpack.c.l.b16 %v2645
    %v2715 = vunpack.c.l.b16 %v2646
    %v2716 = vunpack.c.l.b16 %v2647
    %v2717 = vunpack.c.l.b16 %v2648
    %v2718 = vunpack.c.l.b16 %v2649
    %v2719 = vpack.c.b16 %v2688, %v2687
    %v2720 = vpack.c.b16 %v2690, %v2689
    %v2721 = vpack.c.b16 %v2692, %v2691
    %v2722 = vpack.c.b16 %v2694, %v2693
    %v2723 = vpack.c.b16 %v2696, %v2695
    %v2724 = vpack.c.b16 %v2698, %v2697
    %v2725 = vpack.c.b16 %v2700, %v2699
    %v2726 = vpack.c.b16 %v2702, %v2701
    %v2727 = vpack.c.b16 %v2704, %v2703
    %v2728 = vpack.c.b16 %v2706, %v2705
    %v2729 = vpack.c.b16 %v2708, %v2707
    %v2730 = vpack.c.b16 %v2710, %v2709
    %v2731 = vpack.c.b16 %v2712, %v2711
    %v2732 = vpack.c.b16 %v2714, %v2713
    %v2733 = vpack.c.b16 %v2716, %v2715
    %v2734 = vpack.c.b16 %v2718, %v2717
    %2751 = vmatpush.bf16.msra.mxu0 %v2726
    %2752 = vmatpush.bf16.msra.mxu0 %v2725
    %2753 = vmatpush.bf16.msra.mxu0 %v2724
    %2754 = vmatpush.bf16.msra.mxu0 %v2723
    %2755 = vmatpush.bf16.msra.mxu0 %v2722
    %2756 = vmatpush.bf16.msra.mxu0 %v2721
    %2757 = vmatpush.bf16.msra.mxu0 %v2720
    %2758 = vmatpush.bf16.msra.mxu0 %v2719
    %2759 = vmatmul.bf16.gmra.mxu0 %v2585
    %v2760 = vpop.f32.mrf.mxu0
    %v2761 = vadd.f32 %v2653, %v2760
    %v2762 = vpop.f32.mrf.mxu0
    %v2763 = vadd.f32 %v2653, %v2762
    %2764 = vmatmul.bf16.gmra.mxu0 %v2586
    %v2765 = vpop.f32.mrf.mxu0
    %v2766 = vadd.f32 %v2653, %v2765
    %v2767 = vpop.f32.mrf.mxu0
    %v2768 = vadd.f32 %v2653, %v2767
    %2769 = vmatmul.bf16.gmra.mxu0 %v2587
    %v2770 = vpop.f32.mrf.mxu0
    %v2771 = vadd.f32 %v2653, %v2770
    %v2772 = vpop.f32.mrf.mxu0
    %v2773 = vadd.f32 %v2653, %v2772
    %2774 = vmatmul.bf16.gmra.mxu0 %v2588
    %v2775 = vpop.f32.mrf.mxu0
    %v2776 = vadd.f32 %v2653, %v2775
    %v2777 = vpop.f32.mrf.mxu0
    %v2778 = vadd.f32 %v2653, %v2777
    %2779 = vdwg.mxu0
    %2780 = vmatpush.bf16.msra.mxu0 %v2734
    %2781 = vmatpush.bf16.msra.mxu0 %v2733
    %2782 = vmatpush.bf16.msra.mxu0 %v2732
    %2783 = vmatpush.bf16.msra.mxu0 %v2731
    %2784 = vmatpush.bf16.msra.mxu0 %v2730
    %2785 = vmatpush.bf16.msra.mxu0 %v2729
    %2786 = vmatpush.bf16.msra.mxu0 %v2728
    %2787 = vmatpush.bf16.msra.mxu0 %v2727
    %2788 = vmatmul.bf16.gmra.mxu0 %v2609
    %v2789 = vpop.f32.mrf.mxu0
    %v2790 = vadd.f32 %v2761, %v2789
    %v2791 = vpop.f32.mrf.mxu0
    %v2792 = vadd.f32 %v2763, %v2791
    %2793 = vmatmul.bf16.gmra.mxu0 %v2610
    %v2794 = vpop.f32.mrf.mxu0
    %v2795 = vadd.f32 %v2766, %v2794
    %v2796 = vpop.f32.mrf.mxu0
    %v2797 = vadd.f32 %v2768, %v2796
    %2798 = vmatmul.bf16.gmra.mxu0 %v2611
    %v2799 = vpop.f32.mrf.mxu0
    %v2800 = vadd.f32 %v2771, %v2799
    %v2801 = vpop.f32.mrf.mxu0
    %v2802 = vadd.f32 %v2773, %v2801
    %2803 = vmatmul.bf16.gmra.mxu0 %v2612
    %v2804 = vpop.f32.mrf.mxu0
    %v2805 = vadd.f32 %v2776, %v2804
    %v2806 = vpop.f32.mrf.mxu0
    %v2807 = vadd.f32 %v2778, %v2806
    %2808 = vdwg.mxu0
    %v2809 = vmax.f32 %v2790, 0.0
    %v2810 = vmax.f32 %v2792, 0.0
    %v2811 = vmax.f32 %v2795, 0.0
    %v2812 = vmax.f32 %v2797, 0.0
    %v2813 = vmax.f32 %v2800, 0.0
    %v2814 = vmax.f32 %v2802, 0.0
    %v2815 = vmax.f32 %v2805, 0.0
    %v2816 = vmax.f32 %v2807, 0.0
    %v2817 = vunpack.c.l.bf16 %v2553
    %v2818 = vunpack.c.l.bf16 %v2554
    %v2819 = vunpack.c.l.bf16 %v2555
    %v2820 = vunpack.c.l.bf16 %v2556
    %v2821 = vunpack.c.l.bf16 %v2557
    %v2822 = vunpack.c.l.bf16 %v2558
    %v2823 = vunpack.c.l.bf16 %v2559
    %v2824 = vunpack.c.l.bf16 %v2560
    %v2825 = vadd.f32 %v2817, %v2809
    %v2826 = vadd.f32 %v2818, %v2810
    %v2827 = vadd.f32 %v2819, %v2811
    %v2828 = vadd.f32 %v2820, %v2812
    %v2829 = vadd.f32 %v2821, %v2813
    %v2830 = vadd.f32 %v2822, %v2814
    %v2831 = vadd.f32 %v2823, %v2815
    %v2832 = vadd.f32 %v2824, %v2816
    %v2833 = vpack.c.bf16 %v2825, %v2825
    %v2834 = vpack.c.bf16 %v2826, %v2826
    %v2835 = vpack.c.bf16 %v2827, %v2827
    %v2836 = vpack.c.bf16 %v2828, %v2828
    %v2837 = vpack.c.bf16 %v2829, %v2829
    %v2838 = vpack.c.bf16 %v2830, %v2830
    %v2839 = vpack.c.bf16 %v2831, %v2831
    %v2840 = vpack.c.bf16 %v2832, %v2832
    %2841 = vst [vmem:[#allocation2] sm:$0xf] %v2833
    %2842 = vst [vmem:[#allocation2 + $0x4] sm:$0xf] %v2834
    %2843 = vst [vmem:[#allocation2 + $0x8] sm:$0xf] %v2835
    %2844 = vst [vmem:[#allocation2 + $0xc] sm:$0xf] %v2836
    %2845 = vst [vmem:[#allocation2 + $0x10] sm:$0xf] %v2837
    %2846 = vst [vmem:[#allocation2 + $0x14] sm:$0xf] %v2838
    %2847 = vst [vmem:[#allocation2 + $0x18] sm:$0xf] %v2839
    %2848 = vst [vmem:[#allocation2 + $0x1c] sm:$0xf] %v2840
    %v2849 = vld [vmem:[%s3] sm:$0xf]
    %v2850 = vld [vmem:[#allocation2] sm:$0xf]
    %v2851 = vld [vmem:[#allocation2 + $0x4] sm:$0xf]
    %v2852 = vld [vmem:[#allocation2 + $0x8] sm:$0xf]
    %v2853 = vld [vmem:[#allocation2 + $0xc] sm:$0xf]
    %v2854 = vld [vmem:[#allocation2 + $0x10] sm:$0xf]
    %v2855 = vld [vmem:[#allocation2 + $0x14] sm:$0xf]
    %v2856 = vld [vmem:[#allocation2 + $0x18] sm:$0xf]
    %v2857 = vld [vmem:[#allocation2 + $0x1c] sm:$0xf]
    %v2866 = vunpack.c.l.b16 %v2850
    %v2867 = vunpack.c.l.b16 %v2851
    %v2868 = vunpack.c.l.b16 %v2852
    %v2869 = vunpack.c.l.b16 %v2853
    %v2870 = vunpack.c.l.b16 %v2854
    %v2871 = vunpack.c.l.b16 %v2855
    %v2872 = vunpack.c.l.b16 %v2856
    %v2873 = vunpack.c.l.b16 %v2857
    %v2874 = vpack.c.b16 %v2867, %v2866
    %v2875 = vpack.c.b16 %v2869, %v2868
    %v2876 = vpack.c.b16 %v2871, %v2870
    %v2877 = vpack.c.b16 %v2873, %v2872
    %v2883 = vsel %vm398, %v2849, 0
    %2885 = vmatpush.bf16.msra.mxu0 0
    %2886 = vmatpush.bf16.msra.mxu0 0
    %2887 = vmatpush.bf16.msra.mxu0 0
    %2888 = vmatpush.bf16.msra.mxu0 0
    %2889 = vmatpush.bf16.msra.mxu0 %v2877
    %2890 = vmatpush.bf16.msra.mxu0 %v2876
    %2891 = vmatpush.bf16.msra.mxu0 %v2875
    %2892 = vmatpush.bf16.msra.mxu0 %v2874
    %2893 = vmatmul.bf16.gmra.mxu0 %v2883
    %v2894 = vpop.f32.mrf.mxu0
    %v2895 = vadd.f32 0.0, %v2894
    %v2896 = vpop.f32.mrf.mxu0
    %2897 = vdwg.mxu0
    %v2898 = vpack.c.bf16 %v2895, %v2895
    %v2899 = vld [vmem:[%s10] sm:$0xf]
    %v2900 = vld [vmem:[%s10 + $0x4] sm:$0xf]
    %v2901 = vld [vmem:[%s10 + $0x8] sm:$0xf]
    %v2902 = vld [vmem:[%s10 + $0xc] sm:$0xf]
    %v2903 = vld [vmem:[%s10 + $0x10] sm:$0xf]
    %v2904 = vld [vmem:[%s10 + $0x14] sm:$0xf]
    %v2905 = vld [vmem:[%s10 + $0x18] sm:$0xf]
    %v2906 = vld [vmem:[%s10 + $0x1c] sm:$0xf]
    %v2907 = vld [vmem:[%s10 + $0x20] sm:$0xf]
    %v2908 = vld [vmem:[%s10 + $0x24] sm:$0xf]
    %v2909 = vld [vmem:[%s10 + $0x28] sm:$0xf]
    %v2910 = vld [vmem:[%s10 + $0x2c] sm:$0xf]
    %v2911 = vld [vmem:[%s10 + $0x30] sm:$0xf]
    %v2912 = vld [vmem:[%s10 + $0x34] sm:$0xf]
    %v2913 = vld [vmem:[%s10 + $0x38] sm:$0xf]
    %v2914 = vld [vmem:[%s10 + $0x3c] sm:$0xf]
    %v2915 = vld [vmem:[%s11] sm:$0x1]
    %v2917 = vperm.slane %v2915, 0
    %v2935 = vunpack.c.l.b16 %v2899
    %v2936 = vunpack.c.l.b16 %v2900
    %v2937 = vunpack.c.l.b16 %v2901
    %v2938 = vunpack.c.l.b16 %v2902
    %v2939 = vunpack.c.l.b16 %v2903
    %v2940 = vunpack.c.l.b16 %v2904
    %v2941 = vunpack.c.l.b16 %v2905
    %v2942 = vunpack.c.l.b16 %v2906
    %v2943 = vunpack.c.l.b16 %v2907
    %v2944 = vunpack.c.l.b16 %v2908
    %v2945 = vunpack.c.l.b16 %v2909
    %v2946 = vunpack.c.l.b16 %v2910
    %v2947 = vunpack.c.l.b16 %v2911
    %v2948 = vunpack.c.l.b16 %v2912
    %v2949 = vunpack.c.l.b16 %v2913
    %v2950 = vunpack.c.l.b16 %v2914
    %v2951 = vpack.c.b16 %v2936, %v2935
    %v2952 = vpack.c.b16 %v2938, %v2937
    %v2953 = vpack.c.b16 %v2940, %v2939
    %v2954 = vpack.c.b16 %v2942, %v2941
    %v2955 = vpack.c.b16 %v2944, %v2943
    %v2956 = vpack.c.b16 %v2946, %v2945
    %v2957 = vpack.c.b16 %v2948, %v2947
    %v2958 = vpack.c.b16 %v2950, %v2949
    %2967 = vmatpush.bf16.msra.mxu0 %v2958
    %2968 = vmatpush.bf16.msra.mxu0 %v2957
    %2969 = vmatpush.bf16.msra.mxu0 %v2956
    %2970 = vmatpush.bf16.msra.mxu0 %v2955
    %2971 = vmatpush.bf16.msra.mxu0 %v2954
    %2972 = vmatpush.bf16.msra.mxu0 %v2953
    %2973 = vmatpush.bf16.msra.mxu0 %v2952
    %2974 = vmatpush.bf16.msra.mxu0 %v2951
    %2975 = vmatmul.bf16.gmra.mxu0 %v2898
    %v2976 = vpop.f32.mrf.mxu0
    %v2977 = vadd.f32 %v2917, %v2976
    %v2978 = vpop.f32.mrf.mxu0
    %2979 = vdwg.mxu0
    %v2980 = vmax.f32 %v2977, 0.0
    %v2981 = vpack.c.bf16 %v2980, %v2980
    %s2982 = scalar_lea.vmem %s10, 64
    %v2983 = vld [vmem:[%s2982] sm:$0xf]
    %v2984 = vld [vmem:[%s2982 + $0x4] sm:$0xf]
    %v2985 = vld [vmem:[%s2982 + $0x8] sm:$0xf]
    %v2986 = vld [vmem:[%s2982 + $0xc] sm:$0xf]
    %v2987 = vld [vmem:[%s2982 + $0x10] sm:$0xf]
    %v2988 = vld [vmem:[%s2982 + $0x14] sm:$0xf]
    %v2989 = vld [vmem:[%s2982 + $0x18] sm:$0xf]
    %v2990 = vld [vmem:[%s2982 + $0x1c] sm:$0xf]
    %v2991 = vld [vmem:[%s2982 + $0x20] sm:$0xf]
    %v2992 = vld [vmem:[%s2982 + $0x24] sm:$0xf]
    %v2993 = vld [vmem:[%s2982 + $0x28] sm:$0xf]
    %v2994 = vld [vmem:[%s2982 + $0x2c] sm:$0xf]
    %v2995 = vld [vmem:[%s2982 + $0x30] sm:$0xf]
    %v2996 = vld [vmem:[%s2982 + $0x34] sm:$0xf]
    %v2997 = vld [vmem:[%s2982 + $0x38] sm:$0xf]
    %v2998 = vld [vmem:[%s2982 + $0x3c] sm:$0xf]
    %s2999 = scalar_lea.vmem %s11, 1
    %v3000 = vld [vmem:[%s2999] sm:$0x1]
    %v3002 = vperm.slane %v3000, 0
    %v3020 = vunpack.c.l.b16 %v2983
    %v3021 = vunpack.c.l.b16 %v2984
    %v3022 = vunpack.c.l.b16 %v2985
    %v3023 = vunpack.c.l.b16 %v2986
    %v3024 = vunpack.c.l.b16 %v2987
    %v3025 = vunpack.c.l.b16 %v2988
    %v3026 = vunpack.c.l.b16 %v2989
    %v3027 = vunpack.c.l.b16 %v2990
    %v3028 = vunpack.c.l.b16 %v2991
    %v3029 = vunpack.c.l.b16 %v2992
    %v3030 = vunpack.c.l.b16 %v2993
    %v3031 = vunpack.c.l.b16 %v2994
    %v3032 = vunpack.c.l.b16 %v2995
    %v3033 = vunpack.c.l.b16 %v2996
    %v3034 = vunpack.c.l.b16 %v2997
    %v3035 = vunpack.c.l.b16 %v2998
    %v3036 = vpack.c.b16 %v3021, %v3020
    %v3037 = vpack.c.b16 %v3023, %v3022
    %v3038 = vpack.c.b16 %v3025, %v3024
    %v3039 = vpack.c.b16 %v3027, %v3026
    %v3040 = vpack.c.b16 %v3029, %v3028
    %v3041 = vpack.c.b16 %v3031, %v3030
    %v3042 = vpack.c.b16 %v3033, %v3032
    %v3043 = vpack.c.b16 %v3035, %v3034
    %3052 = vmatpush.bf16.msra.mxu0 %v3043
    %3053 = vmatpush.bf16.msra.mxu0 %v3042
    %3054 = vmatpush.bf16.msra.mxu0 %v3041
    %3055 = vmatpush.bf16.msra.mxu0 %v3040
    %3056 = vmatpush.bf16.msra.mxu0 %v3039
    %3057 = vmatpush.bf16.msra.mxu0 %v3038
    %3058 = vmatpush.bf16.msra.mxu0 %v3037
    %3059 = vmatpush.bf16.msra.mxu0 %v3036
    %3060 = vmatmul.bf16.gmra.mxu0 %v2981
    %v3061 = vpop.f32.mrf.mxu0
    %v3062 = vadd.f32 %v3002, %v3061
    %v3063 = vpop.f32.mrf.mxu0
    %3064 = vdwg.mxu0
    %v3065 = vmax.f32 %v3062, 0.0
    %v3066 = vpack.c.bf16 %v3065, %v3065
    %s3067 = scalar_lea.vmem %s10, 128
    %v3068 = vld [vmem:[%s3067] sm:$0xf]
    %v3069 = vld [vmem:[%s3067 + $0x4] sm:$0xf]
    %v3070 = vld [vmem:[%s3067 + $0x8] sm:$0xf]
    %v3071 = vld [vmem:[%s3067 + $0xc] sm:$0xf]
    %v3072 = vld [vmem:[%s3067 + $0x10] sm:$0xf]
    %v3073 = vld [vmem:[%s3067 + $0x14] sm:$0xf]
    %v3074 = vld [vmem:[%s3067 + $0x18] sm:$0xf]
    %v3075 = vld [vmem:[%s3067 + $0x1c] sm:$0xf]
    %v3076 = vld [vmem:[%s3067 + $0x20] sm:$0xf]
    %v3077 = vld [vmem:[%s3067 + $0x24] sm:$0xf]
    %v3078 = vld [vmem:[%s3067 + $0x28] sm:$0xf]
    %v3079 = vld [vmem:[%s3067 + $0x2c] sm:$0xf]
    %v3080 = vld [vmem:[%s3067 + $0x30] sm:$0xf]
    %v3081 = vld [vmem:[%s3067 + $0x34] sm:$0xf]
    %v3082 = vld [vmem:[%s3067 + $0x38] sm:$0xf]
    %v3083 = vld [vmem:[%s3067 + $0x3c] sm:$0xf]
    %s3084 = scalar_lea.vmem %s11, 2
    %v3085 = vld [vmem:[%s3084] sm:$0x1]
    %v3087 = vperm.slane %v3085, 0
    %v3105 = vunpack.c.l.b16 %v3068
    %v3106 = vunpack.c.l.b16 %v3069
    %v3107 = vunpack.c.l.b16 %v3070
    %v3108 = vunpack.c.l.b16 %v3071
    %v3109 = vunpack.c.l.b16 %v3072
    %v3110 = vunpack.c.l.b16 %v3073
    %v3111 = vunpack.c.l.b16 %v3074
    %v3112 = vunpack.c.l.b16 %v3075
    %v3113 = vunpack.c.l.b16 %v3076
    %v3114 = vunpack.c.l.b16 %v3077
    %v3115 = vunpack.c.l.b16 %v3078
    %v3116 = vunpack.c.l.b16 %v3079
    %v3117 = vunpack.c.l.b16 %v3080
    %v3118 = vunpack.c.l.b16 %v3081
    %v3119 = vunpack.c.l.b16 %v3082
    %v3120 = vunpack.c.l.b16 %v3083
    %v3121 = vpack.c.b16 %v3106, %v3105
    %v3122 = vpack.c.b16 %v3108, %v3107
    %v3123 = vpack.c.b16 %v3110, %v3109
    %v3124 = vpack.c.b16 %v3112, %v3111
    %v3125 = vpack.c.b16 %v3114, %v3113
    %v3126 = vpack.c.b16 %v3116, %v3115
    %v3127 = vpack.c.b16 %v3118, %v3117
    %v3128 = vpack.c.b16 %v3120, %v3119
    %3137 = vmatpush.bf16.msra.mxu0 %v3128
    %3138 = vmatpush.bf16.msra.mxu0 %v3127
    %3139 = vmatpush.bf16.msra.mxu0 %v3126
    %3140 = vmatpush.bf16.msra.mxu0 %v3125
    %3141 = vmatpush.bf16.msra.mxu0 %v3124
    %3142 = vmatpush.bf16.msra.mxu0 %v3123
    %3143 = vmatpush.bf16.msra.mxu0 %v3122
    %3144 = vmatpush.bf16.msra.mxu0 %v3121
    %3145 = vmatmul.bf16.gmra.mxu0 %v3066
    %v3146 = vpop.f32.mrf.mxu0
    %v3147 = vadd.f32 %v3087, %v3146
    %v3148 = vpop.f32.mrf.mxu0
    %3149 = vdwg.mxu0
    %v3150 = vmax.f32 %v3147, 0.0
    %v3151 = vpack.c.bf16 %v3150, %v3150
    %s3152 = scalar_lea.vmem %s10, 192
    %v3153 = vld [vmem:[%s3152] sm:$0xf]
    %v3154 = vld [vmem:[%s3152 + $0x4] sm:$0xf]
    %v3155 = vld [vmem:[%s3152 + $0x8] sm:$0xf]
    %v3156 = vld [vmem:[%s3152 + $0xc] sm:$0xf]
    %v3157 = vld [vmem:[%s3152 + $0x10] sm:$0xf]
    %v3158 = vld [vmem:[%s3152 + $0x14] sm:$0xf]
    %v3159 = vld [vmem:[%s3152 + $0x18] sm:$0xf]
    %v3160 = vld [vmem:[%s3152 + $0x1c] sm:$0xf]
    %v3161 = vld [vmem:[%s3152 + $0x20] sm:$0xf]
    %v3162 = vld [vmem:[%s3152 + $0x24] sm:$0xf]
    %v3163 = vld [vmem:[%s3152 + $0x28] sm:$0xf]
    %v3164 = vld [vmem:[%s3152 + $0x2c] sm:$0xf]
    %v3165 = vld [vmem:[%s3152 + $0x30] sm:$0xf]
    %v3166 = vld [vmem:[%s3152 + $0x34] sm:$0xf]
    %v3167 = vld [vmem:[%s3152 + $0x38] sm:$0xf]
    %v3168 = vld [vmem:[%s3152 + $0x3c] sm:$0xf]
    %s3169 = scalar_lea.vmem %s11, 3
    %v3170 = vld [vmem:[%s3169] sm:$0x1]
    %v3172 = vperm.slane %v3170, 0
    %v3190 = vunpack.c.l.b16 %v3153
    %v3191 = vunpack.c.l.b16 %v3154
    %v3192 = vunpack.c.l.b16 %v3155
    %v3193 = vunpack.c.l.b16 %v3156
    %v3194 = vunpack.c.l.b16 %v3157
    %v3195 = vunpack.c.l.b16 %v3158
    %v3196 = vunpack.c.l.b16 %v3159
    %v3197 = vunpack.c.l.b16 %v3160
    %v3198 = vunpack.c.l.b16 %v3161
    %v3199 = vunpack.c.l.b16 %v3162
    %v3200 = vunpack.c.l.b16 %v3163
    %v3201 = vunpack.c.l.b16 %v3164
    %v3202 = vunpack.c.l.b16 %v3165
    %v3203 = vunpack.c.l.b16 %v3166
    %v3204 = vunpack.c.l.b16 %v3167
    %v3205 = vunpack.c.l.b16 %v3168
    %v3206 = vpack.c.b16 %v3191, %v3190
    %v3207 = vpack.c.b16 %v3193, %v3192
    %v3208 = vpack.c.b16 %v3195, %v3194
    %v3209 = vpack.c.b16 %v3197, %v3196
    %v3210 = vpack.c.b16 %v3199, %v3198
    %v3211 = vpack.c.b16 %v3201, %v3200
    %v3212 = vpack.c.b16 %v3203, %v3202
    %v3213 = vpack.c.b16 %v3205, %v3204
    %3222 = vmatpush.bf16.msra.mxu0 %v3213
    %3223 = vmatpush.bf16.msra.mxu0 %v3212
    %3224 = vmatpush.bf16.msra.mxu0 %v3211
    %3225 = vmatpush.bf16.msra.mxu0 %v3210
    %3226 = vmatpush.bf16.msra.mxu0 %v3209
    %3227 = vmatpush.bf16.msra.mxu0 %v3208
    %3228 = vmatpush.bf16.msra.mxu0 %v3207
    %3229 = vmatpush.bf16.msra.mxu0 %v3206
    %3230 = vmatmul.bf16.gmra.mxu0 %v3151
    %v3231 = vpop.f32.mrf.mxu0
    %v3232 = vadd.f32 %v3172, %v3231
    %v3233 = vpop.f32.mrf.mxu0
    %3234 = vdwg.mxu0
    %v3235 = vmax.f32 %v3232, 0.0
    %v3236 = vpack.c.bf16 %v3235, %v3235
    %v3237 = vld [vmem:[%s12] sm:$0xf]
    %v3238 = vld [vmem:[%s12 + $0x4] sm:$0xf]
    %v3239 = vld [vmem:[%s12 + $0x8] sm:$0xf]
    %v3240 = vld [vmem:[%s12 + $0xc] sm:$0xf]
    %v3241 = vld [vmem:[%s12 + $0x10] sm:$0xf]
    %v3242 = vld [vmem:[%s12 + $0x14] sm:$0xf]
    %v3243 = vld [vmem:[%s12 + $0x18] sm:$0xf]
    %v3244 = vld [vmem:[%s12 + $0x1c] sm:$0xf]
    %v3245 = vld [vmem:[%s12 + $0x20] sm:$0xf]
    %v3246 = vld [vmem:[%s12 + $0x24] sm:$0xf]
    %v3247 = vld [vmem:[%s12 + $0x28] sm:$0xf]
    %v3248 = vld [vmem:[%s12 + $0x2c] sm:$0xf]
    %v3249 = vld [vmem:[%s12 + $0x30] sm:$0xf]
    %v3250 = vld [vmem:[%s12 + $0x34] sm:$0xf]
    %v3251 = vld [vmem:[%s12 + $0x38] sm:$0xf]
    %v3252 = vld [vmem:[%s12 + $0x3c] sm:$0xf]
    %v3253 = vld [vmem:[%s13] sm:$0x1]
    %v3255 = vperm.slane %v3253, 0
    %v3273 = vunpack.c.l.b16 %v3237
    %v3274 = vunpack.c.l.b16 %v3238
    %v3275 = vunpack.c.l.b16 %v3239
    %v3276 = vunpack.c.l.b16 %v3240
    %v3277 = vunpack.c.l.b16 %v3241
    %v3278 = vunpack.c.l.b16 %v3242
    %v3279 = vunpack.c.l.b16 %v3243
    %v3280 = vunpack.c.l.b16 %v3244
    %v3281 = vunpack.c.l.b16 %v3245
    %v3282 = vunpack.c.l.b16 %v3246
    %v3283 = vunpack.c.l.b16 %v3247
    %v3284 = vunpack.c.l.b16 %v3248
    %v3285 = vunpack.c.l.b16 %v3249
    %v3286 = vunpack.c.l.b16 %v3250
    %v3287 = vunpack.c.l.b16 %v3251
    %v3288 = vunpack.c.l.b16 %v3252
    %v3289 = vpack.c.b16 %v3274, %v3273
    %v3290 = vpack.c.b16 %v3276, %v3275
    %v3291 = vpack.c.b16 %v3278, %v3277
    %v3292 = vpack.c.b16 %v3280, %v3279
    %v3293 = vpack.c.b16 %v3282, %v3281
    %v3294 = vpack.c.b16 %v3284, %v3283
    %v3295 = vpack.c.b16 %v3286, %v3285
    %v3296 = vpack.c.b16 %v3288, %v3287
    %3305 = vmatpush.bf16.msra.mxu0 %v3296
    %3306 = vmatpush.bf16.msra.mxu0 %v3295
    %3307 = vmatpush.bf16.msra.mxu0 %v3294
    %3308 = vmatpush.bf16.msra.mxu0 %v3293
    %3309 = vmatpush.bf16.msra.mxu0 %v3292
    %3310 = vmatpush.bf16.msra.mxu0 %v3291
    %3311 = vmatpush.bf16.msra.mxu0 %v3290
    %3312 = vmatpush.bf16.msra.mxu0 %v3289
    %3313 = vmatmul.bf16.gmra.mxu0 %v3236
    %v3314 = vpop.f32.mrf.mxu0
    %v3315 = vadd.f32 %v3255, %v3314
    %v3316 = vpop.f32.mrf.mxu0
    %3317 = vdwg.mxu0
    %3318 = vst [vmem:[#allocation5] sm:$0xff] %v3315
    // Predicated region
    $region58: #{_forward_impl.1} parent=1 // pred_check
      _
    $region59: #{_forward_impl.1} parent=1 // pred_check_branch
      %3320 = sbr.rel (0) target = $region61
    $region60: #{_forward_impl.1} parent=1 // pred_region
      %3322 = vsyncadd [#allocation6], 0
      %s3324 = sshll.u32 [#allocation5], 4
      %s3325 = int_to_ptr.vmem [resolvable:$true] %s3324
      %s3326 = sshll.u32 %s14, 4
      %s3327 = int_to_ptr.hbm [resolvable:$true] %s3326
      %3329 = dma.vmem_to_hbm [thread:$0]  %s3325, 128, %s3327, [#allocation6]
    $region61: #{_forward_impl.1} parent=1 // pred_fallthru
      _
    // Predicated region
    $region62: #{_forward_impl.1} parent=1 // pred_check
      _
    $region63: #{_forward_impl.1} parent=1 // pred_check_branch
      %3331 = sbr.rel (0) target = $region65
    $region64: #{_forward_impl.1} parent=1 // pred_region
      %3333 = dma.done [#allocation6], 128
    $region65: #{_forward_impl.1} parent=1 // pred_fallthru
      _
    %3334 = vsyncpa [#allocation6], 1

</llo_original>
